<compile_context>
chip_gen: v7x
topology: tpu7x:2x2x1
jax: 0.10.0
libtpu: 0.0.40
codegen_flags: <defaults>
</compile_context>

<pallas_src>
import functools

import jax
import jax.numpy as jnp
from jax.experimental import pallas as pl
from jax.experimental.pallas import tpu as pltpu

LEAKY_SLOPE = 0.01  # nn.LeakyReLU() default
BN_EPS = 1e-5       # nn.BatchNorm2d default


def _conv_block_kernel(x_ref, w1_ref, b1_ref, w2t_ref, b2_ref,
                       o_ref, xpad_ref, hpad_ref, *, H, W, Cin, C1, C2):
    """Fully fused ConvBlock (eval mode) for one batch element.

    x_ref:    (1, H, W, Cin)        unpadded NHWC input block
    w1_ref:   (9*Cin, C1)   bf16    conv1 weights * BN1 scale, HWIO flattened
    b1_ref:   (1, C1)       f32     BN1 bias (folded, includes conv1 bias)
    w2t_ref:  (C2, 9*C1)    bf16    conv2 weights * BN2 scale, flat + transposed
    b2_ref:   (C2, 1)       f32     BN2 bias (folded, includes conv2 bias)
    o_ref:    (1, C2, H*W)          lane-dense output block (NCHW after reshape)
    xpad_ref: (H+2, W+2, Cin) bf16  VMEM scratch: zero-padded input
    hpad_ref: (H+2, W+2, C1)  bf16  VMEM scratch: zero-padded intermediate
    """
    # ---- zero-pad the input inside VMEM (conv padding=1) -------------------
    xpad_ref[...] = jnp.zeros_like(xpad_ref)
    xpad_ref[1:H + 1, 1:W + 1, :] = x_ref[0].astype(xpad_ref.dtype)

    # ---- conv1: im2col (9 taps -> K = 9*Cin) + one MXU matmul --------------
    taps1 = [xpad_ref[dy:dy + H, dx:dx + W, :]
             for dy in range(3) for dx in range(3)]
    p1 = jnp.concatenate(taps1, axis=-1)                            # (H, W, 9*Cin) bf16
    a1 = jax.lax.dot_general(
        p1, w1_ref[...],
        dimension_numbers=(((2,), (0,)), ((), ())),
        preferred_element_type=jnp.float32)                         # (H, W, C1) f32
    y1 = a1 + b1_ref[...]                                           # folded BN1 (scale in w1)
    h = jnp.where(y1 >= 0, y1, LEAKY_SLOPE * y1)                    # LeakyReLU
    # Dropout(p): identity in eval mode.

    # ---- keep intermediate in VMEM (zero-padded), no HBM writeback ---------
    hpad_ref[...] = jnp.zeros_like(hpad_ref)
    hpad_ref[1:H + 1, 1:W + 1, :] = h.astype(hpad_ref.dtype)

    # ---- conv2: im2col + one matmul, output-transposed (lane-dense store) --
    taps2 = [hpad_ref[dy:dy + H, dx:dx + W, :]
             for dy in range(3) for dx in range(3)]
    p2 = jnp.concatenate(taps2, axis=-1).reshape(H * W, 9 * C1)     # (H*W, 9*C1) bf16
    a2 = jax.lax.dot_general(
        w2t_ref[...], p2,
        dimension_numbers=(((1,), (1,)), ((), ())),
        preferred_element_type=jnp.float32)                         # (C2, H*W) f32
    y2 = a2 + b2_ref[...]                                           # folded BN2 (scale in w2)
    o_ref[0] = jnp.where(y2 >= 0, y2, LEAKY_SLOPE * y2).astype(o_ref.dtype)


def _fold_bn(conv_bias, gamma, beta, running_mean, running_var):
    """Return per-channel (scale, bias) so that BN(conv+b) == conv*scale + bias."""
    scale = gamma / jnp.sqrt(running_var + BN_EPS)
    bias = beta + (conv_bias - running_mean) * scale
    return scale.astype(jnp.float32), bias.astype(jnp.float32)


def conv_block_forward(x_nchw, params):
    """ConvBlock forward (eval mode). Input NCHW like PyTorch, output NCHW."""
    N, Cin, H, W = x_nchw.shape
    C1 = params["w1"].shape[0]
    C2 = params["w2"].shape[0]

    x_nhwc = jnp.transpose(x_nchw, (0, 2, 3, 1))                    # NCHW -> NHWC

    s1, b1 = _fold_bn(params["b1"], params["g1"], params["beta1"],
                      params["rm1"], params["rv1"])
    s2, b2 = _fold_bn(params["b2"], params["g2"], params["beta2"],
                      params["rm2"], params["rv2"])

    # Conv weights: OIHW -> HWIO -> flatten (ky,kx,ci) into K; fold BN scale
    # into the output-channel axis in f32, then cast to bf16 for the MXU.
    w1f = jnp.transpose(params["w1"], (2, 3, 1, 0)).reshape(9 * Cin, C1)
    w1s = (w1f * s1[None, :]).astype(jnp.bfloat16)                  # (9*Cin, C1)
    w2f = jnp.transpose(params["w2"], (2, 3, 1, 0)).reshape(9 * C1, C2)
    w2t = (jnp.transpose(w2f, (1, 0)) * s2[:, None]).astype(jnp.bfloat16)  # (C2, 9*C1)

    b1 = b1.reshape(1, C1)
    b2 = b2.reshape(C2, 1)

    kernel = functools.partial(_conv_block_kernel, H=H, W=W, Cin=Cin, C1=C1, C2=C2)
    out = pl.pallas_call(
        kernel,
        out_shape=jax.ShapeDtypeStruct((N, C2, H * W), x_nchw.dtype),
        grid_spec=pltpu.PrefetchScalarGridSpec(
            num_scalar_prefetch=0,
            grid=(N,),
            in_specs=[
                pl.BlockSpec((1, H, W, Cin), lambda n: (n, 0, 0, 0)),
                # Constant index_maps: param tiles stay resident across steps.
                pl.BlockSpec((9 * Cin, C1), lambda n: (0, 0)),
                pl.BlockSpec((1, C1), lambda n: (0, 0)),
                pl.BlockSpec((C2, 9 * C1), lambda n: (0, 0)),
                pl.BlockSpec((C2, 1), lambda n: (0, 0)),
            ],
            out_specs=pl.BlockSpec((1, C2, H * W), lambda n: (n, 0, 0)),
            scratch_shapes=[
                pltpu.VMEM((H + 2, W + 2, Cin), jnp.bfloat16),
                pltpu.VMEM((H + 2, W + 2, C1), jnp.bfloat16),
            ],
        ),
        compiler_params=pltpu.CompilerParams(
            dimension_semantics=("parallel",),      # batch axis over TCs
            vmem_limit_bytes=48 * 1024 * 1024,      # headroom, < v7x 64 MiB phys
        ),
    )(x_nhwc, w1s, b1, w2t, b2)
    # (N, C2, H*W) -> (N, C2, H, W): contiguous reshape, already NCHW.
    return out.reshape(N, C2, H, W)


def init_conv_block_params(key, in_channels, out_channels):
    """Deterministic synthetic parameters matching ConvBlock's shapes."""
    ks = jax.random.split(key, 12)
    p = {}
    # Conv2d(in, out, 3, padding=1): weight OIHW, bias (out,)
    p["w1"] = 0.2 * jax.random.normal(ks[0], (out_channels, in_channels, 3, 3), jnp.float32)
    p["b1"] = 0.1 * jax.random.normal(ks[1], (out_channels,), jnp.float32)
    # BatchNorm2d(out)
    p["g1"] = 1.0 + 0.1 * jax.random.normal(ks[2], (out_channels,), jnp.float32)
    p["beta1"] = 0.1 * jax.random.normal(ks[3], (out_channels,), jnp.float32)
    p["rm1"] = 0.05 * jax.random.normal(ks[4], (out_channels,), jnp.float32)
    p["rv1"] = 1.0 + 0.2 * jax.random.uniform(ks[5], (out_channels,), jnp.float32)
    # Conv2d(out, out, 3, padding=1)
    p["w2"] = 0.2 * jax.random.normal(ks[6], (out_channels, out_channels, 3, 3), jnp.float32)
    p["b2"] = 0.1 * jax.random.normal(ks[7], (out_channels,), jnp.float32)
    # BatchNorm2d(out)
    p["g2"] = 1.0 + 0.1 * jax.random.normal(ks[8], (out_channels,), jnp.float32)
    p["beta2"] = 0.1 * jax.random.normal(ks[9], (out_channels,), jnp.float32)
    p["rm2"] = 0.05 * jax.random.normal(ks[10], (out_channels,), jnp.float32)
    p["rv2"] = 1.0 + 0.2 * jax.random.uniform(ks[11], (out_channels,), jnp.float32)
    return p


def _reference_forward(x_nchw, params):
    """Pure-JAX f32 reference (lax.conv) for the correctness check."""
    def block(x, w, b, g, beta, rm, rv):
        y = jax.lax.conv_general_dilated(
            x, w, window_strides=(1, 1), padding="SAME",
            dimension_numbers=("NCHW", "OIHW", "NCHW"))
        y = y + b[None, :, None, None]
        y = (y - rm[None, :, None, None]) / jnp.sqrt(rv[None, :, None, None] + BN_EPS)
        y = y * g[None, :, None, None] + beta[None, :, None, None]
        return jnp.where(y >= 0, y, LEAKY_SLOPE * y)

    h = block(x_nchw, params["w1"], params["b1"], params["g1"], params["beta1"],
              params["rm1"], params["rv1"])
    return block(h, params["w2"], params["b2"], params["g2"], params["beta2"],
                 params["rm2"], params["rv2"])


if __name__ == "__main__":
    key = jax.random.PRNGKey(0)
    kx, kp = jax.random.split(key)

    N, Cin, Cout, H, W = 2, 4, 8, 16, 16
    dropout_p = 0.1  # unused in eval mode

    x = jax.random.normal(kx, (N, Cin, H, W), jnp.float32)   # NCHW, like PyTorch
    params = init_conv_block_params(kp, Cin, Cout)

    out = jax.block_until_ready(jax.jit(conv_block_forward)(x, params))
    ref = jax.block_until_ready(_reference_forward(x, params))

    assert out.shape == (N, Cout, H, W), out.shape
    # bf16 MXU operands (f32 accumulation) through two stacked 3x3 convs:
    # tolerance sized accordingly vs. the f32 reference.
    max_err = float(jnp.max(jnp.abs(out - ref)))
    assert jnp.allclose(out, ref, atol=5e-2, rtol=5e-2), max_err

    print("KERNEL_OK")
</pallas_src>

<mosaic_0001>
module attributes {stable_mosaic.version = 11 : i64} {
  func.func @_conv_block_kernel(%arg0: i32, %arg1: memref<1x16x16x4xf32, #tpu.memory_space<vmem>>, %arg2: memref<36x8xbf16, #tpu.memory_space<vmem>>, %arg3: memref<1x8xf32, #tpu.memory_space<vmem>>, %arg4: memref<8x72xbf16, #tpu.memory_space<vmem>>, %arg5: memref<8x1xf32, #tpu.memory_space<vmem>>, %arg6: memref<1x8x256xf32, #tpu.memory_space<vmem>>, %arg7: memref<18x18x4xbf16, #tpu.memory_space<vmem>>, %arg8: memref<18x18x8xbf16, #tpu.memory_space<vmem>>) attributes {dimension_semantics = [#tpu.dimension_semantics<parallel>], iteration_bounds = array<i64: 2>, scalar_prefetch = 0 : i64, scratch_operands = 2 : i64, tpu.core_type = #tpu.core_type<tc>, window_params = [{transform_indices = @transform_0, window_bounds = array<i64: 1, 16, 16, 4>}, {pipeline_mode = #tpu.pipeline_mode<synchronous>, transform_indices = @transform_1, window_bounds = array<i64: 36, 8>}, {pipeline_mode = #tpu.pipeline_mode<synchronous>, transform_indices = @transform_2, window_bounds = array<i64: 1, 8>}, {pipeline_mode = #tpu.pipeline_mode<synchronous>, transform_indices = @transform_3, window_bounds = array<i64: 8, 72>}, {pipeline_mode = #tpu.pipeline_mode<synchronous>, transform_indices = @transform_4, window_bounds = array<i64: 8, 1>}, {transform_indices = @transform_5, window_bounds = array<i64: 1, 8, 256>}]} {
    %cst = arith.constant 0.000000e+00 : bf16
    %0 = vector.broadcast %cst : bf16 to vector<18x18x4xbf16>
    %c0 = arith.constant 0 : index
    %c0_0 = arith.constant 0 : index
    %c0_1 = arith.constant 0 : index
    %1 = vector.load %arg7[%c0, %c0_0, %c0_1] : memref<18x18x4xbf16, #tpu.memory_space<vmem>>, vector<18x18x4xbf16>
    tpu.vector_store %arg7[%c0, %c0_0, %c0_1], %0 {strides = array<i32>} : memref<18x18x4xbf16, #tpu.memory_space<vmem>>, vector<18x18x4xbf16>,
    %c0_2 = arith.constant 0 : index
    %c0_3 = arith.constant 0 : index
    %c0_4 = arith.constant 0 : index
    %c0_5 = arith.constant 0 : index
    %2 = vector.load %arg1[%c0_2, %c0_3, %c0_4, %c0_5] : memref<1x16x16x4xf32, #tpu.memory_space<vmem>>, vector<1x16x16x4xf32>
    %3 = vector.shape_cast %2 : vector<1x16x16x4xf32> to vector<16x16x4xf32>
    %4 = arith.truncf %3 : vector<16x16x4xf32> to vector<16x16x4xbf16>
    %c1 = arith.constant 1 : index
    %c1_6 = arith.constant 1 : index
    %c0_7 = arith.constant 0 : index
    %5 = vector.load %arg7[%c1, %c1_6, %c0_7] : memref<18x18x4xbf16, #tpu.memory_space<vmem>>, vector<16x16x4xbf16>
    tpu.vector_store %arg7[%c1, %c1_6, %c0_7], %4 {strides = array<i32>} : memref<18x18x4xbf16, #tpu.memory_space<vmem>>, vector<16x16x4xbf16>,
    %c0_8 = arith.constant 0 : index
    %c0_9 = arith.constant 0 : index
    %c0_10 = arith.constant 0 : index
    %6 = vector.load %arg7[%c0_8, %c0_9, %c0_10] : memref<18x18x4xbf16, #tpu.memory_space<vmem>>, vector<16x16x4xbf16>
    %c0_11 = arith.constant 0 : index
    %c1_12 = arith.constant 1 : index
    %c0_13 = arith.constant 0 : index
    %7 = vector.load %arg7[%c0_11, %c1_12, %c0_13] : memref<18x18x4xbf16, #tpu.memory_space<vmem>>, vector<16x16x4xbf16>
    %c0_14 = arith.constant 0 : index
    %c2 = arith.constant 2 : index
    %c0_15 = arith.constant 0 : index
    %8 = vector.load %arg7[%c0_14, %c2, %c0_15] : memref<18x18x4xbf16, #tpu.memory_space<vmem>>, vector<16x16x4xbf16>
    %c1_16 = arith.constant 1 : index
    %c0_17 = arith.constant 0 : index
    %c0_18 = arith.constant 0 : index
    %9 = vector.load %arg7[%c1_16, %c0_17, %c0_18] : memref<18x18x4xbf16, #tpu.memory_space<vmem>>, vector<16x16x4xbf16>
    %c1_19 = arith.constant 1 : index
    %c1_20 = arith.constant 1 : index
    %c0_21 = arith.constant 0 : index
    %10 = vector.load %arg7[%c1_19, %c1_20, %c0_21] : memref<18x18x4xbf16, #tpu.memory_space<vmem>>, vector<16x16x4xbf16>
    %c1_22 = arith.constant 1 : index
    %c2_23 = arith.constant 2 : index
    %c0_24 = arith.constant 0 : index
    %11 = vector.load %arg7[%c1_22, %c2_23, %c0_24] : memref<18x18x4xbf16, #tpu.memory_space<vmem>>, vector<16x16x4xbf16>
    %c2_25 = arith.constant 2 : index
    %c0_26 = arith.constant 0 : index
    %c0_27 = arith.constant 0 : index
    %12 = vector.load %arg7[%c2_25, %c0_26, %c0_27] : memref<18x18x4xbf16, #tpu.memory_space<vmem>>, vector<16x16x4xbf16>
    %c2_28 = arith.constant 2 : index
    %c1_29 = arith.constant 1 : index
    %c0_30 = arith.constant 0 : index
    %13 = vector.load %arg7[%c2_28, %c1_29, %c0_30] : memref<18x18x4xbf16, #tpu.memory_space<vmem>>, vector<16x16x4xbf16>
    %c2_31 = arith.constant 2 : index
    %c2_32 = arith.constant 2 : index
    %c0_33 = arith.constant 0 : index
    %14 = vector.load %arg7[%c2_31, %c2_32, %c0_33] : memref<18x18x4xbf16, #tpu.memory_space<vmem>>, vector<16x16x4xbf16>
    %15 = tpu.concatenate %6, %7, %8, %9, %10, %11, %12, %13, %14 in 2 : vector<16x16x4xbf16>, vector<16x16x4xbf16>, vector<16x16x4xbf16>, vector<16x16x4xbf16>, vector<16x16x4xbf16>, vector<16x16x4xbf16>, vector<16x16x4xbf16>, vector<16x16x4xbf16>, vector<16x16x4xbf16> -> vector<16x16x36xbf16>
    %c0_34 = arith.constant 0 : index
    %c0_35 = arith.constant 0 : index
    %16 = vector.load %arg2[%c0_34, %c0_35] : memref<36x8xbf16, #tpu.memory_space<vmem>>, vector<36x8xbf16>
    %cst_36 = arith.constant dense<0.000000e+00> : vector<16x16x8xf32>
    %17 = tpu.matmul %15, %16, %cst_36 {dimension_numbers = #tpu.dot_dimension_numbers<[2], [0], [0, 1], [1], [0, 0, 0, 1, 1, 1], [], []>} : vector<16x16x36xbf16>, vector<36x8xbf16>, vector<16x16x8xf32> -> vector<16x16x8xf32>
    %c0_37 = arith.constant 0 : index
    %c0_38 = arith.constant 0 : index
    %18 = vector.load %arg3[%c0_37, %c0_38] : memref<1x8xf32, #tpu.memory_space<vmem>>, vector<1x8xf32>
    %19 = vector.shape_cast %18 : vector<1x8xf32> to vector<1x1x8xf32>
    %20 = vector.broadcast %19 : vector<1x1x8xf32> to vector<16x16x8xf32>
    %21 = arith.addf %17, %20 : vector<16x16x8xf32>
    %cst_39 = arith.constant 0.000000e+00 : f32
    %22 = vector.broadcast %cst_39 : f32 to vector<16x16x8xf32>
    %23 = arith.cmpf oge, %21, %22 : vector<16x16x8xf32>
    %cst_40 = arith.constant 0.00999999977 : f32
    %24 = vector.broadcast %cst_40 : f32 to vector<16x16x8xf32>
    %25 = arith.mulf %24, %21 : vector<16x16x8xf32>
    %26 = arith.select %23, %21, %25 : vector<16x16x8xi1>, vector<16x16x8xf32>
    %cst_41 = arith.constant 0.000000e+00 : bf16
    %27 = vector.broadcast %cst_41 : bf16 to vector<18x18x8xbf16>
    %c0_42 = arith.constant 0 : index
    %c0_43 = arith.constant 0 : index
    %c0_44 = arith.constant 0 : index
    %28 = vector.load %arg8[%c0_42, %c0_43, %c0_44] : memref<18x18x8xbf16, #tpu.memory_space<vmem>>, vector<18x18x8xbf16>
    tpu.vector_store %arg8[%c0_42, %c0_43, %c0_44], %27 {strides = array<i32>} : memref<18x18x8xbf16, #tpu.memory_space<vmem>>, vector<18x18x8xbf16>,
    %29 = arith.truncf %26 : vector<16x16x8xf32> to vector<16x16x8xbf16>
    %c1_45 = arith.constant 1 : index
    %c1_46 = arith.constant 1 : index
    %c0_47 = arith.constant 0 : index
    %30 = vector.load %arg8[%c1_45, %c1_46, %c0_47] : memref<18x18x8xbf16, #tpu.memory_space<vmem>>, vector<16x16x8xbf16>
    tpu.vector_store %arg8[%c1_45, %c1_46, %c0_47], %29 {strides = array<i32>} : memref<18x18x8xbf16, #tpu.memory_space<vmem>>, vector<16x16x8xbf16>,
    %c0_48 = arith.constant 0 : index
    %c0_49 = arith.constant 0 : index
    %c0_50 = arith.constant 0 : index
    %31 = vector.load %arg8[%c0_48, %c0_49, %c0_50] : memref<18x18x8xbf16, #tpu.memory_space<vmem>>, vector<16x16x8xbf16>
    %c0_51 = arith.constant 0 : index
    %c1_52 = arith.constant 1 : index
    %c0_53 = arith.constant 0 : index
    %32 = vector.load %arg8[%c0_51, %c1_52, %c0_53] : memref<18x18x8xbf16, #tpu.memory_space<vmem>>, vector<16x16x8xbf16>
    %c0_54 = arith.constant 0 : index
    %c2_55 = arith.constant 2 : index
    %c0_56 = arith.constant 0 : index
    %33 = vector.load %arg8[%c0_54, %c2_55, %c0_56] : memref<18x18x8xbf16, #tpu.memory_space<vmem>>, vector<16x16x8xbf16>
    %c1_57 = arith.constant 1 : index
    %c0_58 = arith.constant 0 : index
    %c0_59 = arith.constant 0 : index
    %34 = vector.load %arg8[%c1_57, %c0_58, %c0_59] : memref<18x18x8xbf16, #tpu.memory_space<vmem>>, vector<16x16x8xbf16>
    %c1_60 = arith.constant 1 : index
    %c1_61 = arith.constant 1 : index
    %c0_62 = arith.constant 0 : index
    %35 = vector.load %arg8[%c1_60, %c1_61, %c0_62] : memref<18x18x8xbf16, #tpu.memory_space<vmem>>, vector<16x16x8xbf16>
    %c1_63 = arith.constant 1 : index
    %c2_64 = arith.constant 2 : index
    %c0_65 = arith.constant 0 : index
    %36 = vector.load %arg8[%c1_63, %c2_64, %c0_65] : memref<18x18x8xbf16, #tpu.memory_space<vmem>>, vector<16x16x8xbf16>
    %c2_66 = arith.constant 2 : index
    %c0_67 = arith.constant 0 : index
    %c0_68 = arith.constant 0 : index
    %37 = vector.load %arg8[%c2_66, %c0_67, %c0_68] : memref<18x18x8xbf16, #tpu.memory_space<vmem>>, vector<16x16x8xbf16>
    %c2_69 = arith.constant 2 : index
    %c1_70 = arith.constant 1 : index
    %c0_71 = arith.constant 0 : index
    %38 = vector.load %arg8[%c2_69, %c1_70, %c0_71] : memref<18x18x8xbf16, #tpu.memory_space<vmem>>, vector<16x16x8xbf16>
    %c2_72 = arith.constant 2 : index
    %c2_73 = arith.constant 2 : index
    %c0_74 = arith.constant 0 : index
    %39 = vector.load %arg8[%c2_72, %c2_73, %c0_74] : memref<18x18x8xbf16, #tpu.memory_space<vmem>>, vector<16x16x8xbf16>
    %40 = tpu.concatenate %31, %32, %33, %34, %35, %36, %37, %38, %39 in 2 : vector<16x16x8xbf16>, vector<16x16x8xbf16>, vector<16x16x8xbf16>, vector<16x16x8xbf16>, vector<16x16x8xbf16>, vector<16x16x8xbf16>, vector<16x16x8xbf16>, vector<16x16x8xbf16>, vector<16x16x8xbf16> -> vector<16x16x72xbf16>
    %41 = vector.shape_cast %40 : vector<16x16x72xbf16> to vector<256x72xbf16>
    %c0_75 = arith.constant 0 : index
    %c0_76 = arith.constant 0 : index
    %42 = vector.load %arg4[%c0_75, %c0_76] : memref<8x72xbf16, #tpu.memory_space<vmem>>, vector<8x72xbf16>
    %cst_77 = arith.constant dense<0.000000e+00> : vector<8x256xf32>
    %43 = tpu.matmul %42, %41, %cst_77 {dimension_numbers = #tpu.dot_dimension_numbers<[1], [1], [0], [0], [0, 0, 1, 0], [], []>} : vector<8x72xbf16>, vector<256x72xbf16>, vector<8x256xf32> -> vector<8x256xf32>
    %c0_78 = arith.constant 0 : index
    %c0_79 = arith.constant 0 : index
    %44 = vector.load %arg5[%c0_78, %c0_79] : memref<8x1xf32, #tpu.memory_space<vmem>>, vector<8x1xf32>
    %45 = vector.broadcast %44 : vector<8x1xf32> to vector<8x256xf32>
    %46 = arith.addf %43, %45 : vector<8x256xf32>
    %cst_80 = arith.constant 0.000000e+00 : f32
    %47 = vector.broadcast %cst_80 : f32 to vector<8x256xf32>
    %48 = arith.cmpf oge, %46, %47 : vector<8x256xf32>
    %cst_81 = arith.constant 0.00999999977 : f32
    %49 = vector.broadcast %cst_81 : f32 to vector<8x256xf32>
    %50 = arith.mulf %49, %46 : vector<8x256xf32>
    %51 = arith.select %48, %46, %50 : vector<8x256xi1>, vector<8x256xf32>
    %c0_82 = arith.constant 0 : index
    %c0_83 = arith.constant 0 : index
    %c0_84 = arith.constant 0 : index
    %52 = vector.load %arg6[%c0_82, %c0_83, %c0_84] : memref<1x8x256xf32, #tpu.memory_space<vmem>>, vector<1x8x256xf32>
    %53 = vector.shape_cast %52 : vector<1x8x256xf32> to vector<8x256xf32>
    %54 = vector.shape_cast %51 : vector<8x256xf32> to vector<1x8x256xf32>
    tpu.vector_store %arg6[%c0_82, %c0_83, %c0_84], %54 {strides = array<i32>} : memref<1x8x256xf32, #tpu.memory_space<vmem>>, vector<1x8x256xf32>,
    return
  }
  func.func @transform_0(%arg0: i32) -> (i32, i32, i32, i32) {
    %c0_i32 = arith.constant 0 : i32
    %c0_i32_0 = arith.constant 0 : i32
    %c0_i32_1 = arith.constant 0 : i32
    %c0_i32_2 = arith.constant 0 : i32
    return %arg0, %c0_i32, %c0_i32_0, %c0_i32_1 : i32, i32, i32, i32
  }
  func.func @transform_1(%arg0: i32) -> (i32, i32) {
    %c0_i32 = arith.constant 0 : i32
    %c0_i32_0 = arith.constant 0 : i32
    %c0_i32_1 = arith.constant 0 : i32
    return %c0_i32, %c0_i32_0 : i32, i32
  }
  func.func @transform_2(%arg0: i32) -> (i32, i32) {
    %c0_i32 = arith.constant 0 : i32
    %c0_i32_0 = arith.constant 0 : i32
    %c0_i32_1 = arith.constant 0 : i32
    return %c0_i32, %c0_i32_0 : i32, i32
  }
  func.func @transform_3(%arg0: i32) -> (i32, i32) {
    %c0_i32 = arith.constant 0 : i32
    %c0_i32_0 = arith.constant 0 : i32
    %c0_i32_1 = arith.constant 0 : i32
    return %c0_i32, %c0_i32_0 : i32, i32
  }
  func.func @transform_4(%arg0: i32) -> (i32, i32) {
    %c0_i32 = arith.constant 0 : i32
    %c0_i32_0 = arith.constant 0 : i32
    %c0_i32_1 = arith.constant 0 : i32
    return %c0_i32, %c0_i32_0 : i32, i32
  }
  func.func @transform_5(%arg0: i32) -> (i32, i32, i32) {
    %c0_i32 = arith.constant 0 : i32
    %c0_i32_0 = arith.constant 0 : i32
    %c0_i32_1 = arith.constant 0 : i32
    return %arg0, %c0_i32, %c0_i32_0 : i32, i32, i32
  }
}

</mosaic_0001>

<llo_original>
// kernel: conv_block_forward.1
$region0: #{conv_block_forward.1}
  #allocation0 [shape = 'u32[]', space=smem, size = 0x4, offset = 0x4, fixed_abs, tag = 'smem constant byte address 0x4 - core index']
  #allocation1 [shape = 'u32[144,128]{1,0:T(1,128)}', space=vmem, size = 0x12000, scoped, tag = 'internal scratch']
  #allocation2 [shape = 'bf16[18,18,4]{2,1,0:T(8,128)(2,1)}', space=vmem, size = 0x1b000, scoped, tag = 'scratch operand']
  #allocation3 [shape = 'bf16[18,18,8]{2,1,0:T(8,128)(2,1)}', space=vmem, size = 0x1b000, scoped, tag = 'scratch operand']
  %s0 = inlined_call_operand.vmem [shape: f32[2,16,16,4], index: 0, kind: input, shape index: {}]
  %s1 = inlined_call_operand.vmem [shape: bf16[36,8], index: 1, kind: input, shape index: {}]
  %s2 = inlined_call_operand.vmem [shape: f32[1,8], index: 2, kind: input, shape index: {}]
  %s3 = inlined_call_operand.vmem [shape: bf16[8,72], index: 3, kind: input, shape index: {}]
  %s4 = inlined_call_operand.vmem [shape: f32[8,1], index: 4, kind: input, shape index: {}]
  %s5 = inlined_call_operand.vmem [shape: f32[2,8,256], index: 5, kind: output, shape index: {}]
  %s6 = sld [smem:[#allocation0]]
  $region53: #{conv_block_forward.1} parent=0
    _
  %s8 = ssub.s32 1, %s6
  %s9 = scalar_select 0, %s8, %s6
  loop: start=0, step=1, limit=4
  $region2: #{conv_block_forward.1} parent=0 // loop_pre_header
    _
  $region3: #{conv_block_forward.1} parent=0 // loop_header
    %s11 = sphi 0, %s15
    %p12 = scmp.ge.s32.totalorder %s11, 4
    %s21 = sphi 0, %s23
    %s24 = sphi 0, %s21
    %s25 = sphi 0, %s24
    %s41 = sphi 0, %s25
    %s45 = sphi 0, %s45
    %s47 = sphi 0, %s45
    %s48 = sphi 0, %s47
    %s62 = sphi 0, %s48
    %s66 = sphi 0, %s66
    %s68 = sphi 0, %s66
    %s69 = sphi 0, %s68
    %s83 = sphi 0, %s69
    %s87 = sphi 0, %s87
    %s89 = sphi 0, %s87
    %s90 = sphi 0, %s89
    %s104 = sphi 0, %s90
    %s108 = sphi 0, %s108
    %s110 = sphi 0, %s108
    %s111 = sphi 0, %s110
    %s125 = sphi 0, %s111
    %s131 = sphi 0, %s133
    %s134 = sphi 0, %s131
    %s135 = sphi 0, %s134
    %s151 = sphi 0, %s135
  $region4: #{conv_block_forward.1} parent=0 // loop_header_branch
    %14 = sbr.rel (%p12) target = $region8
  $region5: #{conv_block_forward.1} parent=0 // loop_body
    %s16 = ssub.s32 %s11, 1
    %s17 = ssub.s32 %s11, 2
    %s18 = sadd.s32 %s11, 1
    %s19 = ssub.s32 %s11, %s18
    %p20 = scmp.eq.s32.totalorder %s19, 0
    %s22 = sadd.s32 %s21, 1
    %s23 = scalar_select %p20, %s21, %s22
    %p26 = pneg %p20
    %p27 = scmp.eq.s32.totalorder %s11, 1
    %p28 = por %p26, %p27
    %p29 = scmp.ne.s32.totalorder %s21, %s24
    %p30 = scmp.eq.s32.totalorder %s11, 0
    %p31 = por %p29, %p30
    %p32 = scmp.ne.s32.totalorder %s21, %s24
    %p33 = scmp.eq.s32.totalorder %s16, 1
    %p34 = por %p32, %p33
    %p35 = scmp.ne.s32.totalorder %s24, %s25
    %p36 = scmp.eq.s32.totalorder %s16, 0
    %p37 = por %p35, %p36
    %p38 = scmp.ne.s32.totalorder %s24, %s25
    %p39 = scmp.eq.s32.totalorder %s17, 1
    %p40 = por %p38, %p39
    %p42 = scmp.ne.s32.totalorder %s25, %s41
    %p43 = scmp.eq.s32.totalorder %s17, 0
    %p44 = por %p42, %p43
    %s46 = sadd.s32 %s45, 1
    %p49 = scmp.eq.s32.totalorder %s11, 1
    %p50 = scmp.ne.s32.totalorder %s45, %s47
    %p51 = scmp.eq.s32.totalorder %s11, 0
    %p52 = por %p50, %p51
    %p53 = scmp.ne.s32.totalorder %s45, %s47
    %p54 = scmp.eq.s32.totalorder %s16, 1
    %p55 = por %p53, %p54
    %p56 = scmp.ne.s32.totalorder %s47, %s48
    %p57 = scmp.eq.s32.totalorder %s16, 0
    %p58 = por %p56, %p57
    %p59 = scmp.ne.s32.totalorder %s47, %s48
    %p60 = scmp.eq.s32.totalorder %s17, 1
    %p61 = por %p59, %p60
    %p63 = scmp.ne.s32.totalorder %s48, %s62
    %p64 = scmp.eq.s32.totalorder %s17, 0
    %p65 = por %p63, %p64
    %s67 = sadd.s32 %s66, 1
    %p70 = scmp.eq.s32.totalorder %s11, 1
    %p71 = scmp.ne.s32.totalorder %s66, %s68
    %p72 = scmp.eq.s32.totalorder %s11, 0
    %p73 = por %p71, %p72
    %p74 = scmp.ne.s32.totalorder %s66, %s68
    %p75 = scmp.eq.s32.totalorder %s16, 1
    %p76 = por %p74, %p75
    %p77 = scmp.ne.s32.totalorder %s68, %s69
    %p78 = scmp.eq.s32.totalorder %s16, 0
    %p79 = por %p77, %p78
    %p80 = scmp.ne.s32.totalorder %s68, %s69
    %p81 = scmp.eq.s32.totalorder %s17, 1
    %p82 = por %p80, %p81
    %p84 = scmp.ne.s32.totalorder %s69, %s83
    %p85 = scmp.eq.s32.totalorder %s17, 0
    %p86 = por %p84, %p85
    %s88 = sadd.s32 %s87, 1
    %p91 = scmp.eq.s32.totalorder %s11, 1
    %p92 = scmp.ne.s32.totalorder %s87, %s89
    %p93 = scmp.eq.s32.totalorder %s11, 0
    %p94 = por %p92, %p93
    %p95 = scmp.ne.s32.totalorder %s87, %s89
    %p96 = scmp.eq.s32.totalorder %s16, 1
    %p97 = por %p95, %p96
    %p98 = scmp.ne.s32.totalorder %s89, %s90
    %p99 = scmp.eq.s32.totalorder %s16, 0
    %p100 = por %p98, %p99
    %p101 = scmp.ne.s32.totalorder %s89, %s90
    %p102 = scmp.eq.s32.totalorder %s17, 1
    %p103 = por %p101, %p102
    %p105 = scmp.ne.s32.totalorder %s90, %s104
    %p106 = scmp.eq.s32.totalorder %s17, 0
    %p107 = por %p105, %p106
    %s109 = sadd.s32 %s108, 1
    %p112 = scmp.eq.s32.totalorder %s11, 1
    %p113 = scmp.ne.s32.totalorder %s108, %s110
    %p114 = scmp.eq.s32.totalorder %s11, 0
    %p115 = por %p113, %p114
    %p116 = scmp.ne.s32.totalorder %s108, %s110
    %p117 = scmp.eq.s32.totalorder %s16, 1
    %p118 = por %p116, %p117
    %p119 = scmp.ne.s32.totalorder %s110, %s111
    %p120 = scmp.eq.s32.totalorder %s16, 0
    %p121 = por %p119, %p120
    %p122 = scmp.ne.s32.totalorder %s110, %s111
    %p123 = scmp.eq.s32.totalorder %s17, 1
    %p124 = por %p122, %p123
    %p126 = scmp.ne.s32.totalorder %s111, %s125
    %p127 = scmp.eq.s32.totalorder %s17, 0
    %p128 = por %p126, %p127
    %s129 = ssub.s32 %s11, %s18
    %p130 = scmp.eq.s32.totalorder %s129, 0
    %s132 = sadd.s32 %s131, 1
    %s133 = scalar_select %p130, %s131, %s132
    %p136 = pneg %p130
    %p137 = scmp.eq.s32.totalorder %s11, 1
    %p138 = por %p136, %p137
    %p139 = scmp.ne.s32.totalorder %s131, %s134
    %p140 = scmp.eq.s32.totalorder %s11, 0
    %p141 = por %p139, %p140
    %p142 = scmp.ne.s32.totalorder %s131, %s134
    %p143 = scmp.eq.s32.totalorder %s16, 1
    %p144 = por %p142, %p143
    %p145 = scmp.ne.s32.totalorder %s134, %s135
    %p146 = scmp.eq.s32.totalorder %s16, 0
    %p147 = por %p145, %p146
    %p148 = scmp.ne.s32.totalorder %s134, %s135
    %p149 = scmp.eq.s32.totalorder %s17, 1
    %p150 = por %p148, %p149
    %p152 = scmp.ne.s32.totalorder %s135, %s151
    %p153 = scmp.eq.s32.totalorder %s17, 0
    %p154 = por %p152, %p153
    %p155 = scmp.le.s32.totalorder 1, %s11
    %p156 = scmp.lt.s32.totalorder %s11, 3
    %p157 = pnand %p155, %p156
    %p158 = pneg %p157
    // Predicated region
    $region9: #{conv_block_forward.1} parent=5 // pred_check
      _
    $region10: #{conv_block_forward.1} parent=5 // pred_check_branch
      %160 = sbr.rel (%p157) target = $region12
    $region11: #{conv_block_forward.1} parent=5 // pred_region
      %s161 = ssub.s32 %s11, 1
      // Predicated region
      $region13: #{conv_block_forward.1} parent=11 // pred_check
        %p162 = pneg %p58
      $region14: #{conv_block_forward.1} parent=11 // pred_check_branch
        %164 = sbr.rel (%p162) target = $region16
      $region15: #{conv_block_forward.1} parent=11 // pred_region
        _
      $region16: #{conv_block_forward.1} parent=11 // pred_fallthru
        _
      // Predicated region
      $region17: #{conv_block_forward.1} parent=11 // pred_check
        %p165 = pneg %p79
      $region18: #{conv_block_forward.1} parent=11 // pred_check_branch
        %167 = sbr.rel (%p165) target = $region20
      $region19: #{conv_block_forward.1} parent=11 // pred_region
        _
      $region20: #{conv_block_forward.1} parent=11 // pred_fallthru
        _
      // Predicated region
      $region21: #{conv_block_forward.1} parent=11 // pred_check
        %p168 = pneg %p100
      $region22: #{conv_block_forward.1} parent=11 // pred_check_branch
        %170 = sbr.rel (%p168) target = $region24
      $region23: #{conv_block_forward.1} parent=11 // pred_region
        _
      $region24: #{conv_block_forward.1} parent=11 // pred_fallthru
        _
      // Predicated region
      $region25: #{conv_block_forward.1} parent=11 // pred_check
        %p171 = pneg %p121
      $region26: #{conv_block_forward.1} parent=11 // pred_check_branch
        %173 = sbr.rel (%p171) target = $region28
      $region27: #{conv_block_forward.1} parent=11 // pred_region
        _
      $region28: #{conv_block_forward.1} parent=11 // pred_fallthru
        _
    $region12: #{conv_block_forward.1} parent=5 // pred_fallthru
      _
    %p174 = scmp.lt.s32.totalorder %s11, 2
    // Predicated region
    $region29: #{conv_block_forward.1} parent=5 // pred_check
      %p175 = pneg %p174
    $region30: #{conv_block_forward.1} parent=5 // pred_check_branch
      %177 = sbr.rel (%p175) target = $region32
    $region31: #{conv_block_forward.1} parent=5 // pred_region
      // Predicated region
      $region33: #{conv_block_forward.1} parent=31 // pred_check
        %p178 = pneg %p31
      $region34: #{conv_block_forward.1} parent=31 // pred_check_branch
        %180 = sbr.rel (%p178) target = $region36
      $region35: #{conv_block_forward.1} parent=31 // pred_region
        %p181 = scmp.lt.s32.totalorder %s11, 1
        %s182 = scalar_select %p181, %s11, 1
        %s183 = smul.addr %s182, 32
        %s184 = smul.addr %s183, 8
        %s185 = scalar_lea.vmem %s0, %s184
      $region36: #{conv_block_forward.1} parent=31 // pred_fallthru
        _
    $region32: #{conv_block_forward.1} parent=5 // pred_fallthru
      _
    %p186 = scmp.le.s32.totalorder 1, %s11
    %p187 = scmp.lt.s32.totalorder %s11, 3
    %p188 = pnand %p186, %p187
    %p189 = pneg %p188
    // Predicated region
    $region37: #{conv_block_forward.1} parent=5 // pred_check
      _
    $region38: #{conv_block_forward.1} parent=5 // pred_check_branch
      %191 = sbr.rel (%p188) target = $region40
    $region39: #{conv_block_forward.1} parent=5 // pred_region
      %s192 = ssub.s32 %s11, 1
      %p193 = scmp.lt.s32.totalorder %s16, 1
      %s194 = scalar_select %p193, %s16, 1
      %s195 = smul.addr %s194, 32
      %s196 = smul.addr %s195, 8
      %s197 = scalar_lea.vmem %s0, %s196
      %p198 = pneg %p37
      %p199 = pneg %p34
      %p200 = pneg %p58
      %p201 = pneg %p55
      %p202 = pneg %p79
      %p203 = pneg %p76
      %p204 = pneg %p100
      %p205 = pneg %p97
      %p206 = pneg %p121
      %p207 = pneg %p118
      %p208 = pneg %p147
      %p209 = pneg %p144
      %p210 = scmp.lt.s32.totalorder %s16, 1
      %s211 = scalar_select %p210, %s16, 1
      %s212 = smul.addr %s211, 2
      %s213 = smul.addr %s212, 8
      %s214 = scalar_lea.vmem %s5, %s213
      %p215 = scmp.lt.s32.totalorder %s16, 1
      %s216 = scalar_select %p215, %s16, 1
      %s217 = smul.addr %s216, 32
      %s218 = smul.addr %s217, 8
      %s219 = scalar_lea.vmem %s0, %s218
      %p220 = scmp.lt.s32.totalorder %s16, 1
      %s221 = scalar_select %p220, %s16, 1
      %s222 = smul.addr %s221, 2
      %s223 = smul.addr %s222, 8
      %s224 = scalar_lea.vmem %s5, %s223
      %vm226 = vcmask 27648
      %227 = vst.msk [vmem:[#allocation2] sm:$0xf] %vm226, 0
      %228 = vst.msk [vmem:[#allocation2 + $0x4] sm:$0xf] %vm226, 0
      %vm229 = vcmask 24576
      %230 = vst.msk [vmem:[#allocation2 + $0x8] sm:$0x1] %vm229, 0
      %231 = vst.msk [vmem:[#allocation2 + $0xc] sm:$0xf] %vm226, 0
      %232 = vst.msk [vmem:[#allocation2 + $0x10] sm:$0xf] %vm226, 0
      %233 = vst.msk [vmem:[#allocation2 + $0x14] sm:$0x1] %vm229, 0
      %234 = vst.msk [vmem:[#allocation2 + $0x18] sm:$0xf] %vm226, 0
      %235 = vst.msk [vmem:[#allocation2 + $0x1c] sm:$0xf] %vm226, 0
      %236 = vst.msk [vmem:[#allocation2 + $0x20] sm:$0x1] %vm229, 0
      %237 = vst.msk [vmem:[#allocation2 + $0x24] sm:$0xf] %vm226, 0
      %238 = vst.msk [vmem:[#allocation2 + $0x28] sm:$0xf] %vm226, 0
      %239 = vst.msk [vmem:[#allocation2 + $0x2c] sm:$0x1] %vm229, 0
      %240 = vst.msk [vmem:[#allocation2 + $0x30] sm:$0xf] %vm226, 0
      %241 = vst.msk [vmem:[#allocation2 + $0x34] sm:$0xf] %vm226, 0
      %242 = vst.msk [vmem:[#allocation2 + $0x38] sm:$0x1] %vm229, 0
      %243 = vst.msk [vmem:[#allocation2 + $0x3c] sm:$0xf] %vm226, 0
      %244 = vst.msk [vmem:[#allocation2 + $0x40] sm:$0xf] %vm226, 0
      %245 = vst.msk [vmem:[#allocation2 + $0x44] sm:$0x1] %vm229, 0
      %246 = vst.msk [vmem:[#allocation2 + $0x48] sm:$0xf] %vm226, 0
      %247 = vst.msk [vmem:[#allocation2 + $0x4c] sm:$0xf] %vm226, 0
      %248 = vst.msk [vmem:[#allocation2 + $0x50] sm:$0x1] %vm229, 0
      %249 = vst.msk [vmem:[#allocation2 + $0x54] sm:$0xf] %vm226, 0
      %250 = vst.msk [vmem:[#allocation2 + $0x58] sm:$0xf] %vm226, 0
      %251 = vst.msk [vmem:[#allocation2 + $0x5c] sm:$0x1] %vm229, 0
      %252 = vst.msk [vmem:[#allocation2 + $0x60] sm:$0xf] %vm226, 0
      %253 = vst.msk [vmem:[#allocation2 + $0x64] sm:$0xf] %vm226, 0
      %254 = vst.msk [vmem:[#allocation2 + $0x68] sm:$0x1] %vm229, 0
      %255 = vst.msk [vmem:[#allocation2 + $0x6c] sm:$0xf] %vm226, 0
      %256 = vst.msk [vmem:[#allocation2 + $0x70] sm:$0xf] %vm226, 0
      %257 = vst.msk [vmem:[#allocation2 + $0x74] sm:$0x1] %vm229, 0
      %258 = vst.msk [vmem:[#allocation2 + $0x78] sm:$0xf] %vm226, 0
      %259 = vst.msk [vmem:[#allocation2 + $0x7c] sm:$0xf] %vm226, 0
      %260 = vst.msk [vmem:[#allocation2 + $0x80] sm:$0x1] %vm229, 0
      %261 = vst.msk [vmem:[#allocation2 + $0x84] sm:$0xf] %vm226, 0
      %262 = vst.msk [vmem:[#allocation2 + $0x88] sm:$0xf] %vm226, 0
      %263 = vst.msk [vmem:[#allocation2 + $0x8c] sm:$0x1] %vm229, 0
      %264 = vst.msk [vmem:[#allocation2 + $0x90] sm:$0xf] %vm226, 0
      %265 = vst.msk [vmem:[#allocation2 + $0x94] sm:$0xf] %vm226, 0
      %266 = vst.msk [vmem:[#allocation2 + $0x98] sm:$0x1] %vm229, 0
      %267 = vst.msk [vmem:[#allocation2 + $0x9c] sm:$0xf] %vm226, 0
      %268 = vst.msk [vmem:[#allocation2 + $0xa0] sm:$0xf] %vm226, 0
      %269 = vst.msk [vmem:[#allocation2 + $0xa4] sm:$0x1] %vm229, 0
      %270 = vst.msk [vmem:[#allocation2 + $0xa8] sm:$0xf] %vm226, 0
      %271 = vst.msk [vmem:[#allocation2 + $0xac] sm:$0xf] %vm226, 0
      %272 = vst.msk [vmem:[#allocation2 + $0xb0] sm:$0x1] %vm229, 0
      %273 = vst.msk [vmem:[#allocation2 + $0xb4] sm:$0xf] %vm226, 0
      %274 = vst.msk [vmem:[#allocation2 + $0xb8] sm:$0xf] %vm226, 0
      %275 = vst.msk [vmem:[#allocation2 + $0xbc] sm:$0x1] %vm229, 0
      %276 = vst.msk [vmem:[#allocation2 + $0xc0] sm:$0xf] %vm226, 0
      %277 = vst.msk [vmem:[#allocation2 + $0xc4] sm:$0xf] %vm226, 0
      %278 = vst.msk [vmem:[#allocation2 + $0xc8] sm:$0x1] %vm229, 0
      %279 = vst.msk [vmem:[#allocation2 + $0xcc] sm:$0xf] %vm226, 0
      %280 = vst.msk [vmem:[#allocation2 + $0xd0] sm:$0xf] %vm226, 0
      %281 = vst.msk [vmem:[#allocation2 + $0xd4] sm:$0x1] %vm229, 0
      %v282 = vld [vmem:[%s219] sm:$0xff]
      %v283 = vld [vmem:[%s219 + $0x8] sm:$0xff]
      %v284 = vld [vmem:[%s219 + $0x10] sm:$0xff]
      %v285 = vld [vmem:[%s219 + $0x18] sm:$0xff]
      %v286 = vld [vmem:[%s219 + $0x20] sm:$0xff]
      %v287 = vld [vmem:[%s219 + $0x28] sm:$0xff]
      %v288 = vld [vmem:[%s219 + $0x30] sm:$0xff]
      %v289 = vld [vmem:[%s219 + $0x38] sm:$0xff]
      %v290 = vld [vmem:[%s219 + $0x40] sm:$0xff]
      %v291 = vld [vmem:[%s219 + $0x48] sm:$0xff]
      %v292 = vld [vmem:[%s219 + $0x50] sm:$0xff]
      %v293 = vld [vmem:[%s219 + $0x58] sm:$0xff]
      %v294 = vld [vmem:[%s219 + $0x60] sm:$0xff]
      %v295 = vld [vmem:[%s219 + $0x68] sm:$0xff]
      %v296 = vld [vmem:[%s219 + $0x70] sm:$0xff]
      %v297 = vld [vmem:[%s219 + $0x78] sm:$0xff]
      %v298 = vld [vmem:[%s219 + $0x80] sm:$0xff]
      %v299 = vld [vmem:[%s219 + $0x88] sm:$0xff]
      %v300 = vld [vmem:[%s219 + $0x90] sm:$0xff]
      %v301 = vld [vmem:[%s219 + $0x98] sm:$0xff]
      %v302 = vld [vmem:[%s219 + $0xa0] sm:$0xff]
      %v303 = vld [vmem:[%s219 + $0xa8] sm:$0xff]
      %v304 = vld [vmem:[%s219 + $0xb0] sm:$0xff]
      %v305 = vld [vmem:[%s219 + $0xb8] sm:$0xff]
      %v306 = vld [vmem:[%s219 + $0xc0] sm:$0xff]
      %v307 = vld [vmem:[%s219 + $0xc8] sm:$0xff]
      %v308 = vld [vmem:[%s219 + $0xd0] sm:$0xff]
      %v309 = vld [vmem:[%s219 + $0xd8] sm:$0xff]
      %v310 = vld [vmem:[%s219 + $0xe0] sm:$0xff]
      %v311 = vld [vmem:[%s219 + $0xe8] sm:$0xff]
      %v312 = vld [vmem:[%s219 + $0xf0] sm:$0xff]
      %v313 = vld [vmem:[%s219 + $0xf8] sm:$0xff]
      %v314 = vpack.c.bf16 %v283, %v282
      %v315 = vpack.c.bf16 %v285, %v284
      %v316 = vpack.c.bf16 %v287, %v286
      %v317 = vpack.c.bf16 %v289, %v288
      %v318 = vpack.c.bf16 %v291, %v290
      %v319 = vpack.c.bf16 %v293, %v292
      %v320 = vpack.c.bf16 %v295, %v294
      %v321 = vpack.c.bf16 %v297, %v296
      %v322 = vpack.c.bf16 %v299, %v298
      %v323 = vpack.c.bf16 %v301, %v300
      %v324 = vpack.c.bf16 %v303, %v302
      %v325 = vpack.c.bf16 %v305, %v304
      %v326 = vpack.c.bf16 %v307, %v306
      %v327 = vpack.c.bf16 %v309, %v308
      %v328 = vpack.c.bf16 %v311, %v310
      %v329 = vpack.c.bf16 %v313, %v312
      %v346 = vunpack.c.l.b16 %v314
      %v347 = vunpack.c.h.b16 %v314
      %v348 = vunpack.c.l.b16 %v315
      %v349 = vunpack.c.h.b16 %v315
      %v350 = vunpack.c.l.b16 %v316
      %v351 = vunpack.c.h.b16 %v316
      %v352 = vunpack.c.l.b16 %v317
      %v353 = vunpack.c.h.b16 %v317
      %v354 = vunpack.c.l.b16 %v318
      %v355 = vunpack.c.h.b16 %v318
      %v356 = vunpack.c.l.b16 %v319
      %v357 = vunpack.c.h.b16 %v319
      %v358 = vunpack.c.l.b16 %v320
      %v359 = vunpack.c.h.b16 %v320
      %v360 = vunpack.c.l.b16 %v321
      %v361 = vunpack.c.h.b16 %v321
      %v362 = vunpack.c.l.b16 %v322
      %v363 = vunpack.c.h.b16 %v322
      %v364 = vunpack.c.l.b16 %v323
      %v365 = vunpack.c.h.b16 %v323
      %v366 = vunpack.c.l.b16 %v324
      %v367 = vunpack.c.h.b16 %v324
      %v368 = vunpack.c.l.b16 %v325
      %v369 = vunpack.c.h.b16 %v325
      %v370 = vunpack.c.l.b16 %v326
      %v371 = vunpack.c.h.b16 %v326
      %v372 = vunpack.c.l.b16 %v327
      %v373 = vunpack.c.h.b16 %v327
      %v374 = vunpack.c.l.b16 %v328
      %v375 = vunpack.c.h.b16 %v328
      %v376 = vunpack.c.l.b16 %v329
      %v377 = vunpack.c.h.b16 %v329
      %v378 = vpack.c.b16 %v346, %v346
      %v379 = vpack.c.b16 %v347, %v347
      %v380 = vpack.c.b16 %v348, %v348
      %v381 = vpack.c.b16 %v349, %v349
      %v382 = vpack.c.b16 %v350, %v350
      %v383 = vpack.c.b16 %v351, %v351
      %v384 = vpack.c.b16 %v352, %v352
      %v385 = vpack.c.b16 %v353, %v353
      %v386 = vpack.c.b16 %v354, %v354
      %v387 = vpack.c.b16 %v355, %v355
      %v388 = vpack.c.b16 %v356, %v356
      %v389 = vpack.c.b16 %v357, %v357
      %v390 = vpack.c.b16 %v358, %v358
      %v391 = vpack.c.b16 %v359, %v359
      %v392 = vpack.c.b16 %v360, %v360
      %v393 = vpack.c.b16 %v361, %v361
      %v394 = vpack.c.b16 %v362, %v362
      %v395 = vpack.c.b16 %v363, %v363
      %v396 = vpack.c.b16 %v364, %v364
      %v397 = vpack.c.b16 %v365, %v365
      %v398 = vpack.c.b16 %v366, %v366
      %v399 = vpack.c.b16 %v367, %v367
      %v400 = vpack.c.b16 %v368, %v368
      %v401 = vpack.c.b16 %v369, %v369
      %v402 = vpack.c.b16 %v370, %v370
      %v403 = vpack.c.b16 %v371, %v371
      %v404 = vpack.c.b16 %v372, %v372
      %v405 = vpack.c.b16 %v373, %v373
      %v406 = vpack.c.b16 %v374, %v374
      %v407 = vpack.c.b16 %v375, %v375
      %v408 = vpack.c.b16 %v376, %v376
      %v409 = vpack.c.b16 %v377, %v377
      %vm410 = vsmask.f32 256
      %vm411 = vsmask.f32 4368
      %vm412 = vmor %vm410, %vm411
      %v414 = vshrl.u32 %v378, 16
      %v416 = vrot.slane %v414, 7
      %v417 = vshll.u32 %v378, 16
      %v419 = vor.u32 %v416, %v417
      %v420 = vrot.slane %v416, 4
      %v422 = vshrl.u32 %v379, 16
      %v424 = vrot.slane %v422, 7
      %v425 = vshll.u32 %v379, 16
      %v427 = vor.u32 %v424, %v425
      %v428 = vsel %vm412, %v420, %v427
      %v429 = vrot.slane %v424, 4
      %v431 = vshrl.u32 %v380, 16
      %v433 = vrot.slane %v431, 7
      %v434 = vshll.u32 %v380, 16
      %v436 = vor.u32 %v433, %v434
      %v437 = vrot.slane %v433, 4
      %v439 = vshrl.u32 %v381, 16
      %v441 = vrot.slane %v439, 7
      %v442 = vshll.u32 %v381, 16
      %v444 = vor.u32 %v441, %v442
      %v445 = vsel %vm412, %v437, %v444
      %v446 = vrot.slane %v441, 4
      %v448 = vshrl.u32 %v382, 16
      %v450 = vrot.slane %v448, 7
      %v451 = vshll.u32 %v382, 16
      %v453 = vor.u32 %v450, %v451
      %v454 = vrot.slane %v450, 4
      %v456 = vshrl.u32 %v383, 16
      %v458 = vrot.slane %v456, 7
      %v459 = vshll.u32 %v383, 16
      %v461 = vor.u32 %v458, %v459
      %v462 = vsel %vm412, %v454, %v461
      %v463 = vrot.slane %v458, 4
      %v465 = vshrl.u32 %v384, 16
      %v467 = vrot.slane %v465, 7
      %v468 = vshll.u32 %v384, 16
      %v470 = vor.u32 %v467, %v468
      %v471 = vrot.slane %v467, 4
      %v473 = vshrl.u32 %v385, 16
      %v475 = vrot.slane %v473, 7
      %v476 = vshll.u32 %v385, 16
      %v478 = vor.u32 %v475, %v476
      %v479 = vsel %vm412, %v471, %v478
      %v480 = vrot.slane %v475, 4
      %v482 = vshrl.u32 %v386, 16
      %v484 = vrot.slane %v482, 7
      %v485 = vshll.u32 %v386, 16
      %v487 = vor.u32 %v484, %v485
      %v488 = vrot.slane %v484, 4
      %v490 = vshrl.u32 %v387, 16
      %v492 = vrot.slane %v490, 7
      %v493 = vshll.u32 %v387, 16
      %v495 = vor.u32 %v492, %v493
      %v496 = vsel %vm412, %v488, %v495
      %v497 = vrot.slane %v492, 4
      %v499 = vshrl.u32 %v388, 16
      %v501 = vrot.slane %v499, 7
      %v502 = vshll.u32 %v388, 16
      %v504 = vor.u32 %v501, %v502
      %v505 = vrot.slane %v501, 4
      %v507 = vshrl.u32 %v389, 16
      %v509 = vrot.slane %v507, 7
      %v510 = vshll.u32 %v389, 16
      %v512 = vor.u32 %v509, %v510
      %v513 = vsel %vm412, %v505, %v512
      %v514 = vrot.slane %v509, 4
      %v516 = vshrl.u32 %v390, 16
      %v518 = vrot.slane %v516, 7
      %v519 = vshll.u32 %v390, 16
      %v521 = vor.u32 %v518, %v519
      %v522 = vrot.slane %v518, 4
      %v524 = vshrl.u32 %v391, 16
      %v526 = vrot.slane %v524, 7
      %v527 = vshll.u32 %v391, 16
      %v529 = vor.u32 %v526, %v527
      %v530 = vsel %vm412, %v522, %v529
      %v531 = vrot.slane %v526, 4
      %v533 = vshrl.u32 %v392, 16
      %v535 = vrot.slane %v533, 7
      %v536 = vshll.u32 %v392, 16
      %v538 = vor.u32 %v535, %v536
      %v539 = vrot.slane %v535, 4
      %v541 = vshrl.u32 %v393, 16
      %v543 = vrot.slane %v541, 7
      %v544 = vshll.u32 %v393, 16
      %v546 = vor.u32 %v543, %v544
      %v547 = vsel %vm412, %v539, %v546
      %v548 = vrot.slane %v543, 4
      %v550 = vshrl.u32 %v394, 16
      %v552 = vrot.slane %v550, 7
      %v553 = vshll.u32 %v394, 16
      %v555 = vor.u32 %v552, %v553
      %v556 = vrot.slane %v552, 4
      %v558 = vshrl.u32 %v395, 16
      %v560 = vrot.slane %v558, 7
      %v561 = vshll.u32 %v395, 16
      %v563 = vor.u32 %v560, %v561
      %v564 = vsel %vm412, %v556, %v563
      %v565 = vrot.slane %v560, 4
      %v567 = vshrl.u32 %v396, 16
      %v569 = vrot.slane %v567, 7
      %v570 = vshll.u32 %v396, 16
      %v572 = vor.u32 %v569, %v570
      %v573 = vrot.slane %v569, 4
      %v575 = vshrl.u32 %v397, 16
      %v577 = vrot.slane %v575, 7
      %v578 = vshll.u32 %v397, 16
      %v580 = vor.u32 %v577, %v578
      %v581 = vsel %vm412, %v573, %v580
      %v582 = vrot.slane %v577, 4
      %v584 = vshrl.u32 %v398, 16
      %v586 = vrot.slane %v584, 7
      %v587 = vshll.u32 %v398, 16
      %v589 = vor.u32 %v586, %v587
      %v590 = vrot.slane %v586, 4
      %v592 = vshrl.u32 %v399, 16
      %v594 = vrot.slane %v592, 7
      %v595 = vshll.u32 %v399, 16
      %v597 = vor.u32 %v594, %v595
      %v598 = vsel %vm412, %v590, %v597
      %v599 = vrot.slane %v594, 4
      %v601 = vshrl.u32 %v400, 16
      %v603 = vrot.slane %v601, 7
      %v604 = vshll.u32 %v400, 16
      %v606 = vor.u32 %v603, %v604
      %v607 = vrot.slane %v603, 4
      %v609 = vshrl.u32 %v401, 16
      %v611 = vrot.slane %v609, 7
      %v612 = vshll.u32 %v401, 16
      %v614 = vor.u32 %v611, %v612
      %v615 = vsel %vm412, %v607, %v614
      %v616 = vrot.slane %v611, 4
      %v618 = vshrl.u32 %v402, 16
      %v620 = vrot.slane %v618, 7
      %v621 = vshll.u32 %v402, 16
      %v623 = vor.u32 %v620, %v621
      %v624 = vrot.slane %v620, 4
      %v626 = vshrl.u32 %v403, 16
      %v628 = vrot.slane %v626, 7
      %v629 = vshll.u32 %v403, 16
      %v631 = vor.u32 %v628, %v629
      %v632 = vsel %vm412, %v624, %v631
      %v633 = vrot.slane %v628, 4
      %v635 = vshrl.u32 %v404, 16
      %v637 = vrot.slane %v635, 7
      %v638 = vshll.u32 %v404, 16
      %v640 = vor.u32 %v637, %v638
      %v641 = vrot.slane %v637, 4
      %v643 = vshrl.u32 %v405, 16
      %v645 = vrot.slane %v643, 7
      %v646 = vshll.u32 %v405, 16
      %v648 = vor.u32 %v645, %v646
      %v649 = vsel %vm412, %v641, %v648
      %v650 = vrot.slane %v645, 4
      %v652 = vshrl.u32 %v406, 16
      %v654 = vrot.slane %v652, 7
      %v655 = vshll.u32 %v406, 16
      %v657 = vor.u32 %v654, %v655
      %v658 = vrot.slane %v654, 4
      %v660 = vshrl.u32 %v407, 16
      %v662 = vrot.slane %v660, 7
      %v663 = vshll.u32 %v407, 16
      %v665 = vor.u32 %v662, %v663
      %v666 = vsel %vm412, %v658, %v665
      %v667 = vrot.slane %v662, 4
      %v669 = vshrl.u32 %v408, 16
      %v671 = vrot.slane %v669, 7
      %v672 = vshll.u32 %v408, 16
      %v674 = vor.u32 %v671, %v672
      %v675 = vrot.slane %v671, 4
      %v677 = vshrl.u32 %v409, 16
      %v679 = vrot.slane %v677, 7
      %v680 = vshll.u32 %v409, 16
      %v682 = vor.u32 %v679, %v680
      %v683 = vsel %vm412, %v675, %v682
      %v684 = vrot.slane %v679, 4
      %s733 = scalar_lea.vmem [#allocation2], 12
      %vm734 = vcmask 27648
      %vm735 = vsmask.f32 7938
      %vm736 = vmand %vm734, %vm735
      %v737 = vld [vmem:[%s733] sm:$0xf]
      %v738 = vsel %vm736, %v419, %v737
      %739 = vst [vmem:[%s733] sm:$0xf] %v738
      %740 = vst.msk [vmem:[%s733 + $0x4] sm:$0xf] %vm226, %v428
      %vm741 = vcmask 24576
      %vm742 = vmand %vm741, %vm410
      %v743 = vld [vmem:[%s733 + $0x8] sm:$0x1]
      %v744 = vsel %vm742, %v429, %v743
      %745 = vst [vmem:[%s733 + $0x8] sm:$0x1] %v744
      %v746 = vld [vmem:[%s733 + $0xc] sm:$0xf]
      %v747 = vsel %vm736, %v436, %v746
      %748 = vst [vmem:[%s733 + $0xc] sm:$0xf] %v747
      %749 = vst.msk [vmem:[%s733 + $0x10] sm:$0xf] %vm226, %v445
      %v750 = vld [vmem:[%s733 + $0x14] sm:$0x1]
      %v751 = vsel %vm742, %v446, %v750
      %752 = vst [vmem:[%s733 + $0x14] sm:$0x1] %v751
      %v753 = vld [vmem:[%s733 + $0x18] sm:$0xf]
      %v754 = vsel %vm736, %v453, %v753
      %755 = vst [vmem:[%s733 + $0x18] sm:$0xf] %v754
      %756 = vst.msk [vmem:[%s733 + $0x1c] sm:$0xf] %vm226, %v462
      %v757 = vld [vmem:[%s733 + $0x20] sm:$0x1]
      %v758 = vsel %vm742, %v463, %v757
      %759 = vst [vmem:[%s733 + $0x20] sm:$0x1] %v758
      %v760 = vld [vmem:[%s733 + $0x24] sm:$0xf]
      %v761 = vsel %vm736, %v470, %v760
      %762 = vst [vmem:[%s733 + $0x24] sm:$0xf] %v761
      %763 = vst.msk [vmem:[%s733 + $0x28] sm:$0xf] %vm226, %v479
      %v764 = vld [vmem:[%s733 + $0x2c] sm:$0x1]
      %v765 = vsel %vm742, %v480, %v764
      %766 = vst [vmem:[%s733 + $0x2c] sm:$0x1] %v765
      %v767 = vld [vmem:[%s733 + $0x30] sm:$0xf]
      %v768 = vsel %vm736, %v487, %v767
      %769 = vst [vmem:[%s733 + $0x30] sm:$0xf] %v768
      %770 = vst.msk [vmem:[%s733 + $0x34] sm:$0xf] %vm226, %v496
      %v771 = vld [vmem:[%s733 + $0x38] sm:$0x1]
      %v772 = vsel %vm742, %v497, %v771
      %773 = vst [vmem:[%s733 + $0x38] sm:$0x1] %v772
      %v774 = vld [vmem:[%s733 + $0x3c] sm:$0xf]
      %v775 = vsel %vm736, %v504, %v774
      %776 = vst [vmem:[%s733 + $0x3c] sm:$0xf] %v775
      %777 = vst.msk [vmem:[%s733 + $0x40] sm:$0xf] %vm226, %v513
      %v778 = vld [vmem:[%s733 + $0x44] sm:$0x1]
      %v779 = vsel %vm742, %v514, %v778
      %780 = vst [vmem:[%s733 + $0x44] sm:$0x1] %v779
      %v781 = vld [vmem:[%s733 + $0x48] sm:$0xf]
      %v782 = vsel %vm736, %v521, %v781
      %783 = vst [vmem:[%s733 + $0x48] sm:$0xf] %v782
      %784 = vst.msk [vmem:[%s733 + $0x4c] sm:$0xf] %vm226, %v530
      %v785 = vld [vmem:[%s733 + $0x50] sm:$0x1]
      %v786 = vsel %vm742, %v531, %v785
      %787 = vst [vmem:[%s733 + $0x50] sm:$0x1] %v786
      %v788 = vld [vmem:[%s733 + $0x54] sm:$0xf]
      %v789 = vsel %vm736, %v538, %v788
      %790 = vst [vmem:[%s733 + $0x54] sm:$0xf] %v789
      %791 = vst.msk [vmem:[%s733 + $0x58] sm:$0xf] %vm226, %v547
      %v792 = vld [vmem:[%s733 + $0x5c] sm:$0x1]
      %v793 = vsel %vm742, %v548, %v792
      %794 = vst [vmem:[%s733 + $0x5c] sm:$0x1] %v793
      %v795 = vld [vmem:[%s733 + $0x60] sm:$0xf]
      %v796 = vsel %vm736, %v555, %v795
      %797 = vst [vmem:[%s733 + $0x60] sm:$0xf] %v796
      %798 = vst.msk [vmem:[%s733 + $0x64] sm:$0xf] %vm226, %v564
      %v799 = vld [vmem:[%s733 + $0x68] sm:$0x1]
      %v800 = vsel %vm742, %v565, %v799
      %801 = vst [vmem:[%s733 + $0x68] sm:$0x1] %v800
      %v802 = vld [vmem:[%s733 + $0x6c] sm:$0xf]
      %v803 = vsel %vm736, %v572, %v802
      %804 = vst [vmem:[%s733 + $0x6c] sm:$0xf] %v803
      %805 = vst.msk [vmem:[%s733 + $0x70] sm:$0xf] %vm226, %v581
      %v806 = vld [vmem:[%s733 + $0x74] sm:$0x1]
      %v807 = vsel %vm742, %v582, %v806
      %808 = vst [vmem:[%s733 + $0x74] sm:$0x1] %v807
      %v809 = vld [vmem:[%s733 + $0x78] sm:$0xf]
      %v810 = vsel %vm736, %v589, %v809
      %811 = vst [vmem:[%s733 + $0x78] sm:$0xf] %v810
      %812 = vst.msk [vmem:[%s733 + $0x7c] sm:$0xf] %vm226, %v598
      %v813 = vld [vmem:[%s733 + $0x80] sm:$0x1]
      %v814 = vsel %vm742, %v599, %v813
      %815 = vst [vmem:[%s733 + $0x80] sm:$0x1] %v814
      %v816 = vld [vmem:[%s733 + $0x84] sm:$0xf]
      %v817 = vsel %vm736, %v606, %v816
      %818 = vst [vmem:[%s733 + $0x84] sm:$0xf] %v817
      %819 = vst.msk [vmem:[%s733 + $0x88] sm:$0xf] %vm226, %v615
      %v820 = vld [vmem:[%s733 + $0x8c] sm:$0x1]
      %v821 = vsel %vm742, %v616, %v820
      %822 = vst [vmem:[%s733 + $0x8c] sm:$0x1] %v821
      %v823 = vld [vmem:[%s733 + $0x90] sm:$0xf]
      %v824 = vsel %vm736, %v623, %v823
      %825 = vst [vmem:[%s733 + $0x90] sm:$0xf] %v824
      %826 = vst.msk [vmem:[%s733 + $0x94] sm:$0xf] %vm226, %v632
      %v827 = vld [vmem:[%s733 + $0x98] sm:$0x1]
      %v828 = vsel %vm742, %v633, %v827
      %829 = vst [vmem:[%s733 + $0x98] sm:$0x1] %v828
      %v830 = vld [vmem:[%s733 + $0x9c] sm:$0xf]
      %v831 = vsel %vm736, %v640, %v830
      %832 = vst [vmem:[%s733 + $0x9c] sm:$0xf] %v831
      %833 = vst.msk [vmem:[%s733 + $0xa0] sm:$0xf] %vm226, %v649
      %v834 = vld [vmem:[%s733 + $0xa4] sm:$0x1]
      %v835 = vsel %vm742, %v650, %v834
      %836 = vst [vmem:[%s733 + $0xa4] sm:$0x1] %v835
      %v837 = vld [vmem:[%s733 + $0xa8] sm:$0xf]
      %v838 = vsel %vm736, %v657, %v837
      %839 = vst [vmem:[%s733 + $0xa8] sm:$0xf] %v838
      %840 = vst.msk [vmem:[%s733 + $0xac] sm:$0xf] %vm226, %v666
      %v841 = vld [vmem:[%s733 + $0xb0] sm:$0x1]
      %v842 = vsel %vm742, %v667, %v841
      %843 = vst [vmem:[%s733 + $0xb0] sm:$0x1] %v842
      %v844 = vld [vmem:[%s733 + $0xb4] sm:$0xf]
      %v845 = vsel %vm736, %v674, %v844
      %846 = vst [vmem:[%s733 + $0xb4] sm:$0xf] %v845
      %847 = vst.msk [vmem:[%s733 + $0xb8] sm:$0xf] %vm226, %v683
      %v848 = vld [vmem:[%s733 + $0xbc] sm:$0x1]
      %v849 = vsel %vm742, %v684, %v848
      %850 = vst [vmem:[%s733 + $0xbc] sm:$0x1] %v849
      %v851 = vld [vmem:[#allocation2] sm:$0xf]
      %v852 = vld [vmem:[#allocation2 + $0x4] sm:$0xf]
      %v853 = vld [vmem:[#allocation2 + $0xc] sm:$0xf]
      %v854 = vld [vmem:[#allocation2 + $0x10] sm:$0xf]
      %v855 = vld [vmem:[#allocation2 + $0x18] sm:$0xf]
      %v856 = vld [vmem:[#allocation2 + $0x1c] sm:$0xf]
      %v857 = vld [vmem:[#allocation2 + $0x24] sm:$0xf]
      %v858 = vld [vmem:[#allocation2 + $0x28] sm:$0xf]
      %v859 = vld [vmem:[#allocation2 + $0x30] sm:$0xf]
      %v860 = vld [vmem:[#allocation2 + $0x34] sm:$0xf]
      %v861 = vld [vmem:[#allocation2 + $0x3c] sm:$0xf]
      %v862 = vld [vmem:[#allocation2 + $0x40] sm:$0xf]
      %v863 = vld [vmem:[#allocation2 + $0x48] sm:$0xf]
      %v864 = vld [vmem:[#allocation2 + $0x4c] sm:$0xf]
      %v865 = vld [vmem:[#allocation2 + $0x54] sm:$0xf]
      %v866 = vld [vmem:[#allocation2 + $0x58] sm:$0xf]
      %v867 = vld [vmem:[#allocation2 + $0x60] sm:$0xf]
      %v868 = vld [vmem:[#allocation2 + $0x64] sm:$0xf]
      %v869 = vld [vmem:[#allocation2 + $0x6c] sm:$0xf]
      %v870 = vld [vmem:[#allocation2 + $0x70] sm:$0xf]
      %v871 = vld [vmem:[#allocation2 + $0x78] sm:$0xf]
      %v872 = vld [vmem:[#allocation2 + $0x7c] sm:$0xf]
      %v873 = vld [vmem:[#allocation2 + $0x84] sm:$0xf]
      %v874 = vld [vmem:[#allocation2 + $0x88] sm:$0xf]
      %v875 = vld [vmem:[#allocation2 + $0x90] sm:$0xf]
      %v876 = vld [vmem:[#allocation2 + $0x94] sm:$0xf]
      %v877 = vld [vmem:[#allocation2 + $0x9c] sm:$0xf]
      %v878 = vld [vmem:[#allocation2 + $0xa0] sm:$0xf]
      %v879 = vld [vmem:[#allocation2 + $0xa8] sm:$0xf]
      %v880 = vld [vmem:[#allocation2 + $0xac] sm:$0xf]
      %v881 = vld [vmem:[#allocation2 + $0xb4] sm:$0xf]
      %v882 = vld [vmem:[#allocation2 + $0xb8] sm:$0xf]
      %v883 = vld [vmem:[#allocation2 + $0x8] sm:$0x1]
      %v884 = vld [vmem:[#allocation2 + $0x14] sm:$0x1]
      %v885 = vld [vmem:[#allocation2 + $0x20] sm:$0x1]
      %v886 = vld [vmem:[#allocation2 + $0x2c] sm:$0x1]
      %v887 = vld [vmem:[#allocation2 + $0x38] sm:$0x1]
      %v888 = vld [vmem:[#allocation2 + $0x44] sm:$0x1]
      %v889 = vld [vmem:[#allocation2 + $0x50] sm:$0x1]
      %v890 = vld [vmem:[#allocation2 + $0x5c] sm:$0x1]
      %v891 = vld [vmem:[#allocation2 + $0x68] sm:$0x1]
      %v892 = vld [vmem:[#allocation2 + $0x74] sm:$0x1]
      %v893 = vld [vmem:[#allocation2 + $0x80] sm:$0x1]
      %v894 = vld [vmem:[#allocation2 + $0x8c] sm:$0x1]
      %v895 = vld [vmem:[#allocation2 + $0x98] sm:$0x1]
      %v896 = vld [vmem:[#allocation2 + $0xa4] sm:$0x1]
      %v897 = vld [vmem:[#allocation2 + $0xb0] sm:$0x1]
      %v898 = vld [vmem:[#allocation2 + $0xbc] sm:$0x1]
      %v899 = vld [vmem:[#allocation2] sm:$0xe]
      %v900 = vld [vmem:[#allocation2 + $0xc] sm:$0xe]
      %v901 = vld [vmem:[#allocation2 + $0x18] sm:$0xe]
      %v902 = vld [vmem:[#allocation2 + $0x24] sm:$0xe]
      %v903 = vld [vmem:[#allocation2 + $0x30] sm:$0xe]
      %v904 = vld [vmem:[#allocation2 + $0x3c] sm:$0xe]
      %v905 = vld [vmem:[#allocation2 + $0x48] sm:$0xe]
      %v906 = vld [vmem:[#allocation2 + $0x54] sm:$0xe]
      %v907 = vld [vmem:[#allocation2 + $0x60] sm:$0xe]
      %v908 = vld [vmem:[#allocation2 + $0x6c] sm:$0xe]
      %v909 = vld [vmem:[#allocation2 + $0x78] sm:$0xe]
      %v910 = vld [vmem:[#allocation2 + $0x84] sm:$0xe]
      %v911 = vld [vmem:[#allocation2 + $0x90] sm:$0xe]
      %v912 = vld [vmem:[#allocation2 + $0x9c] sm:$0xe]
      %v913 = vld [vmem:[#allocation2 + $0xa8] sm:$0xe]
      %v914 = vld [vmem:[#allocation2 + $0xb4] sm:$0xe]
      %v915 = vld [vmem:[%s733] sm:$0xf]
      %v916 = vld [vmem:[%s733 + $0x4] sm:$0xf]
      %v917 = vld [vmem:[%s733 + $0xc] sm:$0xf]
      %v918 = vld [vmem:[%s733 + $0x10] sm:$0xf]
      %v919 = vld [vmem:[%s733 + $0x18] sm:$0xf]
      %v920 = vld [vmem:[%s733 + $0x1c] sm:$0xf]
      %v921 = vld [vmem:[%s733 + $0x24] sm:$0xf]
      %v922 = vld [vmem:[%s733 + $0x28] sm:$0xf]
      %v923 = vld [vmem:[%s733 + $0x30] sm:$0xf]
      %v924 = vld [vmem:[%s733 + $0x34] sm:$0xf]
      %v925 = vld [vmem:[%s733 + $0x3c] sm:$0xf]
      %v926 = vld [vmem:[%s733 + $0x40] sm:$0xf]
      %v927 = vld [vmem:[%s733 + $0x48] sm:$0xf]
      %v928 = vld [vmem:[%s733 + $0x4c] sm:$0xf]
      %v929 = vld [vmem:[%s733 + $0x54] sm:$0xf]
      %v930 = vld [vmem:[%s733 + $0x58] sm:$0xf]
      %v931 = vld [vmem:[%s733 + $0x60] sm:$0xf]
      %v932 = vld [vmem:[%s733 + $0x64] sm:$0xf]
      %v933 = vld [vmem:[%s733 + $0x6c] sm:$0xf]
      %v934 = vld [vmem:[%s733 + $0x70] sm:$0xf]
      %v935 = vld [vmem:[%s733 + $0x78] sm:$0xf]
      %v936 = vld [vmem:[%s733 + $0x7c] sm:$0xf]
      %v937 = vld [vmem:[%s733 + $0x84] sm:$0xf]
      %v938 = vld [vmem:[%s733 + $0x88] sm:$0xf]
      %v939 = vld [vmem:[%s733 + $0x90] sm:$0xf]
      %v940 = vld [vmem:[%s733 + $0x94] sm:$0xf]
      %v941 = vld [vmem:[%s733 + $0x9c] sm:$0xf]
      %v942 = vld [vmem:[%s733 + $0xa0] sm:$0xf]
      %v943 = vld [vmem:[%s733 + $0xa8] sm:$0xf]
      %v944 = vld [vmem:[%s733 + $0xac] sm:$0xf]
      %v945 = vld [vmem:[%s733 + $0xb4] sm:$0xf]
      %v946 = vld [vmem:[%s733 + $0xb8] sm:$0xf]
      %v947 = vld [vmem:[%s733 + $0x8] sm:$0x1]
      %v948 = vld [vmem:[%s733 + $0x14] sm:$0x1]
      %v949 = vld [vmem:[%s733 + $0x20] sm:$0x1]
      %v950 = vld [vmem:[%s733 + $0x2c] sm:$0x1]
      %v951 = vld [vmem:[%s733 + $0x38] sm:$0x1]
      %v952 = vld [vmem:[%s733 + $0x44] sm:$0x1]
      %v953 = vld [vmem:[%s733 + $0x50] sm:$0x1]
      %v954 = vld [vmem:[%s733 + $0x5c] sm:$0x1]
      %v955 = vld [vmem:[%s733 + $0x68] sm:$0x1]
      %v956 = vld [vmem:[%s733 + $0x74] sm:$0x1]
      %v957 = vld [vmem:[%s733 + $0x80] sm:$0x1]
      %v958 = vld [vmem:[%s733 + $0x8c] sm:$0x1]
      %v959 = vld [vmem:[%s733 + $0x98] sm:$0x1]
      %v960 = vld [vmem:[%s733 + $0xa4] sm:$0x1]
      %v961 = vld [vmem:[%s733 + $0xb0] sm:$0x1]
      %v962 = vld [vmem:[%s733 + $0xbc] sm:$0x1]
      %v963 = vld [vmem:[%s733] sm:$0xe]
      %v964 = vld [vmem:[%s733 + $0xc] sm:$0xe]
      %v965 = vld [vmem:[%s733 + $0x18] sm:$0xe]
      %v966 = vld [vmem:[%s733 + $0x24] sm:$0xe]
      %v967 = vld [vmem:[%s733 + $0x30] sm:$0xe]
      %v968 = vld [vmem:[%s733 + $0x3c] sm:$0xe]
      %v969 = vld [vmem:[%s733 + $0x48] sm:$0xe]
      %v970 = vld [vmem:[%s733 + $0x54] sm:$0xe]
      %v971 = vld [vmem:[%s733 + $0x60] sm:$0xe]
      %v972 = vld [vmem:[%s733 + $0x6c] sm:$0xe]
      %v973 = vld [vmem:[%s733 + $0x78] sm:$0xe]
      %v974 = vld [vmem:[%s733 + $0x84] sm:$0xe]
      %v975 = vld [vmem:[%s733 + $0x90] sm:$0xe]
      %v976 = vld [vmem:[%s733 + $0x9c] sm:$0xe]
      %v977 = vld [vmem:[%s733 + $0xa8] sm:$0xe]
      %v978 = vld [vmem:[%s733 + $0xb4] sm:$0xe]
      %s979 = scalar_lea.vmem [#allocation2], 24
      %v980 = vld [vmem:[%s979] sm:$0xf]
      %v981 = vld [vmem:[%s979 + $0x4] sm:$0xf]
      %v982 = vld [vmem:[%s979 + $0xc] sm:$0xf]
      %v983 = vld [vmem:[%s979 + $0x10] sm:$0xf]
      %v984 = vld [vmem:[%s979 + $0x18] sm:$0xf]
      %v985 = vld [vmem:[%s979 + $0x1c] sm:$0xf]
      %v986 = vld [vmem:[%s979 + $0x24] sm:$0xf]
      %v987 = vld [vmem:[%s979 + $0x28] sm:$0xf]
      %v988 = vld [vmem:[%s979 + $0x30] sm:$0xf]
      %v989 = vld [vmem:[%s979 + $0x34] sm:$0xf]
      %v990 = vld [vmem:[%s979 + $0x3c] sm:$0xf]
      %v991 = vld [vmem:[%s979 + $0x40] sm:$0xf]
      %v992 = vld [vmem:[%s979 + $0x48] sm:$0xf]
      %v993 = vld [vmem:[%s979 + $0x4c] sm:$0xf]
      %v994 = vld [vmem:[%s979 + $0x54] sm:$0xf]
      %v995 = vld [vmem:[%s979 + $0x58] sm:$0xf]
      %v996 = vld [vmem:[%s979 + $0x60] sm:$0xf]
      %v997 = vld [vmem:[%s979 + $0x64] sm:$0xf]
      %v998 = vld [vmem:[%s979 + $0x6c] sm:$0xf]
      %v999 = vld [vmem:[%s979 + $0x70] sm:$0xf]
      %v1000 = vld [vmem:[%s979 + $0x78] sm:$0xf]
      %v1001 = vld [vmem:[%s979 + $0x7c] sm:$0xf]
      %v1002 = vld [vmem:[%s979 + $0x84] sm:$0xf]
      %v1003 = vld [vmem:[%s979 + $0x88] sm:$0xf]
      %v1004 = vld [vmem:[%s979 + $0x90] sm:$0xf]
      %v1005 = vld [vmem:[%s979 + $0x94] sm:$0xf]
      %v1006 = vld [vmem:[%s979 + $0x9c] sm:$0xf]
      %v1007 = vld [vmem:[%s979 + $0xa0] sm:$0xf]
      %v1008 = vld [vmem:[%s979 + $0xa8] sm:$0xf]
      %v1009 = vld [vmem:[%s979 + $0xac] sm:$0xf]
      %v1010 = vld [vmem:[%s979 + $0xb4] sm:$0xf]
      %v1011 = vld [vmem:[%s979 + $0xb8] sm:$0xf]
      %v1012 = vld [vmem:[%s979 + $0x8] sm:$0x1]
      %v1013 = vld [vmem:[%s979 + $0x14] sm:$0x1]
      %v1014 = vld [vmem:[%s979 + $0x20] sm:$0x1]
      %v1015 = vld [vmem:[%s979 + $0x2c] sm:$0x1]
      %v1016 = vld [vmem:[%s979 + $0x38] sm:$0x1]
      %v1017 = vld [vmem:[%s979 + $0x44] sm:$0x1]
      %v1018 = vld [vmem:[%s979 + $0x50] sm:$0x1]
      %v1019 = vld [vmem:[%s979 + $0x5c] sm:$0x1]
      %v1020 = vld [vmem:[%s979 + $0x68] sm:$0x1]
      %v1021 = vld [vmem:[%s979 + $0x74] sm:$0x1]
      %v1022 = vld [vmem:[%s979 + $0x80] sm:$0x1]
      %v1023 = vld [vmem:[%s979 + $0x8c] sm:$0x1]
      %v1024 = vld [vmem:[%s979 + $0x98] sm:$0x1]
      %v1025 = vld [vmem:[%s979 + $0xa4] sm:$0x1]
      %v1026 = vld [vmem:[%s979 + $0xb0] sm:$0x1]
      %v1027 = vld [vmem:[%s979 + $0xbc] sm:$0x1]
      %v1028 = vld [vmem:[%s979] sm:$0xe]
      %v1029 = vld [vmem:[%s979 + $0xc] sm:$0xe]
      %v1030 = vld [vmem:[%s979 + $0x18] sm:$0xe]
      %v1031 = vld [vmem:[%s979 + $0x24] sm:$0xe]
      %v1032 = vld [vmem:[%s979 + $0x30] sm:$0xe]
      %v1033 = vld [vmem:[%s979 + $0x3c] sm:$0xe]
      %v1034 = vld [vmem:[%s979 + $0x48] sm:$0xe]
      %v1035 = vld [vmem:[%s979 + $0x54] sm:$0xe]
      %v1036 = vld [vmem:[%s979 + $0x60] sm:$0xe]
      %v1037 = vld [vmem:[%s979 + $0x6c] sm:$0xe]
      %v1038 = vld [vmem:[%s979 + $0x78] sm:$0xe]
      %v1039 = vld [vmem:[%s979 + $0x84] sm:$0xe]
      %v1040 = vld [vmem:[%s979 + $0x90] sm:$0xe]
      %v1041 = vld [vmem:[%s979 + $0x9c] sm:$0xe]
      %v1042 = vld [vmem:[%s979 + $0xa8] sm:$0xe]
      %v1043 = vld [vmem:[%s979 + $0xb4] sm:$0xe]
      %v1076 = vunpack.c.l.b16 %v851
      %v1077 = vunpack.c.l.b16 %v852
      %v1078 = vunpack.c.l.b16 %v853
      %v1079 = vunpack.c.l.b16 %v854
      %v1080 = vunpack.c.l.b16 %v855
      %v1081 = vunpack.c.l.b16 %v856
      %v1082 = vunpack.c.l.b16 %v857
      %v1083 = vunpack.c.l.b16 %v858
      %v1084 = vunpack.c.l.b16 %v859
      %v1085 = vunpack.c.l.b16 %v860
      %v1086 = vunpack.c.l.b16 %v861
      %v1087 = vunpack.c.l.b16 %v862
      %v1088 = vunpack.c.l.b16 %v863
      %v1089 = vunpack.c.l.b16 %v864
      %v1090 = vunpack.c.l.b16 %v865
      %v1091 = vunpack.c.l.b16 %v866
      %v1092 = vunpack.c.l.b16 %v867
      %v1093 = vunpack.c.l.b16 %v868
      %v1094 = vunpack.c.l.b16 %v869
      %v1095 = vunpack.c.l.b16 %v870
      %v1096 = vunpack.c.l.b16 %v871
      %v1097 = vunpack.c.l.b16 %v872
      %v1098 = vunpack.c.l.b16 %v873
      %v1099 = vunpack.c.l.b16 %v874
      %v1100 = vunpack.c.l.b16 %v875
      %v1101 = vunpack.c.l.b16 %v876
      %v1102 = vunpack.c.l.b16 %v877
      %v1103 = vunpack.c.l.b16 %v878
      %v1104 = vunpack.c.l.b16 %v879
      %v1105 = vunpack.c.l.b16 %v880
      %v1106 = vunpack.c.l.b16 %v881
      %v1107 = vunpack.c.l.b16 %v882
      %v1108 = vpack.c.b16 %v1077, %v1076
      %v1109 = vpack.c.b16 %v1079, %v1078
      %v1110 = vpack.c.b16 %v1081, %v1080
      %v1111 = vpack.c.b16 %v1083, %v1082
      %v1112 = vpack.c.b16 %v1085, %v1084
      %v1113 = vpack.c.b16 %v1087, %v1086
      %v1114 = vpack.c.b16 %v1089, %v1088
      %v1115 = vpack.c.b16 %v1091, %v1090
      %v1116 = vpack.c.b16 %v1093, %v1092
      %v1117 = vpack.c.b16 %v1095, %v1094
      %v1118 = vpack.c.b16 %v1097, %v1096
      %v1119 = vpack.c.b16 %v1099, %v1098
      %v1120 = vpack.c.b16 %v1101, %v1100
      %v1121 = vpack.c.b16 %v1103, %v1102
      %v1122 = vpack.c.b16 %v1105, %v1104
      %v1123 = vpack.c.b16 %v1107, %v1106
      %v1140 = vunpack.c.l.b16 %v883
      %v1141 = vunpack.c.l.b16 %v884
      %v1142 = vunpack.c.l.b16 %v885
      %v1143 = vunpack.c.l.b16 %v886
      %v1144 = vunpack.c.l.b16 %v887
      %v1145 = vunpack.c.l.b16 %v888
      %v1146 = vunpack.c.l.b16 %v889
      %v1147 = vunpack.c.l.b16 %v890
      %v1148 = vunpack.c.l.b16 %v891
      %v1149 = vunpack.c.l.b16 %v892
      %v1150 = vunpack.c.l.b16 %v893
      %v1151 = vunpack.c.l.b16 %v894
      %v1152 = vunpack.c.l.b16 %v895
      %v1153 = vunpack.c.l.b16 %v896
      %v1154 = vunpack.c.l.b16 %v897
      %v1155 = vunpack.c.l.b16 %v898
      %v1156 = vpack.c.b16 %v1140, %v1140
      %v1157 = vpack.c.b16 %v1141, %v1141
      %v1158 = vpack.c.b16 %v1142, %v1142
      %v1159 = vpack.c.b16 %v1143, %v1143
      %v1160 = vpack.c.b16 %v1144, %v1144
      %v1161 = vpack.c.b16 %v1145, %v1145
      %v1162 = vpack.c.b16 %v1146, %v1146
      %v1163 = vpack.c.b16 %v1147, %v1147
      %v1164 = vpack.c.b16 %v1148, %v1148
      %v1165 = vpack.c.b16 %v1149, %v1149
      %v1166 = vpack.c.b16 %v1150, %v1150
      %v1167 = vpack.c.b16 %v1151, %v1151
      %v1168 = vpack.c.b16 %v1152, %v1152
      %v1169 = vpack.c.b16 %v1153, %v1153
      %v1170 = vpack.c.b16 %v1154, %v1154
      %v1171 = vpack.c.b16 %v1155, %v1155
      %vm1172 = vsmask.f32 7424
      %v1174 = vshrl.u32 %v1108, 16
      %v1176 = vshll.u32 %v1108, 16
      %v1178 = vrot.slane %v1176, 1
      %v1179 = vor.u32 %v1174, %v1178
      %v1181 = vshll.u32 %v1156, 16
      %v1183 = vrot.slane %v1181, 1
      %v1184 = vsel %vm1172, %v1179, %v1183
      %v1186 = vshrl.u32 %v1109, 16
      %v1188 = vshll.u32 %v1109, 16
      %v1190 = vrot.slane %v1188, 1
      %v1191 = vor.u32 %v1186, %v1190
      %v1193 = vshll.u32 %v1157, 16
      %v1195 = vrot.slane %v1193, 1
      %v1196 = vsel %vm1172, %v1191, %v1195
      %v1198 = vshrl.u32 %v1110, 16
      %v1200 = vshll.u32 %v1110, 16
      %v1202 = vrot.slane %v1200, 1
      %v1203 = vor.u32 %v1198, %v1202
      %v1205 = vshll.u32 %v1158, 16
      %v1207 = vrot.slane %v1205, 1
      %v1208 = vsel %vm1172, %v1203, %v1207
      %v1210 = vshrl.u32 %v1111, 16
      %v1212 = vshll.u32 %v1111, 16
      %v1214 = vrot.slane %v1212, 1
      %v1215 = vor.u32 %v1210, %v1214
      %v1217 = vshll.u32 %v1159, 16
      %v1219 = vrot.slane %v1217, 1
      %v1220 = vsel %vm1172, %v1215, %v1219
      %v1222 = vshrl.u32 %v1112, 16
      %v1224 = vshll.u32 %v1112, 16
      %v1226 = vrot.slane %v1224, 1
      %v1227 = vor.u32 %v1222, %v1226
      %v1229 = vshll.u32 %v1160, 16
      %v1231 = vrot.slane %v1229, 1
      %v1232 = vsel %vm1172, %v1227, %v1231
      %v1234 = vshrl.u32 %v1113, 16
      %v1236 = vshll.u32 %v1113, 16
      %v1238 = vrot.slane %v1236, 1
      %v1239 = vor.u32 %v1234, %v1238
      %v1241 = vshll.u32 %v1161, 16
      %v1243 = vrot.slane %v1241, 1
      %v1244 = vsel %vm1172, %v1239, %v1243
      %v1246 = vshrl.u32 %v1114, 16
      %v1248 = vshll.u32 %v1114, 16
      %v1250 = vrot.slane %v1248, 1
      %v1251 = vor.u32 %v1246, %v1250
      %v1253 = vshll.u32 %v1162, 16
      %v1255 = vrot.slane %v1253, 1
      %v1256 = vsel %vm1172, %v1251, %v1255
      %v1258 = vshrl.u32 %v1115, 16
      %v1260 = vshll.u32 %v1115, 16
      %v1262 = vrot.slane %v1260, 1
      %v1263 = vor.u32 %v1258, %v1262
      %v1265 = vshll.u32 %v1163, 16
      %v1267 = vrot.slane %v1265, 1
      %v1268 = vsel %vm1172, %v1263, %v1267
      %v1270 = vshrl.u32 %v1116, 16
      %v1272 = vshll.u32 %v1116, 16
      %v1274 = vrot.slane %v1272, 1
      %v1275 = vor.u32 %v1270, %v1274
      %v1277 = vshll.u32 %v1164, 16
      %v1279 = vrot.slane %v1277, 1
      %v1280 = vsel %vm1172, %v1275, %v1279
      %v1282 = vshrl.u32 %v1117, 16
      %v1284 = vshll.u32 %v1117, 16
      %v1286 = vrot.slane %v1284, 1
      %v1287 = vor.u32 %v1282, %v1286
      %v1289 = vshll.u32 %v1165, 16
      %v1291 = vrot.slane %v1289, 1
      %v1292 = vsel %vm1172, %v1287, %v1291
      %v1294 = vshrl.u32 %v1118, 16
      %v1296 = vshll.u32 %v1118, 16
      %v1298 = vrot.slane %v1296, 1
      %v1299 = vor.u32 %v1294, %v1298
      %v1301 = vshll.u32 %v1166, 16
      %v1303 = vrot.slane %v1301, 1
      %v1304 = vsel %vm1172, %v1299, %v1303
      %v1306 = vshrl.u32 %v1119, 16
      %v1308 = vshll.u32 %v1119, 16
      %v1310 = vrot.slane %v1308, 1
      %v1311 = vor.u32 %v1306, %v1310
      %v1313 = vshll.u32 %v1167, 16
      %v1315 = vrot.slane %v1313, 1
      %v1316 = vsel %vm1172, %v1311, %v1315
      %v1318 = vshrl.u32 %v1120, 16
      %v1320 = vshll.u32 %v1120, 16
      %v1322 = vrot.slane %v1320, 1
      %v1323 = vor.u32 %v1318, %v1322
      %v1325 = vshll.u32 %v1168, 16
      %v1327 = vrot.slane %v1325, 1
      %v1328 = vsel %vm1172, %v1323, %v1327
      %v1330 = vshrl.u32 %v1121, 16
      %v1332 = vshll.u32 %v1121, 16
      %v1334 = vrot.slane %v1332, 1
      %v1335 = vor.u32 %v1330, %v1334
      %v1337 = vshll.u32 %v1169, 16
      %v1339 = vrot.slane %v1337, 1
      %v1340 = vsel %vm1172, %v1335, %v1339
      %v1342 = vshrl.u32 %v1122, 16
      %v1344 = vshll.u32 %v1122, 16
      %v1346 = vrot.slane %v1344, 1
      %v1347 = vor.u32 %v1342, %v1346
      %v1349 = vshll.u32 %v1170, 16
      %v1351 = vrot.slane %v1349, 1
      %v1352 = vsel %vm1172, %v1347, %v1351
      %v1354 = vshrl.u32 %v1123, 16
      %v1356 = vshll.u32 %v1123, 16
      %v1358 = vrot.slane %v1356, 1
      %v1359 = vor.u32 %v1354, %v1358
      %v1361 = vshll.u32 %v1171, 16
      %v1363 = vrot.slane %v1361, 1
      %v1364 = vsel %vm1172, %v1359, %v1363
      %1365 = vrot.lane.b32.xlu0 %v1184, 4
      %v1366 = vpop.permute.xlu0 %1365
      %1367 = vrot.lane.b32.xlu0 %v1196, 4
      %v1368 = vpop.permute.xlu0 %1367
      %1369 = vrot.lane.b32.xlu0 %v1208, 4
      %v1370 = vpop.permute.xlu0 %1369
      %1371 = vrot.lane.b32.xlu0 %v1220, 4
      %v1372 = vpop.permute.xlu0 %1371
      %1373 = vrot.lane.b32.xlu0 %v1232, 4
      %v1374 = vpop.permute.xlu0 %1373
      %1375 = vrot.lane.b32.xlu0 %v1244, 4
      %v1376 = vpop.permute.xlu0 %1375
      %1377 = vrot.lane.b32.xlu0 %v1256, 4
      %v1378 = vpop.permute.xlu0 %1377
      %1379 = vrot.lane.b32.xlu0 %v1268, 4
      %v1380 = vpop.permute.xlu0 %1379
      %1381 = vrot.lane.b32.xlu0 %v1280, 4
      %v1382 = vpop.permute.xlu0 %1381
      %1383 = vrot.lane.b32.xlu0 %v1292, 4
      %v1384 = vpop.permute.xlu0 %1383
      %1385 = vrot.lane.b32.xlu0 %v1304, 4
      %v1386 = vpop.permute.xlu0 %1385
      %1387 = vrot.lane.b32.xlu0 %v1316, 4
      %v1388 = vpop.permute.xlu0 %1387
      %1389 = vrot.lane.b32.xlu0 %v1328, 4
      %v1390 = vpop.permute.xlu0 %1389
      %1391 = vrot.lane.b32.xlu0 %v1340, 4
      %v1392 = vpop.permute.xlu0 %1391
      %1393 = vrot.lane.b32.xlu0 %v1352, 4
      %v1394 = vpop.permute.xlu0 %1393
      %1395 = vrot.lane.b32.xlu0 %v1364, 4
      %v1396 = vpop.permute.xlu0 %1395
      %v1413 = vunpack.c.l.b16 %v899
      %v1414 = vunpack.c.l.b16 %v900
      %v1415 = vunpack.c.l.b16 %v901
      %v1416 = vunpack.c.l.b16 %v902
      %v1417 = vunpack.c.l.b16 %v903
      %v1418 = vunpack.c.l.b16 %v904
      %v1419 = vunpack.c.l.b16 %v905
      %v1420 = vunpack.c.l.b16 %v906
      %v1421 = vunpack.c.l.b16 %v907
      %v1422 = vunpack.c.l.b16 %v908
      %v1423 = vunpack.c.l.b16 %v909
      %v1424 = vunpack.c.l.b16 %v910
      %v1425 = vunpack.c.l.b16 %v911
      %v1426 = vunpack.c.l.b16 %v912
      %v1427 = vunpack.c.l.b16 %v913
      %v1428 = vunpack.c.l.b16 %v914
      %v1429 = vpack.c.b16 %v1077, %v1413
      %v1430 = vpack.c.b16 %v1079, %v1414
      %v1431 = vpack.c.b16 %v1081, %v1415
      %v1432 = vpack.c.b16 %v1083, %v1416
      %v1433 = vpack.c.b16 %v1085, %v1417
      %v1434 = vpack.c.b16 %v1087, %v1418
      %v1435 = vpack.c.b16 %v1089, %v1419
      %v1436 = vpack.c.b16 %v1091, %v1420
      %v1437 = vpack.c.b16 %v1093, %v1421
      %v1438 = vpack.c.b16 %v1095, %v1422
      %v1439 = vpack.c.b16 %v1097, %v1423
      %v1440 = vpack.c.b16 %v1099, %v1424
      %v1441 = vpack.c.b16 %v1101, %v1425
      %v1442 = vpack.c.b16 %v1103, %v1426
      %v1443 = vpack.c.b16 %v1105, %v1427
      %v1444 = vpack.c.b16 %v1107, %v1428
      %vm1445 = vcmask 1046528
      %v1446 = vrot.slane %v1429, 1
      %v1447 = vrot.slane %v1156, 1
      %v1448 = vsel %vm1445, %v1446, %v1447
      %v1449 = vrot.slane %v1430, 1
      %v1450 = vrot.slane %v1157, 1
      %v1451 = vsel %vm1445, %v1449, %v1450
      %v1452 = vrot.slane %v1431, 1
      %v1453 = vrot.slane %v1158, 1
      %v1454 = vsel %vm1445, %v1452, %v1453
      %v1455 = vrot.slane %v1432, 1
      %v1456 = vrot.slane %v1159, 1
      %v1457 = vsel %vm1445, %v1455, %v1456
      %v1458 = vrot.slane %v1433, 1
      %v1459 = vrot.slane %v1160, 1
      %v1460 = vsel %vm1445, %v1458, %v1459
      %v1461 = vrot.slane %v1434, 1
      %v1462 = vrot.slane %v1161, 1
      %v1463 = vsel %vm1445, %v1461, %v1462
      %v1464 = vrot.slane %v1435, 1
      %v1465 = vrot.slane %v1162, 1
      %v1466 = vsel %vm1445, %v1464, %v1465
      %v1467 = vrot.slane %v1436, 1
      %v1468 = vrot.slane %v1163, 1
      %v1469 = vsel %vm1445, %v1467, %v1468
      %v1470 = vrot.slane %v1437, 1
      %v1471 = vrot.slane %v1164, 1
      %v1472 = vsel %vm1445, %v1470, %v1471
      %v1473 = vrot.slane %v1438, 1
      %v1474 = vrot.slane %v1165, 1
      %v1475 = vsel %vm1445, %v1473, %v1474
      %v1476 = vrot.slane %v1439, 1
      %v1477 = vrot.slane %v1166, 1
      %v1478 = vsel %vm1445, %v1476, %v1477
      %v1479 = vrot.slane %v1440, 1
      %v1480 = vrot.slane %v1167, 1
      %v1481 = vsel %vm1445, %v1479, %v1480
      %v1482 = vrot.slane %v1441, 1
      %v1483 = vrot.slane %v1168, 1
      %v1484 = vsel %vm1445, %v1482, %v1483
      %v1485 = vrot.slane %v1442, 1
      %v1486 = vrot.slane %v1169, 1
      %v1487 = vsel %vm1445, %v1485, %v1486
      %v1488 = vrot.slane %v1443, 1
      %v1489 = vrot.slane %v1170, 1
      %v1490 = vsel %vm1445, %v1488, %v1489
      %v1491 = vrot.slane %v1444, 1
      %v1492 = vrot.slane %v1171, 1
      %v1493 = vsel %vm1445, %v1491, %v1492
      %1494 = vrot.lane.b32.xlu0 %v1448, 8
      %v1495 = vpop.permute.xlu0 %1494
      %1496 = vrot.lane.b32.xlu0 %v1451, 8
      %v1497 = vpop.permute.xlu0 %1496
      %1498 = vrot.lane.b32.xlu0 %v1454, 8
      %v1499 = vpop.permute.xlu0 %1498
      %1500 = vrot.lane.b32.xlu0 %v1457, 8
      %v1501 = vpop.permute.xlu0 %1500
      %1502 = vrot.lane.b32.xlu0 %v1460, 8
      %v1503 = vpop.permute.xlu0 %1502
      %1504 = vrot.lane.b32.xlu0 %v1463, 8
      %v1505 = vpop.permute.xlu0 %1504
      %1506 = vrot.lane.b32.xlu0 %v1466, 8
      %v1507 = vpop.permute.xlu0 %1506
      %1508 = vrot.lane.b32.xlu0 %v1469, 8
      %v1509 = vpop.permute.xlu0 %1508
      %1510 = vrot.lane.b32.xlu0 %v1472, 8
      %v1511 = vpop.permute.xlu0 %1510
      %1512 = vrot.lane.b32.xlu0 %v1475, 8
      %v1513 = vpop.permute.xlu0 %1512
      %1514 = vrot.lane.b32.xlu0 %v1478, 8
      %v1515 = vpop.permute.xlu0 %1514
      %1516 = vrot.lane.b32.xlu0 %v1481, 8
      %v1517 = vpop.permute.xlu0 %1516
      %1518 = vrot.lane.b32.xlu0 %v1484, 8
      %v1519 = vpop.permute.xlu0 %1518
      %1520 = vrot.lane.b32.xlu0 %v1487, 8
      %v1521 = vpop.permute.xlu0 %1520
      %1522 = vrot.lane.b32.xlu0 %v1490, 8
      %v1523 = vpop.permute.xlu0 %1522
      %1524 = vrot.lane.b32.xlu0 %v1493, 8
      %v1525 = vpop.permute.xlu0 %1524
      %v1558 = vunpack.c.l.b16 %v915
      %v1559 = vunpack.c.l.b16 %v916
      %v1560 = vunpack.c.l.b16 %v917
      %v1561 = vunpack.c.l.b16 %v918
      %v1562 = vunpack.c.l.b16 %v919
      %v1563 = vunpack.c.l.b16 %v920
      %v1564 = vunpack.c.l.b16 %v921
      %v1565 = vunpack.c.l.b16 %v922
      %v1566 = vunpack.c.l.b16 %v923
      %v1567 = vunpack.c.l.b16 %v924
      %v1568 = vunpack.c.l.b16 %v925
      %v1569 = vunpack.c.l.b16 %v926
      %v1570 = vunpack.c.l.b16 %v927
      %v1571 = vunpack.c.l.b16 %v928
      %v1572 = vunpack.c.l.b16 %v929
      %v1573 = vunpack.c.l.b16 %v930
      %v1574 = vunpack.c.l.b16 %v931
      %v1575 = vunpack.c.l.b16 %v932
      %v1576 = vunpack.c.l.b16 %v933
      %v1577 = vunpack.c.l.b16 %v934
      %v1578 = vunpack.c.l.b16 %v935
      %v1579 = vunpack.c.l.b16 %v936
      %v1580 = vunpack.c.l.b16 %v937
      %v1581 = vunpack.c.l.b16 %v938
      %v1582 = vunpack.c.l.b16 %v939
      %v1583 = vunpack.c.l.b16 %v940
      %v1584 = vunpack.c.l.b16 %v941
      %v1585 = vunpack.c.l.b16 %v942
      %v1586 = vunpack.c.l.b16 %v943
      %v1587 = vunpack.c.l.b16 %v944
      %v1588 = vunpack.c.l.b16 %v945
      %v1589 = vunpack.c.l.b16 %v946
      %v1590 = vpack.c.b16 %v1559, %v1558
      %v1591 = vpack.c.b16 %v1561, %v1560
      %v1592 = vpack.c.b16 %v1563, %v1562
      %v1593 = vpack.c.b16 %v1565, %v1564
      %v1594 = vpack.c.b16 %v1567, %v1566
      %v1595 = vpack.c.b16 %v1569, %v1568
      %v1596 = vpack.c.b16 %v1571, %v1570
      %v1597 = vpack.c.b16 %v1573, %v1572
      %v1598 = vpack.c.b16 %v1575, %v1574
      %v1599 = vpack.c.b16 %v1577, %v1576
      %v1600 = vpack.c.b16 %v1579, %v1578
      %v1601 = vpack.c.b16 %v1581, %v1580
      %v1602 = vpack.c.b16 %v1583, %v1582
      %v1603 = vpack.c.b16 %v1585, %v1584
      %v1604 = vpack.c.b16 %v1587, %v1586
      %v1605 = vpack.c.b16 %v1589, %v1588
      %1606 = vrot.lane.b32.xlu0 %v1590, 12
      %v1607 = vpop.permute.xlu0 %1606
      %1608 = vrot.lane.b32.xlu0 %v1591, 12
      %v1609 = vpop.permute.xlu0 %1608
      %1610 = vrot.lane.b32.xlu0 %v1592, 12
      %v1611 = vpop.permute.xlu0 %1610
      %1612 = vrot.lane.b32.xlu0 %v1593, 12
      %v1613 = vpop.permute.xlu0 %1612
      %1614 = vrot.lane.b32.xlu0 %v1594, 12
      %v1615 = vpop.permute.xlu0 %1614
      %1616 = vrot.lane.b32.xlu0 %v1595, 12
      %v1617 = vpop.permute.xlu0 %1616
      %1618 = vrot.lane.b32.xlu0 %v1596, 12
      %v1619 = vpop.permute.xlu0 %1618
      %1620 = vrot.lane.b32.xlu0 %v1597, 12
      %v1621 = vpop.permute.xlu0 %1620
      %1622 = vrot.lane.b32.xlu0 %v1598, 12
      %v1623 = vpop.permute.xlu0 %1622
      %1624 = vrot.lane.b32.xlu0 %v1599, 12
      %v1625 = vpop.permute.xlu0 %1624
      %1626 = vrot.lane.b32.xlu0 %v1600, 12
      %v1627 = vpop.permute.xlu0 %1626
      %1628 = vrot.lane.b32.xlu0 %v1601, 12
      %v1629 = vpop.permute.xlu0 %1628
      %1630 = vrot.lane.b32.xlu0 %v1602, 12
      %v1631 = vpop.permute.xlu0 %1630
      %1632 = vrot.lane.b32.xlu0 %v1603, 12
      %v1633 = vpop.permute.xlu0 %1632
      %1634 = vrot.lane.b32.xlu0 %v1604, 12
      %v1635 = vpop.permute.xlu0 %1634
      %1636 = vrot.lane.b32.xlu0 %v1605, 12
      %v1637 = vpop.permute.xlu0 %1636
      %v1654 = vunpack.c.l.b16 %v947
      %v1655 = vunpack.c.l.b16 %v948
      %v1656 = vunpack.c.l.b16 %v949
      %v1657 = vunpack.c.l.b16 %v950
      %v1658 = vunpack.c.l.b16 %v951
      %v1659 = vunpack.c.l.b16 %v952
      %v1660 = vunpack.c.l.b16 %v953
      %v1661 = vunpack.c.l.b16 %v954
      %v1662 = vunpack.c.l.b16 %v955
      %v1663 = vunpack.c.l.b16 %v956
      %v1664 = vunpack.c.l.b16 %v957
      %v1665 = vunpack.c.l.b16 %v958
      %v1666 = vunpack.c.l.b16 %v959
      %v1667 = vunpack.c.l.b16 %v960
      %v1668 = vunpack.c.l.b16 %v961
      %v1669 = vunpack.c.l.b16 %v962
      %v1670 = vpack.c.b16 %v1654, %v1654
      %v1671 = vpack.c.b16 %v1655, %v1655
      %v1672 = vpack.c.b16 %v1656, %v1656
      %v1673 = vpack.c.b16 %v1657, %v1657
      %v1674 = vpack.c.b16 %v1658, %v1658
      %v1675 = vpack.c.b16 %v1659, %v1659
      %v1676 = vpack.c.b16 %v1660, %v1660
      %v1677 = vpack.c.b16 %v1661, %v1661
      %v1678 = vpack.c.b16 %v1662, %v1662
      %v1679 = vpack.c.b16 %v1663, %v1663
      %v1680 = vpack.c.b16 %v1664, %v1664
      %v1681 = vpack.c.b16 %v1665, %v1665
      %v1682 = vpack.c.b16 %v1666, %v1666
      %v1683 = vpack.c.b16 %v1667, %v1667
      %v1684 = vpack.c.b16 %v1668, %v1668
      %v1685 = vpack.c.b16 %v1669, %v1669
      %v1687 = vshrl.u32 %v1590, 16
      %v1689 = vshll.u32 %v1590, 16
      %v1691 = vrot.slane %v1689, 1
      %v1692 = vor.u32 %v1687, %v1691
      %v1694 = vshll.u32 %v1670, 16
      %v1696 = vrot.slane %v1694, 1
      %v1697 = vsel %vm1172, %v1692, %v1696
      %v1699 = vshrl.u32 %v1591, 16
      %v1701 = vshll.u32 %v1591, 16
      %v1703 = vrot.slane %v1701, 1
      %v1704 = vor.u32 %v1699, %v1703
      %v1706 = vshll.u32 %v1671, 16
      %v1708 = vrot.slane %v1706, 1
      %v1709 = vsel %vm1172, %v1704, %v1708
      %v1711 = vshrl.u32 %v1592, 16
      %v1713 = vshll.u32 %v1592, 16
      %v1715 = vrot.slane %v1713, 1
      %v1716 = vor.u32 %v1711, %v1715
      %v1718 = vshll.u32 %v1672, 16
      %v1720 = vrot.slane %v1718, 1
      %v1721 = vsel %vm1172, %v1716, %v1720
      %v1723 = vshrl.u32 %v1593, 16
      %v1725 = vshll.u32 %v1593, 16
      %v1727 = vrot.slane %v1725, 1
      %v1728 = vor.u32 %v1723, %v1727
      %v1730 = vshll.u32 %v1673, 16
      %v1732 = vrot.slane %v1730, 1
      %v1733 = vsel %vm1172, %v1728, %v1732
      %v1735 = vshrl.u32 %v1594, 16
      %v1737 = vshll.u32 %v1594, 16
      %v1739 = vrot.slane %v1737, 1
      %v1740 = vor.u32 %v1735, %v1739
      %v1742 = vshll.u32 %v1674, 16
      %v1744 = vrot.slane %v1742, 1
      %v1745 = vsel %vm1172, %v1740, %v1744
      %v1747 = vshrl.u32 %v1595, 16
      %v1749 = vshll.u32 %v1595, 16
      %v1751 = vrot.slane %v1749, 1
      %v1752 = vor.u32 %v1747, %v1751
      %v1754 = vshll.u32 %v1675, 16
      %v1756 = vrot.slane %v1754, 1
      %v1757 = vsel %vm1172, %v1752, %v1756
      %v1759 = vshrl.u32 %v1596, 16
      %v1761 = vshll.u32 %v1596, 16
      %v1763 = vrot.slane %v1761, 1
      %v1764 = vor.u32 %v1759, %v1763
      %v1766 = vshll.u32 %v1676, 16
      %v1768 = vrot.slane %v1766, 1
      %v1769 = vsel %vm1172, %v1764, %v1768
      %v1771 = vshrl.u32 %v1597, 16
      %v1773 = vshll.u32 %v1597, 16
      %v1775 = vrot.slane %v1773, 1
      %v1776 = vor.u32 %v1771, %v1775
      %v1778 = vshll.u32 %v1677, 16
      %v1780 = vrot.slane %v1778, 1
      %v1781 = vsel %vm1172, %v1776, %v1780
      %v1783 = vshrl.u32 %v1598, 16
      %v1785 = vshll.u32 %v1598, 16
      %v1787 = vrot.slane %v1785, 1
      %v1788 = vor.u32 %v1783, %v1787
      %v1790 = vshll.u32 %v1678, 16
      %v1792 = vrot.slane %v1790, 1
      %v1793 = vsel %vm1172, %v1788, %v1792
      %v1795 = vshrl.u32 %v1599, 16
      %v1797 = vshll.u32 %v1599, 16
      %v1799 = vrot.slane %v1797, 1
      %v1800 = vor.u32 %v1795, %v1799
      %v1802 = vshll.u32 %v1679, 16
      %v1804 = vrot.slane %v1802, 1
      %v1805 = vsel %vm1172, %v1800, %v1804
      %v1807 = vshrl.u32 %v1600, 16
      %v1809 = vshll.u32 %v1600, 16
      %v1811 = vrot.slane %v1809, 1
      %v1812 = vor.u32 %v1807, %v1811
      %v1814 = vshll.u32 %v1680, 16
      %v1816 = vrot.slane %v1814, 1
      %v1817 = vsel %vm1172, %v1812, %v1816
      %v1819 = vshrl.u32 %v1601, 16
      %v1821 = vshll.u32 %v1601, 16
      %v1823 = vrot.slane %v1821, 1
      %v1824 = vor.u32 %v1819, %v1823
      %v1826 = vshll.u32 %v1681, 16
      %v1828 = vrot.slane %v1826, 1
      %v1829 = vsel %vm1172, %v1824, %v1828
      %v1831 = vshrl.u32 %v1602, 16
      %v1833 = vshll.u32 %v1602, 16
      %v1835 = vrot.slane %v1833, 1
      %v1836 = vor.u32 %v1831, %v1835
      %v1838 = vshll.u32 %v1682, 16
      %v1840 = vrot.slane %v1838, 1
      %v1841 = vsel %vm1172, %v1836, %v1840
      %v1843 = vshrl.u32 %v1603, 16
      %v1845 = vshll.u32 %v1603, 16
      %v1847 = vrot.slane %v1845, 1
      %v1848 = vor.u32 %v1843, %v1847
      %v1850 = vshll.u32 %v1683, 16
      %v1852 = vrot.slane %v1850, 1
      %v1853 = vsel %vm1172, %v1848, %v1852
      %v1855 = vshrl.u32 %v1604, 16
      %v1857 = vshll.u32 %v1604, 16
      %v1859 = vrot.slane %v1857, 1
      %v1860 = vor.u32 %v1855, %v1859
      %v1862 = vshll.u32 %v1684, 16
      %v1864 = vrot.slane %v1862, 1
      %v1865 = vsel %vm1172, %v1860, %v1864
      %v1867 = vshrl.u32 %v1605, 16
      %v1869 = vshll.u32 %v1605, 16
      %v1871 = vrot.slane %v1869, 1
      %v1872 = vor.u32 %v1867, %v1871
      %v1874 = vshll.u32 %v1685, 16
      %v1876 = vrot.slane %v1874, 1
      %v1877 = vsel %vm1172, %v1872, %v1876
      %1878 = vrot.lane.b32.xlu0 %v1697, 16
      %v1879 = vpop.permute.xlu0 %1878
      %1880 = vrot.lane.b32.xlu0 %v1709, 16
      %v1881 = vpop.permute.xlu0 %1880
      %1882 = vrot.lane.b32.xlu0 %v1721, 16
      %v1883 = vpop.permute.xlu0 %1882
      %1884 = vrot.lane.b32.xlu0 %v1733, 16
      %v1885 = vpop.permute.xlu0 %1884
      %1886 = vrot.lane.b32.xlu0 %v1745, 16
      %v1887 = vpop.permute.xlu0 %1886
      %1888 = vrot.lane.b32.xlu0 %v1757, 16
      %v1889 = vpop.permute.xlu0 %1888
      %1890 = vrot.lane.b32.xlu0 %v1769, 16
      %v1891 = vpop.permute.xlu0 %1890
      %1892 = vrot.lane.b32.xlu0 %v1781, 16
      %v1893 = vpop.permute.xlu0 %1892
      %1894 = vrot.lane.b32.xlu0 %v1793, 16
      %v1895 = vpop.permute.xlu0 %1894
      %1896 = vrot.lane.b32.xlu0 %v1805, 16
      %v1897 = vpop.permute.xlu0 %1896
      %1898 = vrot.lane.b32.xlu0 %v1817, 16
      %v1899 = vpop.permute.xlu0 %1898
      %1900 = vrot.lane.b32.xlu0 %v1829, 16
      %v1901 = vpop.permute.xlu0 %1900
      %1902 = vrot.lane.b32.xlu0 %v1841, 16
      %v1903 = vpop.permute.xlu0 %1902
      %1904 = vrot.lane.b32.xlu0 %v1853, 16
      %v1905 = vpop.permute.xlu0 %1904
      %1906 = vrot.lane.b32.xlu0 %v1865, 16
      %v1907 = vpop.permute.xlu0 %1906
      %1908 = vrot.lane.b32.xlu0 %v1877, 16
      %v1909 = vpop.permute.xlu0 %1908
      %v1926 = vunpack.c.l.b16 %v963
      %v1927 = vunpack.c.l.b16 %v964
      %v1928 = vunpack.c.l.b16 %v965
      %v1929 = vunpack.c.l.b16 %v966
      %v1930 = vunpack.c.l.b16 %v967
      %v1931 = vunpack.c.l.b16 %v968
      %v1932 = vunpack.c.l.b16 %v969
      %v1933 = vunpack.c.l.b16 %v970
      %v1934 = vunpack.c.l.b16 %v971
      %v1935 = vunpack.c.l.b16 %v972
      %v1936 = vunpack.c.l.b16 %v973
      %v1937 = vunpack.c.l.b16 %v974
      %v1938 = vunpack.c.l.b16 %v975
      %v1939 = vunpack.c.l.b16 %v976
      %v1940 = vunpack.c.l.b16 %v977
      %v1941 = vunpack.c.l.b16 %v978
      %v1942 = vpack.c.b16 %v1559, %v1926
      %v1943 = vpack.c.b16 %v1561, %v1927
      %v1944 = vpack.c.b16 %v1563, %v1928
      %v1945 = vpack.c.b16 %v1565, %v1929
      %v1946 = vpack.c.b16 %v1567, %v1930
      %v1947 = vpack.c.b16 %v1569, %v1931
      %v1948 = vpack.c.b16 %v1571, %v1932
      %v1949 = vpack.c.b16 %v1573, %v1933
      %v1950 = vpack.c.b16 %v1575, %v1934
      %v1951 = vpack.c.b16 %v1577, %v1935
      %v1952 = vpack.c.b16 %v1579, %v1936
      %v1953 = vpack.c.b16 %v1581, %v1937
      %v1954 = vpack.c.b16 %v1583, %v1938
      %v1955 = vpack.c.b16 %v1585, %v1939
      %v1956 = vpack.c.b16 %v1587, %v1940
      %v1957 = vpack.c.b16 %v1589, %v1941
      %v1958 = vrot.slane %v1942, 1
      %v1959 = vrot.slane %v1670, 1
      %v1960 = vsel %vm1445, %v1958, %v1959
      %v1961 = vrot.slane %v1943, 1
      %v1962 = vrot.slane %v1671, 1
      %v1963 = vsel %vm1445, %v1961, %v1962
      %v1964 = vrot.slane %v1944, 1
      %v1965 = vrot.slane %v1672, 1
      %v1966 = vsel %vm1445, %v1964, %v1965
      %v1967 = vrot.slane %v1945, 1
      %v1968 = vrot.slane %v1673, 1
      %v1969 = vsel %vm1445, %v1967, %v1968
      %v1970 = vrot.slane %v1946, 1
      %v1971 = vrot.slane %v1674, 1
      %v1972 = vsel %vm1445, %v1970, %v1971
      %v1973 = vrot.slane %v1947, 1
      %v1974 = vrot.slane %v1675, 1
      %v1975 = vsel %vm1445, %v1973, %v1974
      %v1976 = vrot.slane %v1948, 1
      %v1977 = vrot.slane %v1676, 1
      %v1978 = vsel %vm1445, %v1976, %v1977
      %v1979 = vrot.slane %v1949, 1
      %v1980 = vrot.slane %v1677, 1
      %v1981 = vsel %vm1445, %v1979, %v1980
      %v1982 = vrot.slane %v1950, 1
      %v1983 = vrot.slane %v1678, 1
      %v1984 = vsel %vm1445, %v1982, %v1983
      %v1985 = vrot.slane %v1951, 1
      %v1986 = vrot.slane %v1679, 1
      %v1987 = vsel %vm1445, %v1985, %v1986
      %v1988 = vrot.slane %v1952, 1
      %v1989 = vrot.slane %v1680, 1
      %v1990 = vsel %vm1445, %v1988, %v1989
      %v1991 = vrot.slane %v1953, 1
      %v1992 = vrot.slane %v1681, 1
      %v1993 = vsel %vm1445, %v1991, %v1992
      %v1994 = vrot.slane %v1954, 1
      %v1995 = vrot.slane %v1682, 1
      %v1996 = vsel %vm1445, %v1994, %v1995
      %v1997 = vrot.slane %v1955, 1
      %v1998 = vrot.slane %v1683, 1
      %v1999 = vsel %vm1445, %v1997, %v1998
      %v2000 = vrot.slane %v1956, 1
      %v2001 = vrot.slane %v1684, 1
      %v2002 = vsel %vm1445, %v2000, %v2001
      %v2003 = vrot.slane %v1957, 1
      %v2004 = vrot.slane %v1685, 1
      %v2005 = vsel %vm1445, %v2003, %v2004
      %2006 = vrot.lane.b32.xlu0 %v1960, 20
      %v2007 = vpop.permute.xlu0 %2006
      %2008 = vrot.lane.b32.xlu0 %v1963, 20
      %v2009 = vpop.permute.xlu0 %2008
      %2010 = vrot.lane.b32.xlu0 %v1966, 20
      %v2011 = vpop.permute.xlu0 %2010
      %2012 = vrot.lane.b32.xlu0 %v1969, 20
      %v2013 = vpop.permute.xlu0 %2012
      %2014 = vrot.lane.b32.xlu0 %v1972, 20
      %v2015 = vpop.permute.xlu0 %2014
      %2016 = vrot.lane.b32.xlu0 %v1975, 20
      %v2017 = vpop.permute.xlu0 %2016
      %2018 = vrot.lane.b32.xlu0 %v1978, 20
      %v2019 = vpop.permute.xlu0 %2018
      %2020 = vrot.lane.b32.xlu0 %v1981, 20
      %v2021 = vpop.permute.xlu0 %2020
      %2022 = vrot.lane.b32.xlu0 %v1984, 20
      %v2023 = vpop.permute.xlu0 %2022
      %2024 = vrot.lane.b32.xlu0 %v1987, 20
      %v2025 = vpop.permute.xlu0 %2024
      %2026 = vrot.lane.b32.xlu0 %v1990, 20
      %v2027 = vpop.permute.xlu0 %2026
      %2028 = vrot.lane.b32.xlu0 %v1993, 20
      %v2029 = vpop.permute.xlu0 %2028
      %2030 = vrot.lane.b32.xlu0 %v1996, 20
      %v2031 = vpop.permute.xlu0 %2030
      %2032 = vrot.lane.b32.xlu0 %v1999, 20
      %v2033 = vpop.permute.xlu0 %2032
      %2034 = vrot.lane.b32.xlu0 %v2002, 20
      %v2035 = vpop.permute.xlu0 %2034
      %2036 = vrot.lane.b32.xlu0 %v2005, 20
      %v2037 = vpop.permute.xlu0 %2036
      %v2070 = vunpack.c.l.b16 %v980
      %v2071 = vunpack.c.l.b16 %v981
      %v2072 = vunpack.c.l.b16 %v982
      %v2073 = vunpack.c.l.b16 %v983
      %v2074 = vunpack.c.l.b16 %v984
      %v2075 = vunpack.c.l.b16 %v985
      %v2076 = vunpack.c.l.b16 %v986
      %v2077 = vunpack.c.l.b16 %v987
      %v2078 = vunpack.c.l.b16 %v988
      %v2079 = vunpack.c.l.b16 %v989
      %v2080 = vunpack.c.l.b16 %v990
      %v2081 = vunpack.c.l.b16 %v991
      %v2082 = vunpack.c.l.b16 %v992
      %v2083 = vunpack.c.l.b16 %v993
      %v2084 = vunpack.c.l.b16 %v994
      %v2085 = vunpack.c.l.b16 %v995
      %v2086 = vunpack.c.l.b16 %v996
      %v2087 = vunpack.c.l.b16 %v997
      %v2088 = vunpack.c.l.b16 %v998
      %v2089 = vunpack.c.l.b16 %v999
      %v2090 = vunpack.c.l.b16 %v1000
      %v2091 = vunpack.c.l.b16 %v1001
      %v2092 = vunpack.c.l.b16 %v1002
      %v2093 = vunpack.c.l.b16 %v1003
      %v2094 = vunpack.c.l.b16 %v1004
      %v2095 = vunpack.c.l.b16 %v1005
      %v2096 = vunpack.c.l.b16 %v1006
      %v2097 = vunpack.c.l.b16 %v1007
      %v2098 = vunpack.c.l.b16 %v1008
      %v2099 = vunpack.c.l.b16 %v1009
      %v2100 = vunpack.c.l.b16 %v1010
      %v2101 = vunpack.c.l.b16 %v1011
      %v2102 = vpack.c.b16 %v2071, %v2070
      %v2103 = vpack.c.b16 %v2073, %v2072
      %v2104 = vpack.c.b16 %v2075, %v2074
      %v2105 = vpack.c.b16 %v2077, %v2076
      %v2106 = vpack.c.b16 %v2079, %v2078
      %v2107 = vpack.c.b16 %v2081, %v2080
      %v2108 = vpack.c.b16 %v2083, %v2082
      %v2109 = vpack.c.b16 %v2085, %v2084
      %v2110 = vpack.c.b16 %v2087, %v2086
      %v2111 = vpack.c.b16 %v2089, %v2088
      %v2112 = vpack.c.b16 %v2091, %v2090
      %v2113 = vpack.c.b16 %v2093, %v2092
      %v2114 = vpack.c.b16 %v2095, %v2094
      %v2115 = vpack.c.b16 %v2097, %v2096
      %v2116 = vpack.c.b16 %v2099, %v2098
      %v2117 = vpack.c.b16 %v2101, %v2100
      %2118 = vrot.lane.b32.xlu0 %v2102, 24
      %v2119 = vpop.permute.xlu0 %2118
      %2120 = vrot.lane.b32.xlu0 %v2103, 24
      %v2121 = vpop.permute.xlu0 %2120
      %2122 = vrot.lane.b32.xlu0 %v2104, 24
      %v2123 = vpop.permute.xlu0 %2122
      %2124 = vrot.lane.b32.xlu0 %v2105, 24
      %v2125 = vpop.permute.xlu0 %2124
      %2126 = vrot.lane.b32.xlu0 %v2106, 24
      %v2127 = vpop.permute.xlu0 %2126
      %2128 = vrot.lane.b32.xlu0 %v2107, 24
      %v2129 = vpop.permute.xlu0 %2128
      %2130 = vrot.lane.b32.xlu0 %v2108, 24
      %v2131 = vpop.permute.xlu0 %2130
      %2132 = vrot.lane.b32.xlu0 %v2109, 24
      %v2133 = vpop.permute.xlu0 %2132
      %2134 = vrot.lane.b32.xlu0 %v2110, 24
      %v2135 = vpop.permute.xlu0 %2134
      %2136 = vrot.lane.b32.xlu0 %v2111, 24
      %v2137 = vpop.permute.xlu0 %2136
      %2138 = vrot.lane.b32.xlu0 %v2112, 24
      %v2139 = vpop.permute.xlu0 %2138
      %2140 = vrot.lane.b32.xlu0 %v2113, 24
      %v2141 = vpop.permute.xlu0 %2140
      %2142 = vrot.lane.b32.xlu0 %v2114, 24
      %v2143 = vpop.permute.xlu0 %2142
      %2144 = vrot.lane.b32.xlu0 %v2115, 24
      %v2145 = vpop.permute.xlu0 %2144
      %2146 = vrot.lane.b32.xlu0 %v2116, 24
      %v2147 = vpop.permute.xlu0 %2146
      %2148 = vrot.lane.b32.xlu0 %v2117, 24
      %v2149 = vpop.permute.xlu0 %2148
      %v2166 = vunpack.c.l.b16 %v1012
      %v2167 = vunpack.c.l.b16 %v1013
      %v2168 = vunpack.c.l.b16 %v1014
      %v2169 = vunpack.c.l.b16 %v1015
      %v2170 = vunpack.c.l.b16 %v1016
      %v2171 = vunpack.c.l.b16 %v1017
      %v2172 = vunpack.c.l.b16 %v1018
      %v2173 = vunpack.c.l.b16 %v1019
      %v2174 = vunpack.c.l.b16 %v1020
      %v2175 = vunpack.c.l.b16 %v1021
      %v2176 = vunpack.c.l.b16 %v1022
      %v2177 = vunpack.c.l.b16 %v1023
      %v2178 = vunpack.c.l.b16 %v1024
      %v2179 = vunpack.c.l.b16 %v1025
      %v2180 = vunpack.c.l.b16 %v1026
      %v2181 = vunpack.c.l.b16 %v1027
      %v2182 = vpack.c.b16 %v2166, %v2166
      %v2183 = vpack.c.b16 %v2167, %v2167
      %v2184 = vpack.c.b16 %v2168, %v2168
      %v2185 = vpack.c.b16 %v2169, %v2169
      %v2186 = vpack.c.b16 %v2170, %v2170
      %v2187 = vpack.c.b16 %v2171, %v2171
      %v2188 = vpack.c.b16 %v2172, %v2172
      %v2189 = vpack.c.b16 %v2173, %v2173
      %v2190 = vpack.c.b16 %v2174, %v2174
      %v2191 = vpack.c.b16 %v2175, %v2175
      %v2192 = vpack.c.b16 %v2176, %v2176
      %v2193 = vpack.c.b16 %v2177, %v2177
      %v2194 = vpack.c.b16 %v2178, %v2178
      %v2195 = vpack.c.b16 %v2179, %v2179
      %v2196 = vpack.c.b16 %v2180, %v2180
      %v2197 = vpack.c.b16 %v2181, %v2181
      %v2199 = vshrl.u32 %v2102, 16
      %v2201 = vshll.u32 %v2102, 16
      %v2203 = vrot.slane %v2201, 1
      %v2204 = vor.u32 %v2199, %v2203
      %v2206 = vshll.u32 %v2182, 16
      %v2208 = vrot.slane %v2206, 1
      %v2209 = vsel %vm1172, %v2204, %v2208
      %v2211 = vshrl.u32 %v2103, 16
      %v2213 = vshll.u32 %v2103, 16
      %v2215 = vrot.slane %v2213, 1
      %v2216 = vor.u32 %v2211, %v2215
      %v2218 = vshll.u32 %v2183, 16
      %v2220 = vrot.slane %v2218, 1
      %v2221 = vsel %vm1172, %v2216, %v2220
      %v2223 = vshrl.u32 %v2104, 16
      %v2225 = vshll.u32 %v2104, 16
      %v2227 = vrot.slane %v2225, 1
      %v2228 = vor.u32 %v2223, %v2227
      %v2230 = vshll.u32 %v2184, 16
      %v2232 = vrot.slane %v2230, 1
      %v2233 = vsel %vm1172, %v2228, %v2232
      %v2235 = vshrl.u32 %v2105, 16
      %v2237 = vshll.u32 %v2105, 16
      %v2239 = vrot.slane %v2237, 1
      %v2240 = vor.u32 %v2235, %v2239
      %v2242 = vshll.u32 %v2185, 16
      %v2244 = vrot.slane %v2242, 1
      %v2245 = vsel %vm1172, %v2240, %v2244
      %v2247 = vshrl.u32 %v2106, 16
      %v2249 = vshll.u32 %v2106, 16
      %v2251 = vrot.slane %v2249, 1
      %v2252 = vor.u32 %v2247, %v2251
      %v2254 = vshll.u32 %v2186, 16
      %v2256 = vrot.slane %v2254, 1
      %v2257 = vsel %vm1172, %v2252, %v2256
      %v2259 = vshrl.u32 %v2107, 16
      %v2261 = vshll.u32 %v2107, 16
      %v2263 = vrot.slane %v2261, 1
      %v2264 = vor.u32 %v2259, %v2263
      %v2266 = vshll.u32 %v2187, 16
      %v2268 = vrot.slane %v2266, 1
      %v2269 = vsel %vm1172, %v2264, %v2268
      %v2271 = vshrl.u32 %v2108, 16
      %v2273 = vshll.u32 %v2108, 16
      %v2275 = vrot.slane %v2273, 1
      %v2276 = vor.u32 %v2271, %v2275
      %v2278 = vshll.u32 %v2188, 16
      %v2280 = vrot.slane %v2278, 1
      %v2281 = vsel %vm1172, %v2276, %v2280
      %v2283 = vshrl.u32 %v2109, 16
      %v2285 = vshll.u32 %v2109, 16
      %v2287 = vrot.slane %v2285, 1
      %v2288 = vor.u32 %v2283, %v2287
      %v2290 = vshll.u32 %v2189, 16
      %v2292 = vrot.slane %v2290, 1
      %v2293 = vsel %vm1172, %v2288, %v2292
      %v2295 = vshrl.u32 %v2110, 16
      %v2297 = vshll.u32 %v2110, 16
      %v2299 = vrot.slane %v2297, 1
      %v2300 = vor.u32 %v2295, %v2299
      %v2302 = vshll.u32 %v2190, 16
      %v2304 = vrot.slane %v2302, 1
      %v2305 = vsel %vm1172, %v2300, %v2304
      %v2307 = vshrl.u32 %v2111, 16
      %v2309 = vshll.u32 %v2111, 16
      %v2311 = vrot.slane %v2309, 1
      %v2312 = vor.u32 %v2307, %v2311
      %v2314 = vshll.u32 %v2191, 16
      %v2316 = vrot.slane %v2314, 1
      %v2317 = vsel %vm1172, %v2312, %v2316
      %v2319 = vshrl.u32 %v2112, 16
      %v2321 = vshll.u32 %v2112, 16
      %v2323 = vrot.slane %v2321, 1
      %v2324 = vor.u32 %v2319, %v2323
      %v2326 = vshll.u32 %v2192, 16
      %v2328 = vrot.slane %v2326, 1
      %v2329 = vsel %vm1172, %v2324, %v2328
      %v2331 = vshrl.u32 %v2113, 16
      %v2333 = vshll.u32 %v2113, 16
      %v2335 = vrot.slane %v2333, 1
      %v2336 = vor.u32 %v2331, %v2335
      %v2338 = vshll.u32 %v2193, 16
      %v2340 = vrot.slane %v2338, 1
      %v2341 = vsel %vm1172, %v2336, %v2340
      %v2343 = vshrl.u32 %v2114, 16
      %v2345 = vshll.u32 %v2114, 16
      %v2347 = vrot.slane %v2345, 1
      %v2348 = vor.u32 %v2343, %v2347
      %v2350 = vshll.u32 %v2194, 16
      %v2352 = vrot.slane %v2350, 1
      %v2353 = vsel %vm1172, %v2348, %v2352
      %v2355 = vshrl.u32 %v2115, 16
      %v2357 = vshll.u32 %v2115, 16
      %v2359 = vrot.slane %v2357, 1
      %v2360 = vor.u32 %v2355, %v2359
      %v2362 = vshll.u32 %v2195, 16
      %v2364 = vrot.slane %v2362, 1
      %v2365 = vsel %vm1172, %v2360, %v2364
      %v2367 = vshrl.u32 %v2116, 16
      %v2369 = vshll.u32 %v2116, 16
      %v2371 = vrot.slane %v2369, 1
      %v2372 = vor.u32 %v2367, %v2371
      %v2374 = vshll.u32 %v2196, 16
      %v2376 = vrot.slane %v2374, 1
      %v2377 = vsel %vm1172, %v2372, %v2376
      %v2379 = vshrl.u32 %v2117, 16
      %v2381 = vshll.u32 %v2117, 16
      %v2383 = vrot.slane %v2381, 1
      %v2384 = vor.u32 %v2379, %v2383
      %v2386 = vshll.u32 %v2197, 16
      %v2388 = vrot.slane %v2386, 1
      %v2389 = vsel %vm1172, %v2384, %v2388
      %2390 = vrot.lane.b32.xlu0 %v2209, 28
      %v2391 = vpop.permute.xlu0 %2390
      %2392 = vrot.lane.b32.xlu0 %v2221, 28
      %v2393 = vpop.permute.xlu0 %2392
      %2394 = vrot.lane.b32.xlu0 %v2233, 28
      %v2395 = vpop.permute.xlu0 %2394
      %2396 = vrot.lane.b32.xlu0 %v2245, 28
      %v2397 = vpop.permute.xlu0 %2396
      %2398 = vrot.lane.b32.xlu0 %v2257, 28
      %v2399 = vpop.permute.xlu0 %2398
      %2400 = vrot.lane.b32.xlu0 %v2269, 28
      %v2401 = vpop.permute.xlu0 %2400
      %2402 = vrot.lane.b32.xlu0 %v2281, 28
      %v2403 = vpop.permute.xlu0 %2402
      %2404 = vrot.lane.b32.xlu0 %v2293, 28
      %v2405 = vpop.permute.xlu0 %2404
      %2406 = vrot.lane.b32.xlu0 %v2305, 28
      %v2407 = vpop.permute.xlu0 %2406
      %2408 = vrot.lane.b32.xlu0 %v2317, 28
      %v2409 = vpop.permute.xlu0 %2408
      %2410 = vrot.lane.b32.xlu0 %v2329, 28
      %v2411 = vpop.permute.xlu0 %2410
      %2412 = vrot.lane.b32.xlu0 %v2341, 28
      %v2413 = vpop.permute.xlu0 %2412
      %2414 = vrot.lane.b32.xlu0 %v2353, 28
      %v2415 = vpop.permute.xlu0 %2414
      %2416 = vrot.lane.b32.xlu0 %v2365, 28
      %v2417 = vpop.permute.xlu0 %2416
      %2418 = vrot.lane.b32.xlu0 %v2377, 28
      %v2419 = vpop.permute.xlu0 %2418
      %2420 = vrot.lane.b32.xlu0 %v2389, 28
      %v2421 = vpop.permute.xlu0 %2420
      %v2438 = vunpack.c.l.b16 %v1028
      %v2439 = vunpack.c.l.b16 %v1029
      %v2440 = vunpack.c.l.b16 %v1030
      %v2441 = vunpack.c.l.b16 %v1031
      %v2442 = vunpack.c.l.b16 %v1032
      %v2443 = vunpack.c.l.b16 %v1033
      %v2444 = vunpack.c.l.b16 %v1034
      %v2445 = vunpack.c.l.b16 %v1035
      %v2446 = vunpack.c.l.b16 %v1036
      %v2447 = vunpack.c.l.b16 %v1037
      %v2448 = vunpack.c.l.b16 %v1038
      %v2449 = vunpack.c.l.b16 %v1039
      %v2450 = vunpack.c.l.b16 %v1040
      %v2451 = vunpack.c.l.b16 %v1041
      %v2452 = vunpack.c.l.b16 %v1042
      %v2453 = vunpack.c.l.b16 %v1043
      %v2454 = vpack.c.b16 %v2071, %v2438
      %v2455 = vpack.c.b16 %v2073, %v2439
      %v2456 = vpack.c.b16 %v2075, %v2440
      %v2457 = vpack.c.b16 %v2077, %v2441
      %v2458 = vpack.c.b16 %v2079, %v2442
      %v2459 = vpack.c.b16 %v2081, %v2443
      %v2460 = vpack.c.b16 %v2083, %v2444
      %v2461 = vpack.c.b16 %v2085, %v2445
      %v2462 = vpack.c.b16 %v2087, %v2446
      %v2463 = vpack.c.b16 %v2089, %v2447
      %v2464 = vpack.c.b16 %v2091, %v2448
      %v2465 = vpack.c.b16 %v2093, %v2449
      %v2466 = vpack.c.b16 %v2095, %v2450
      %v2467 = vpack.c.b16 %v2097, %v2451
      %v2468 = vpack.c.b16 %v2099, %v2452
      %v2469 = vpack.c.b16 %v2101, %v2453
      %v2470 = vrot.slane %v2454, 1
      %v2471 = vrot.slane %v2182, 1
      %v2472 = vsel %vm1445, %v2470, %v2471
      %v2473 = vrot.slane %v2455, 1
      %v2474 = vrot.slane %v2183, 1
      %v2475 = vsel %vm1445, %v2473, %v2474
      %v2476 = vrot.slane %v2456, 1
      %v2477 = vrot.slane %v2184, 1
      %v2478 = vsel %vm1445, %v2476, %v2477
      %v2479 = vrot.slane %v2457, 1
      %v2480 = vrot.slane %v2185, 1
      %v2481 = vsel %vm1445, %v2479, %v2480
      %v2482 = vrot.slane %v2458, 1
      %v2483 = vrot.slane %v2186, 1
      %v2484 = vsel %vm1445, %v2482, %v2483
      %v2485 = vrot.slane %v2459, 1
      %v2486 = vrot.slane %v2187, 1
      %v2487 = vsel %vm1445, %v2485, %v2486
      %v2488 = vrot.slane %v2460, 1
      %v2489 = vrot.slane %v2188, 1
      %v2490 = vsel %vm1445, %v2488, %v2489
      %v2491 = vrot.slane %v2461, 1
      %v2492 = vrot.slane %v2189, 1
      %v2493 = vsel %vm1445, %v2491, %v2492
      %v2494 = vrot.slane %v2462, 1
      %v2495 = vrot.slane %v2190, 1
      %v2496 = vsel %vm1445, %v2494, %v2495
      %v2497 = vrot.slane %v2463, 1
      %v2498 = vrot.slane %v2191, 1
      %v2499 = vsel %vm1445, %v2497, %v2498
      %v2500 = vrot.slane %v2464, 1
      %v2501 = vrot.slane %v2192, 1
      %v2502 = vsel %vm1445, %v2500, %v2501
      %v2503 = vrot.slane %v2465, 1
      %v2504 = vrot.slane %v2193, 1
      %v2505 = vsel %vm1445, %v2503, %v2504
      %v2506 = vrot.slane %v2466, 1
      %v2507 = vrot.slane %v2194, 1
      %v2508 = vsel %vm1445, %v2506, %v2507
      %v2509 = vrot.slane %v2467, 1
      %v2510 = vrot.slane %v2195, 1
      %v2511 = vsel %vm1445, %v2509, %v2510
      %v2512 = vrot.slane %v2468, 1
      %v2513 = vrot.slane %v2196, 1
      %v2514 = vsel %vm1445, %v2512, %v2513
      %v2515 = vrot.slane %v2469, 1
      %v2516 = vrot.slane %v2197, 1
      %v2517 = vsel %vm1445, %v2515, %v2516
      %2518 = vrot.lane.b32.xlu0 %v2472, 32
      %v2519 = vpop.permute.xlu0 %2518
      %2520 = vrot.lane.b32.xlu0 %v2475, 32
      %v2521 = vpop.permute.xlu0 %2520
      %2522 = vrot.lane.b32.xlu0 %v2478, 32
      %v2523 = vpop.permute.xlu0 %2522
      %2524 = vrot.lane.b32.xlu0 %v2481, 32
      %v2525 = vpop.permute.xlu0 %2524
      %2526 = vrot.lane.b32.xlu0 %v2484, 32
      %v2527 = vpop.permute.xlu0 %2526
      %2528 = vrot.lane.b32.xlu0 %v2487, 32
      %v2529 = vpop.permute.xlu0 %2528
      %2530 = vrot.lane.b32.xlu0 %v2490, 32
      %v2531 = vpop.permute.xlu0 %2530
      %2532 = vrot.lane.b32.xlu0 %v2493, 32
      %v2533 = vpop.permute.xlu0 %2532
      %2534 = vrot.lane.b32.xlu0 %v2496, 32
      %v2535 = vpop.permute.xlu0 %2534
      %2536 = vrot.lane.b32.xlu0 %v2499, 32
      %v2537 = vpop.permute.xlu0 %2536
      %2538 = vrot.lane.b32.xlu0 %v2502, 32
      %v2539 = vpop.permute.xlu0 %2538
      %2540 = vrot.lane.b32.xlu0 %v2505, 32
      %v2541 = vpop.permute.xlu0 %2540
      %2542 = vrot.lane.b32.xlu0 %v2508, 32
      %v2543 = vpop.permute.xlu0 %2542
      %2544 = vrot.lane.b32.xlu0 %v2511, 32
      %v2545 = vpop.permute.xlu0 %2544
      %2546 = vrot.lane.b32.xlu0 %v2514, 32
      %v2547 = vpop.permute.xlu0 %2546
      %2548 = vrot.lane.b32.xlu0 %v2517, 32
      %v2549 = vpop.permute.xlu0 %2548
      %vm2550 = vcmask 31744
      %v2552 = vsel %vm2550, %v1108, %v1366
      %v2554 = vsel %vm2550, %v1109, %v1368
      %v2556 = vsel %vm2550, %v1110, %v1370
      %v2558 = vsel %vm2550, %v1111, %v1372
      %v2560 = vsel %vm2550, %v1112, %v1374
      %v2562 = vsel %vm2550, %v1113, %v1376
      %v2564 = vsel %vm2550, %v1114, %v1378
      %v2566 = vsel %vm2550, %v1115, %v1380
      %v2568 = vsel %vm2550, %v1116, %v1382
      %v2570 = vsel %vm2550, %v1117, %v1384
      %v2572 = vsel %vm2550, %v1118, %v1386
      %v2574 = vsel %vm2550, %v1119, %v1388
      %v2576 = vsel %vm2550, %v1120, %v1390
      %v2578 = vsel %vm2550, %v1121, %v1392
      %v2580 = vsel %vm2550, %v1122, %v1394
      %v2582 = vsel %vm2550, %v1123, %v1396
      %vm2583 = vcmask 64512
      %v2585 = vsel %vm2583, %v2552, %v1495
      %v2587 = vsel %vm2583, %v2554, %v1497
      %v2589 = vsel %vm2583, %v2556, %v1499
      %v2591 = vsel %vm2583, %v2558, %v1501
      %v2593 = vsel %vm2583, %v2560, %v1503
      %v2595 = vsel %vm2583, %v2562, %v1505
      %v2597 = vsel %vm2583, %v2564, %v1507
      %v2599 = vsel %vm2583, %v2566, %v1509
      %v2601 = vsel %vm2583, %v2568, %v1511
      %v2603 = vsel %vm2583, %v2570, %v1513
      %v2605 = vsel %vm2583, %v2572, %v1515
      %v2607 = vsel %vm2583, %v2574, %v1517
      %v2609 = vsel %vm2583, %v2576, %v1519
      %v2611 = vsel %vm2583, %v2578, %v1521
      %v2613 = vsel %vm2583, %v2580, %v1523
      %v2615 = vsel %vm2583, %v2582, %v1525
      %vm2616 = vcmask 97280
      %v2618 = vsel %vm2616, %v2585, %v1607
      %v2620 = vsel %vm2616, %v2587, %v1609
      %v2622 = vsel %vm2616, %v2589, %v1611
      %v2624 = vsel %vm2616, %v2591, %v1613
      %v2626 = vsel %vm2616, %v2593, %v1615
      %v2628 = vsel %vm2616, %v2595, %v1617
      %v2630 = vsel %vm2616, %v2597, %v1619
      %v2632 = vsel %vm2616, %v2599, %v1621
      %v2634 = vsel %vm2616, %v2601, %v1623
      %v2636 = vsel %vm2616, %v2603, %v1625
      %v2638 = vsel %vm2616, %v2605, %v1627
      %v2640 = vsel %vm2616, %v2607, %v1629
      %v2642 = vsel %vm2616, %v2609, %v1631
      %v2644 = vsel %vm2616, %v2611, %v1633
      %v2646 = vsel %vm2616, %v2613, %v1635
      %v2648 = vsel %vm2616, %v2615, %v1637
      %vm2649 = vcmask 130048
      %v2651 = vsel %vm2649, %v2618, %v1879
      %v2653 = vsel %vm2649, %v2620, %v1881
      %v2655 = vsel %vm2649, %v2622, %v1883
      %v2657 = vsel %vm2649, %v2624, %v1885
      %v2659 = vsel %vm2649, %v2626, %v1887
      %v2661 = vsel %vm2649, %v2628, %v1889
      %v2663 = vsel %vm2649, %v2630, %v1891
      %v2665 = vsel %vm2649, %v2632, %v1893
      %v2667 = vsel %vm2649, %v2634, %v1895
      %v2669 = vsel %vm2649, %v2636, %v1897
      %v2671 = vsel %vm2649, %v2638, %v1899
      %v2673 = vsel %vm2649, %v2640, %v1901
      %v2675 = vsel %vm2649, %v2642, %v1903
      %v2677 = vsel %vm2649, %v2644, %v1905
      %v2679 = vsel %vm2649, %v2646, %v1907
      %v2681 = vsel %vm2649, %v2648, %v1909
      %vm2682 = vcmask 162816
      %v2684 = vsel %vm2682, %v2651, %v2007
      %v2686 = vsel %vm2682, %v2653, %v2009
      %v2688 = vsel %vm2682, %v2655, %v2011
      %v2690 = vsel %vm2682, %v2657, %v2013
      %v2692 = vsel %vm2682, %v2659, %v2015
      %v2694 = vsel %vm2682, %v2661, %v2017
      %v2696 = vsel %vm2682, %v2663, %v2019
      %v2698 = vsel %vm2682, %v2665, %v2021
      %v2700 = vsel %vm2682, %v2667, %v2023
      %v2702 = vsel %vm2682, %v2669, %v2025
      %v2704 = vsel %vm2682, %v2671, %v2027
      %v2706 = vsel %vm2682, %v2673, %v2029
      %v2708 = vsel %vm2682, %v2675, %v2031
      %v2710 = vsel %vm2682, %v2677, %v2033
      %v2712 = vsel %vm2682, %v2679, %v2035
      %v2714 = vsel %vm2682, %v2681, %v2037
      %vm2715 = vcmask 195584
      %v2717 = vsel %vm2715, %v2684, %v2119
      %v2719 = vsel %vm2715, %v2686, %v2121
      %v2721 = vsel %vm2715, %v2688, %v2123
      %v2723 = vsel %vm2715, %v2690, %v2125
      %v2725 = vsel %vm2715, %v2692, %v2127
      %v2727 = vsel %vm2715, %v2694, %v2129
      %v2729 = vsel %vm2715, %v2696, %v2131
      %v2731 = vsel %vm2715, %v2698, %v2133
      %v2733 = vsel %vm2715, %v2700, %v2135
      %v2735 = vsel %vm2715, %v2702, %v2137
      %v2737 = vsel %vm2715, %v2704, %v2139
      %v2739 = vsel %vm2715, %v2706, %v2141
      %v2741 = vsel %vm2715, %v2708, %v2143
      %v2743 = vsel %vm2715, %v2710, %v2145
      %v2745 = vsel %vm2715, %v2712, %v2147
      %v2747 = vsel %vm2715, %v2714, %v2149
      %vm2748 = vcmask 228352
      %v2750 = vsel %vm2748, %v2717, %v2391
      %v2752 = vsel %vm2748, %v2719, %v2393
      %v2754 = vsel %vm2748, %v2721, %v2395
      %v2756 = vsel %vm2748, %v2723, %v2397
      %v2758 = vsel %vm2748, %v2725, %v2399
      %v2760 = vsel %vm2748, %v2727, %v2401
      %v2762 = vsel %vm2748, %v2729, %v2403
      %v2764 = vsel %vm2748, %v2731, %v2405
      %v2766 = vsel %vm2748, %v2733, %v2407
      %v2768 = vsel %vm2748, %v2735, %v2409
      %v2770 = vsel %vm2748, %v2737, %v2411
      %v2772 = vsel %vm2748, %v2739, %v2413
      %v2774 = vsel %vm2748, %v2741, %v2415
      %v2776 = vsel %vm2748, %v2743, %v2417
      %v2778 = vsel %vm2748, %v2745, %v2419
      %v2780 = vsel %vm2748, %v2747, %v2421
      %vm2781 = vcmask 261120
      %v2783 = vsel %vm2781, %v2750, %v2519
      %v2785 = vsel %vm2781, %v2752, %v2521
      %v2787 = vsel %vm2781, %v2754, %v2523
      %v2789 = vsel %vm2781, %v2756, %v2525
      %v2791 = vsel %vm2781, %v2758, %v2527
      %v2793 = vsel %vm2781, %v2760, %v2529
      %v2795 = vsel %vm2781, %v2762, %v2531
      %v2797 = vsel %vm2781, %v2764, %v2533
      %v2799 = vsel %vm2781, %v2766, %v2535
      %v2801 = vsel %vm2781, %v2768, %v2537
      %v2803 = vsel %vm2781, %v2770, %v2539
      %v2805 = vsel %vm2781, %v2772, %v2541
      %v2807 = vsel %vm2781, %v2774, %v2543
      %v2809 = vsel %vm2781, %v2776, %v2545
      %v2811 = vsel %vm2781, %v2778, %v2547
      %v2813 = vsel %vm2781, %v2780, %v2549
      %v2814 = vld [vmem:[%s1] sm:$0xf]
      %v2815 = vld [vmem:[%s1 + $0x4] sm:$0xf]
      %v2816 = vld [vmem:[%s1 + $0x8] sm:$0xf]
      %v2817 = vld [vmem:[%s1 + $0xc] sm:$0xf]
      %v2818 = vld [vmem:[%s1 + $0x10] sm:$0x3]
      %v2819 = vld [vmem:[%s2] sm:$0x1]
      %v2821 = vlaneseq
      %v2822 = vshrl.u32 %v2821, 7
      %v2823 = vsub.s32 0, %v2822
      %v2824 = vrot.slane %v2819, %v2823
      %v2831 = vunpack.c.l.b16 %v2814
      %v2832 = vunpack.c.l.b16 %v2815
      %v2833 = vunpack.c.l.b16 %v2816
      %v2834 = vunpack.c.l.b16 %v2817
      %v2835 = vunpack.c.l.b16 %v2818
      %v2836 = vpack.c.b16 %v2832, %v2831
      %v2837 = vpack.c.b16 %v2834, %v2833
      %v2838 = vpack.c.b16 %v2835, %v2835
      %vm2841 = vcmask 293888
      %v2842 = vsel %vm2841, %v2783, 0
      %v2844 = vsel %vm2841, %v2785, 0
      %v2846 = vsel %vm2841, %v2787, 0
      %v2848 = vsel %vm2841, %v2789, 0
      %v2850 = vsel %vm2841, %v2791, 0
      %v2852 = vsel %vm2841, %v2793, 0
      %v2854 = vsel %vm2841, %v2795, 0
      %v2856 = vsel %vm2841, %v2797, 0
      %v2858 = vsel %vm2841, %v2799, 0
      %v2860 = vsel %vm2841, %v2801, 0
      %v2862 = vsel %vm2841, %v2803, 0
      %v2864 = vsel %vm2841, %v2805, 0
      %v2866 = vsel %vm2841, %v2807, 0
      %v2868 = vsel %vm2841, %v2809, 0
      %v2870 = vsel %vm2841, %v2811, 0
      %v2872 = vsel %vm2841, %v2813, 0
      %vm2874 = vcmask 1041408
      %v2876 = vsel %vm2874, %v2838, 0
      %2878 = vmatprep.subr.bf16.mxu0 0
      %2879 = vmatpush1.bf16.msra.mxu0 %v2836
      %2880 = vmatprep.subr.bf16.mxu0 0
      %2881 = vmatpush1.bf16.msra.mxu0 %v2837
      %2882 = vmatprep.subr.bf16.mxu0 0
      %2883 = vmatpush1.bf16.msra.mxu0 %v2876
      %2884 = vmatprep.subr.bf16.mxu0 0
      %2885 = vmatpush1.bf16.msra.mxu0 0
      %2886 = vmatprep.subr.bf16.mxu0 0
      %2887 = vmatpush1.bf16.msra.mxu0 0
      %2888 = vmatprep.subr.bf16.mxu0 0
      %2889 = vmatpush1.bf16.msra.mxu0 0
      %2890 = vmatprep.subr.bf16.mxu0 0
      %2891 = vmatpush1.bf16.msra.mxu0 0
      %2892 = vmatprep.subr.bf16.mxu0 0
      %2893 = vmatpush1.bf16.msra.mxu0 0
      %2894 = vmatprep.subr.bf16.mxu0 0
      %2895 = vmatpush1.bf16.msra.mxu0 0
      %2896 = vmatprep.subr.bf16.mxu0 0
      %2897 = vmatpush1.bf16.msra.mxu0 0
      %2898 = vmatprep.subr.bf16.mxu0 0
      %2899 = vmatpush1.bf16.msra.mxu0 0
      %2900 = vmatprep.subr.bf16.mxu0 0
      %2901 = vmatpush1.bf16.msra.mxu0 0
      %2902 = vmatprep.subr.bf16.mxu0 0
      %2903 = vmatpush1.bf16.msra.mxu0 0
      %2904 = vmatprep.subr.bf16.mxu0 0
      %2905 = vmatpush1.bf16.msra.mxu0 0
      %2906 = vmatprep.subr.bf16.mxu0 0
      %2907 = vmatpush1.bf16.msra.mxu0 0
      %2908 = vmatprep.subr.bf16.mxu0 0
      %2909 = vmatpush1.bf16.msra.mxu0 0
      %2910 = vmatprep.mubr.bf16.mxu0 0
      %2911 = vmatmul.mubr.bf16.gmra.mrb[0].mxu0 %v2842
      %v2912 = vpop.f32.mrb[0].mxu0
      %v2913 = vadd.f32 %v2824, %v2912
      %v2914 = vpop.f32.mrb[0].mxu0
      %v2915 = vpop.f32.mrb[0].mxu0
      %v2916 = vadd.f32 %v2824, %v2915
      %v2917 = vpop.f32.mrb[0].mxu0
      %2918 = vmatprep.mubr.bf16.mxu0 0
      %2919 = vmatmul.mubr.bf16.gmra.mrb[0].mxu0 %v2844
      %v2920 = vpop.f32.mrb[0].mxu0
      %v2921 = vadd.f32 %v2824, %v2920
      %v2922 = vpop.f32.mrb[0].mxu0
      %v2923 = vpop.f32.mrb[0].mxu0
      %v2924 = vadd.f32 %v2824, %v2923
      %v2925 = vpop.f32.mrb[0].mxu0
      %2926 = vmatprep.mubr.bf16.mxu0 0
      %2927 = vmatmul.mubr.bf16.gmra.mrb[0].mxu0 %v2846
      %v2928 = vpop.f32.mrb[0].mxu0
      %v2929 = vadd.f32 %v2824, %v2928
      %v2930 = vpop.f32.mrb[0].mxu0
      %v2931 = vpop.f32.mrb[0].mxu0
      %v2932 = vadd.f32 %v2824, %v2931
      %v2933 = vpop.f32.mrb[0].mxu0
      %2934 = vmatprep.mubr.bf16.mxu0 0
      %2935 = vmatmul.mubr.bf16.gmra.mrb[0].mxu0 %v2848
      %v2936 = vpop.f32.mrb[0].mxu0
      %v2937 = vadd.f32 %v2824, %v2936
      %v2938 = vpop.f32.mrb[0].mxu0
      %v2939 = vpop.f32.mrb[0].mxu0
      %v2940 = vadd.f32 %v2824, %v2939
      %v2941 = vpop.f32.mrb[0].mxu0
      %2942 = vmatprep.mubr.bf16.mxu0 0
      %2943 = vmatmul.mubr.bf16.gmra.mrb[0].mxu0 %v2850
      %v2944 = vpop.f32.mrb[0].mxu0
      %v2945 = vadd.f32 %v2824, %v2944
      %v2946 = vpop.f32.mrb[0].mxu0
      %v2947 = vpop.f32.mrb[0].mxu0
      %v2948 = vadd.f32 %v2824, %v2947
      %v2949 = vpop.f32.mrb[0].mxu0
      %2950 = vmatprep.mubr.bf16.mxu0 0
      %2951 = vmatmul.mubr.bf16.gmra.mrb[0].mxu0 %v2852
      %v2952 = vpop.f32.mrb[0].mxu0
      %v2953 = vadd.f32 %v2824, %v2952
      %v2954 = vpop.f32.mrb[0].mxu0
      %v2955 = vpop.f32.mrb[0].mxu0
      %v2956 = vadd.f32 %v2824, %v2955
      %v2957 = vpop.f32.mrb[0].mxu0
      %2958 = vmatprep.mubr.bf16.mxu0 0
      %2959 = vmatmul.mubr.bf16.gmra.mrb[0].mxu0 %v2854
      %v2960 = vpop.f32.mrb[0].mxu0
      %v2961 = vadd.f32 %v2824, %v2960
      %v2962 = vpop.f32.mrb[0].mxu0
      %v2963 = vpop.f32.mrb[0].mxu0
      %v2964 = vadd.f32 %v2824, %v2963
      %v2965 = vpop.f32.mrb[0].mxu0
      %2966 = vmatprep.mubr.bf16.mxu0 0
      %2967 = vmatmul.mubr.bf16.gmra.mrb[0].mxu0 %v2856
      %v2968 = vpop.f32.mrb[0].mxu0
      %v2969 = vadd.f32 %v2824, %v2968
      %v2970 = vpop.f32.mrb[0].mxu0
      %v2971 = vpop.f32.mrb[0].mxu0
      %v2972 = vadd.f32 %v2824, %v2971
      %v2973 = vpop.f32.mrb[0].mxu0
      %2974 = vmatprep.mubr.bf16.mxu0 0
      %2975 = vmatmul.mubr.bf16.gmra.mrb[0].mxu0 %v2858
      %v2976 = vpop.f32.mrb[0].mxu0
      %v2977 = vadd.f32 %v2824, %v2976
      %v2978 = vpop.f32.mrb[0].mxu0
      %v2979 = vpop.f32.mrb[0].mxu0
      %v2980 = vadd.f32 %v2824, %v2979
      %v2981 = vpop.f32.mrb[0].mxu0
      %2982 = vmatprep.mubr.bf16.mxu0 0
      %2983 = vmatmul.mubr.bf16.gmra.mrb[0].mxu0 %v2860
      %v2984 = vpop.f32.mrb[0].mxu0
      %v2985 = vadd.f32 %v2824, %v2984
      %v2986 = vpop.f32.mrb[0].mxu0
      %v2987 = vpop.f32.mrb[0].mxu0
      %v2988 = vadd.f32 %v2824, %v2987
      %v2989 = vpop.f32.mrb[0].mxu0
      %2990 = vmatprep.mubr.bf16.mxu0 0
      %2991 = vmatmul.mubr.bf16.gmra.mrb[0].mxu0 %v2862
      %v2992 = vpop.f32.mrb[0].mxu0
      %v2993 = vadd.f32 %v2824, %v2992
      %v2994 = vpop.f32.mrb[0].mxu0
      %v2995 = vpop.f32.mrb[0].mxu0
      %v2996 = vadd.f32 %v2824, %v2995
      %v2997 = vpop.f32.mrb[0].mxu0
      %2998 = vmatprep.mubr.bf16.mxu0 0
      %2999 = vmatmul.mubr.bf16.gmra.mrb[0].mxu0 %v2864
      %v3000 = vpop.f32.mrb[0].mxu0
      %v3001 = vadd.f32 %v2824, %v3000
      %v3002 = vpop.f32.mrb[0].mxu0
      %v3003 = vpop.f32.mrb[0].mxu0
      %v3004 = vadd.f32 %v2824, %v3003
      %v3005 = vpop.f32.mrb[0].mxu0
      %3006 = vmatprep.mubr.bf16.mxu0 0
      %3007 = vmatmul.mubr.bf16.gmra.mrb[0].mxu0 %v2866
      %v3008 = vpop.f32.mrb[0].mxu0
      %v3009 = vadd.f32 %v2824, %v3008
      %v3010 = vpop.f32.mrb[0].mxu0
      %v3011 = vpop.f32.mrb[0].mxu0
      %v3012 = vadd.f32 %v2824, %v3011
      %v3013 = vpop.f32.mrb[0].mxu0
      %3014 = vmatprep.mubr.bf16.mxu0 0
      %3015 = vmatmul.mubr.bf16.gmra.mrb[0].mxu0 %v2868
      %v3016 = vpop.f32.mrb[0].mxu0
      %v3017 = vadd.f32 %v2824, %v3016
      %v3018 = vpop.f32.mrb[0].mxu0
      %v3019 = vpop.f32.mrb[0].mxu0
      %v3020 = vadd.f32 %v2824, %v3019
      %v3021 = vpop.f32.mrb[0].mxu0
      %3022 = vmatprep.mubr.bf16.mxu0 0
      %3023 = vmatmul.mubr.bf16.gmra.mrb[0].mxu0 %v2870
      %v3024 = vpop.f32.mrb[0].mxu0
      %v3025 = vadd.f32 %v2824, %v3024
      %v3026 = vpop.f32.mrb[0].mxu0
      %v3027 = vpop.f32.mrb[0].mxu0
      %v3028 = vadd.f32 %v2824, %v3027
      %v3029 = vpop.f32.mrb[0].mxu0
      %3030 = vmatprep.mubr.bf16.mxu0 0
      %3031 = vmatmul.mubr.bf16.gmra.mrb[0].mxu0 %v2872
      %v3032 = vpop.f32.mrb[0].mxu0
      %v3033 = vadd.f32 %v2824, %v3032
      %v3034 = vpop.f32.mrb[0].mxu0
      %v3035 = vpop.f32.mrb[0].mxu0
      %v3036 = vadd.f32 %v2824, %v3035
      %v3037 = vpop.f32.mrb[0].mxu0
      %3038 = vdwg.mxu0
      %vm3039 = vcmp.ge.f32.partialorder %v2913, 0.0
      %vm3040 = vcmp.ge.f32.partialorder %v2916, 0.0
      %vm3041 = vcmp.ge.f32.partialorder %v2921, 0.0
      %vm3042 = vcmp.ge.f32.partialorder %v2924, 0.0
      %vm3043 = vcmp.ge.f32.partialorder %v2929, 0.0
      %vm3044 = vcmp.ge.f32.partialorder %v2932, 0.0
      %vm3045 = vcmp.ge.f32.partialorder %v2937, 0.0
      %vm3046 = vcmp.ge.f32.partialorder %v2940, 0.0
      %vm3047 = vcmp.ge.f32.partialorder %v2945, 0.0
      %vm3048 = vcmp.ge.f32.partialorder %v2948, 0.0
      %vm3049 = vcmp.ge.f32.partialorder %v2953, 0.0
      %vm3050 = vcmp.ge.f32.partialorder %v2956, 0.0
      %vm3051 = vcmp.ge.f32.partialorder %v2961, 0.0
      %vm3052 = vcmp.ge.f32.partialorder %v2964, 0.0
      %vm3053 = vcmp.ge.f32.partialorder %v2969, 0.0
      %vm3054 = vcmp.ge.f32.partialorder %v2972, 0.0
      %vm3055 = vcmp.ge.f32.partialorder %v2977, 0.0
      %vm3056 = vcmp.ge.f32.partialorder %v2980, 0.0
      %vm3057 = vcmp.ge.f32.partialorder %v2985, 0.0
      %vm3058 = vcmp.ge.f32.partialorder %v2988, 0.0
      %vm3059 = vcmp.ge.f32.partialorder %v2993, 0.0
      %vm3060 = vcmp.ge.f32.partialorder %v2996, 0.0
      %vm3061 = vcmp.ge.f32.partialorder %v3001, 0.0
      %vm3062 = vcmp.ge.f32.partialorder %v3004, 0.0
      %vm3063 = vcmp.ge.f32.partialorder %v3009, 0.0
      %vm3064 = vcmp.ge.f32.partialorder %v3012, 0.0
      %vm3065 = vcmp.ge.f32.partialorder %v3017, 0.0
      %vm3066 = vcmp.ge.f32.partialorder %v3020, 0.0
      %vm3067 = vcmp.ge.f32.partialorder %v3025, 0.0
      %vm3068 = vcmp.ge.f32.partialorder %v3028, 0.0
      %vm3069 = vcmp.ge.f32.partialorder %v3033, 0.0
      %vm3070 = vcmp.ge.f32.partialorder %v3036, 0.0
      %v3071 = vmul.f32 %v2913, 0.01
      %v3072 = vmul.f32 %v2916, 0.01
      %v3073 = vmul.f32 %v2921, 0.01
      %v3074 = vmul.f32 %v2924, 0.01
      %v3075 = vmul.f32 %v2929, 0.01
      %v3076 = vmul.f32 %v2932, 0.01
      %v3077 = vmul.f32 %v2937, 0.01
      %v3078 = vmul.f32 %v2940, 0.01
      %v3079 = vmul.f32 %v2945, 0.01
      %v3080 = vmul.f32 %v2948, 0.01
      %v3081 = vmul.f32 %v2953, 0.01
      %v3082 = vmul.f32 %v2956, 0.01
      %v3083 = vmul.f32 %v2961, 0.01
      %v3084 = vmul.f32 %v2964, 0.01
      %v3085 = vmul.f32 %v2969, 0.01
      %v3086 = vmul.f32 %v2972, 0.01
      %v3087 = vmul.f32 %v2977, 0.01
      %v3088 = vmul.f32 %v2980, 0.01
      %v3089 = vmul.f32 %v2985, 0.01
      %v3090 = vmul.f32 %v2988, 0.01
      %v3091 = vmul.f32 %v2993, 0.01
      %v3092 = vmul.f32 %v2996, 0.01
      %v3093 = vmul.f32 %v3001, 0.01
      %v3094 = vmul.f32 %v3004, 0.01
      %v3095 = vmul.f32 %v3009, 0.01
      %v3096 = vmul.f32 %v3012, 0.01
      %v3097 = vmul.f32 %v3017, 0.01
      %v3098 = vmul.f32 %v3020, 0.01
      %v3099 = vmul.f32 %v3025, 0.01
      %v3100 = vmul.f32 %v3028, 0.01
      %v3101 = vmul.f32 %v3033, 0.01
      %v3102 = vmul.f32 %v3036, 0.01
      %v3103 = vsel %vm3039, %v2913, %v3071
      %v3104 = vsel %vm3040, %v2916, %v3072
      %v3105 = vsel %vm3041, %v2921, %v3073
      %v3106 = vsel %vm3042, %v2924, %v3074
      %v3107 = vsel %vm3043, %v2929, %v3075
      %v3108 = vsel %vm3044, %v2932, %v3076
      %v3109 = vsel %vm3045, %v2937, %v3077
      %v3110 = vsel %vm3046, %v2940, %v3078
      %v3111 = vsel %vm3047, %v2945, %v3079
      %v3112 = vsel %vm3048, %v2948, %v3080
      %v3113 = vsel %vm3049, %v2953, %v3081
      %v3114 = vsel %vm3050, %v2956, %v3082
      %v3115 = vsel %vm3051, %v2961, %v3083
      %v3116 = vsel %vm3052, %v2964, %v3084
      %v3117 = vsel %vm3053, %v2969, %v3085
      %v3118 = vsel %vm3054, %v2972, %v3086
      %v3119 = vsel %vm3055, %v2977, %v3087
      %v3120 = vsel %vm3056, %v2980, %v3088
      %v3121 = vsel %vm3057, %v2985, %v3089
      %v3122 = vsel %vm3058, %v2988, %v3090
      %v3123 = vsel %vm3059, %v2993, %v3091
      %v3124 = vsel %vm3060, %v2996, %v3092
      %v3125 = vsel %vm3061, %v3001, %v3093
      %v3126 = vsel %vm3062, %v3004, %v3094
      %v3127 = vsel %vm3063, %v3009, %v3095
      %v3128 = vsel %vm3064, %v3012, %v3096
      %v3129 = vsel %vm3065, %v3017, %v3097
      %v3130 = vsel %vm3066, %v3020, %v3098
      %v3131 = vsel %vm3067, %v3025, %v3099
      %v3132 = vsel %vm3068, %v3028, %v3100
      %v3133 = vsel %vm3069, %v3033, %v3101
      %v3134 = vsel %vm3070, %v3036, %v3102
      %vm3135 = vcmask 60416
      %3136 = vst.msk [vmem:[#allocation3] sm:$0xf] %vm3135, 0
      %3137 = vst.msk [vmem:[#allocation3 + $0x4] sm:$0xf] %vm3135, 0
      %vm3138 = vcmask 57344
      %3139 = vst.msk [vmem:[#allocation3 + $0x8] sm:$0x1] %vm3138, 0
      %3140 = vst.msk [vmem:[#allocation3 + $0xc] sm:$0xf] %vm3135, 0
      %3141 = vst.msk [vmem:[#allocation3 + $0x10] sm:$0xf] %vm3135, 0
      %3142 = vst.msk [vmem:[#allocation3 + $0x14] sm:$0x1] %vm3138, 0
      %3143 = vst.msk [vmem:[#allocation3 + $0x18] sm:$0xf] %vm3135, 0
      %3144 = vst.msk [vmem:[#allocation3 + $0x1c] sm:$0xf] %vm3135, 0
      %3145 = vst.msk [vmem:[#allocation3 + $0x20] sm:$0x1] %vm3138, 0
      %3146 = vst.msk [vmem:[#allocation3 + $0x24] sm:$0xf] %vm3135, 0
      %3147 = vst.msk [vmem:[#allocation3 + $0x28] sm:$0xf] %vm3135, 0
      %3148 = vst.msk [vmem:[#allocation3 + $0x2c] sm:$0x1] %vm3138, 0
      %3149 = vst.msk [vmem:[#allocation3 + $0x30] sm:$0xf] %vm3135, 0
      %3150 = vst.msk [vmem:[#allocation3 + $0x34] sm:$0xf] %vm3135, 0
      %3151 = vst.msk [vmem:[#allocation3 + $0x38] sm:$0x1] %vm3138, 0
      %3152 = vst.msk [vmem:[#allocation3 + $0x3c] sm:$0xf] %vm3135, 0
      %3153 = vst.msk [vmem:[#allocation3 + $0x40] sm:$0xf] %vm3135, 0
      %3154 = vst.msk [vmem:[#allocation3 + $0x44] sm:$0x1] %vm3138, 0
      %3155 = vst.msk [vmem:[#allocation3 + $0x48] sm:$0xf] %vm3135, 0
      %3156 = vst.msk [vmem:[#allocation3 + $0x4c] sm:$0xf] %vm3135, 0
      %3157 = vst.msk [vmem:[#allocation3 + $0x50] sm:$0x1] %vm3138, 0
      %3158 = vst.msk [vmem:[#allocation3 + $0x54] sm:$0xf] %vm3135, 0
      %3159 = vst.msk [vmem:[#allocation3 + $0x58] sm:$0xf] %vm3135, 0
      %3160 = vst.msk [vmem:[#allocation3 + $0x5c] sm:$0x1] %vm3138, 0
      %3161 = vst.msk [vmem:[#allocation3 + $0x60] sm:$0xf] %vm3135, 0
      %3162 = vst.msk [vmem:[#allocation3 + $0x64] sm:$0xf] %vm3135, 0
      %3163 = vst.msk [vmem:[#allocation3 + $0x68] sm:$0x1] %vm3138, 0
      %3164 = vst.msk [vmem:[#allocation3 + $0x6c] sm:$0xf] %vm3135, 0
      %3165 = vst.msk [vmem:[#allocation3 + $0x70] sm:$0xf] %vm3135, 0
      %3166 = vst.msk [vmem:[#allocation3 + $0x74] sm:$0x1] %vm3138, 0
      %3167 = vst.msk [vmem:[#allocation3 + $0x78] sm:$0xf] %vm3135, 0
      %3168 = vst.msk [vmem:[#allocation3 + $0x7c] sm:$0xf] %vm3135, 0
      %3169 = vst.msk [vmem:[#allocation3 + $0x80] sm:$0x1] %vm3138, 0
      %3170 = vst.msk [vmem:[#allocation3 + $0x84] sm:$0xf] %vm3135, 0
      %3171 = vst.msk [vmem:[#allocation3 + $0x88] sm:$0xf] %vm3135, 0
      %3172 = vst.msk [vmem:[#allocation3 + $0x8c] sm:$0x1] %vm3138, 0
      %3173 = vst.msk [vmem:[#allocation3 + $0x90] sm:$0xf] %vm3135, 0
      %3174 = vst.msk [vmem:[#allocation3 + $0x94] sm:$0xf] %vm3135, 0
      %3175 = vst.msk [vmem:[#allocation3 + $0x98] sm:$0x1] %vm3138, 0
      %3176 = vst.msk [vmem:[#allocation3 + $0x9c] sm:$0xf] %vm3135, 0
      %3177 = vst.msk [vmem:[#allocation3 + $0xa0] sm:$0xf] %vm3135, 0
      %3178 = vst.msk [vmem:[#allocation3 + $0xa4] sm:$0x1] %vm3138, 0
      %3179 = vst.msk [vmem:[#allocation3 + $0xa8] sm:$0xf] %vm3135, 0
      %3180 = vst.msk [vmem:[#allocation3 + $0xac] sm:$0xf] %vm3135, 0
      %3181 = vst.msk [vmem:[#allocation3 + $0xb0] sm:$0x1] %vm3138, 0
      %3182 = vst.msk [vmem:[#allocation3 + $0xb4] sm:$0xf] %vm3135, 0
      %3183 = vst.msk [vmem:[#allocation3 + $0xb8] sm:$0xf] %vm3135, 0
      %3184 = vst.msk [vmem:[#allocation3 + $0xbc] sm:$0x1] %vm3138, 0
      %3185 = vst.msk [vmem:[#allocation3 + $0xc0] sm:$0xf] %vm3135, 0
      %3186 = vst.msk [vmem:[#allocation3 + $0xc4] sm:$0xf] %vm3135, 0
      %3187 = vst.msk [vmem:[#allocation3 + $0xc8] sm:$0x1] %vm3138, 0
      %3188 = vst.msk [vmem:[#allocation3 + $0xcc] sm:$0xf] %vm3135, 0
      %3189 = vst.msk [vmem:[#allocation3 + $0xd0] sm:$0xf] %vm3135, 0
      %3190 = vst.msk [vmem:[#allocation3 + $0xd4] sm:$0x1] %vm3138, 0
      %v3191 = vpack.c.bf16 %v3104, %v3103
      %v3192 = vpack.c.bf16 %v3106, %v3105
      %v3193 = vpack.c.bf16 %v3108, %v3107
      %v3194 = vpack.c.bf16 %v3110, %v3109
      %v3195 = vpack.c.bf16 %v3112, %v3111
      %v3196 = vpack.c.bf16 %v3114, %v3113
      %v3197 = vpack.c.bf16 %v3116, %v3115
      %v3198 = vpack.c.bf16 %v3118, %v3117
      %v3199 = vpack.c.bf16 %v3120, %v3119
      %v3200 = vpack.c.bf16 %v3122, %v3121
      %v3201 = vpack.c.bf16 %v3124, %v3123
      %v3202 = vpack.c.bf16 %v3126, %v3125
      %v3203 = vpack.c.bf16 %v3128, %v3127
      %v3204 = vpack.c.bf16 %v3130, %v3129
      %v3205 = vpack.c.bf16 %v3132, %v3131
      %v3206 = vpack.c.bf16 %v3134, %v3133
      %v3223 = vunpack.c.l.b16 %v3191
      %v3224 = vunpack.c.h.b16 %v3191
      %v3225 = vunpack.c.l.b16 %v3192
      %v3226 = vunpack.c.h.b16 %v3192
      %v3227 = vunpack.c.l.b16 %v3193
      %v3228 = vunpack.c.h.b16 %v3193
      %v3229 = vunpack.c.l.b16 %v3194
      %v3230 = vunpack.c.h.b16 %v3194
      %v3231 = vunpack.c.l.b16 %v3195
      %v3232 = vunpack.c.h.b16 %v3195
      %v3233 = vunpack.c.l.b16 %v3196
      %v3234 = vunpack.c.h.b16 %v3196
      %v3235 = vunpack.c.l.b16 %v3197
      %v3236 = vunpack.c.h.b16 %v3197
      %v3237 = vunpack.c.l.b16 %v3198
      %v3238 = vunpack.c.h.b16 %v3198
      %v3239 = vunpack.c.l.b16 %v3199
      %v3240 = vunpack.c.h.b16 %v3199
      %v3241 = vunpack.c.l.b16 %v3200
      %v3242 = vunpack.c.h.b16 %v3200
      %v3243 = vunpack.c.l.b16 %v3201
      %v3244 = vunpack.c.h.b16 %v3201
      %v3245 = vunpack.c.l.b16 %v3202
      %v3246 = vunpack.c.h.b16 %v3202
      %v3247 = vunpack.c.l.b16 %v3203
      %v3248 = vunpack.c.h.b16 %v3203
      %v3249 = vunpack.c.l.b16 %v3204
      %v3250 = vunpack.c.h.b16 %v3204
      %v3251 = vunpack.c.l.b16 %v3205
      %v3252 = vunpack.c.h.b16 %v3205
      %v3253 = vunpack.c.l.b16 %v3206
      %v3254 = vunpack.c.h.b16 %v3206
      %v3255 = vpack.c.b16 %v3223, %v3223
      %v3256 = vpack.c.b16 %v3224, %v3224
      %v3257 = vpack.c.b16 %v3225, %v3225
      %v3258 = vpack.c.b16 %v3226, %v3226
      %v3259 = vpack.c.b16 %v3227, %v3227
      %v3260 = vpack.c.b16 %v3228, %v3228
      %v3261 = vpack.c.b16 %v3229, %v3229
      %v3262 = vpack.c.b16 %v3230, %v3230
      %v3263 = vpack.c.b16 %v3231, %v3231
      %v3264 = vpack.c.b16 %v3232, %v3232
      %v3265 = vpack.c.b16 %v3233, %v3233
      %v3266 = vpack.c.b16 %v3234, %v3234
      %v3267 = vpack.c.b16 %v3235, %v3235
      %v3268 = vpack.c.b16 %v3236, %v3236
      %v3269 = vpack.c.b16 %v3237, %v3237
      %v3270 = vpack.c.b16 %v3238, %v3238
      %v3271 = vpack.c.b16 %v3239, %v3239
      %v3272 = vpack.c.b16 %v3240, %v3240
      %v3273 = vpack.c.b16 %v3241, %v3241
      %v3274 = vpack.c.b16 %v3242, %v3242
      %v3275 = vpack.c.b16 %v3243, %v3243
      %v3276 = vpack.c.b16 %v3244, %v3244
      %v3277 = vpack.c.b16 %v3245, %v3245
      %v3278 = vpack.c.b16 %v3246, %v3246
      %v3279 = vpack.c.b16 %v3247, %v3247
      %v3280 = vpack.c.b16 %v3248, %v3248
      %v3281 = vpack.c.b16 %v3249, %v3249
      %v3282 = vpack.c.b16 %v3250, %v3250
      %v3283 = vpack.c.b16 %v3251, %v3251
      %v3284 = vpack.c.b16 %v3252, %v3252
      %v3285 = vpack.c.b16 %v3253, %v3253
      %v3286 = vpack.c.b16 %v3254, %v3254
      %v3288 = vshrl.u32 %v3255, 16
      %v3290 = vrot.slane %v3288, 7
      %v3291 = vshll.u32 %v3255, 16
      %v3293 = vor.u32 %v3290, %v3291
      %v3294 = vrot.slane %v3290, 4
      %v3296 = vshrl.u32 %v3256, 16
      %v3298 = vrot.slane %v3296, 7
      %v3299 = vshll.u32 %v3256, 16
      %v3301 = vor.u32 %v3298, %v3299
      %v3302 = vsel %vm412, %v3294, %v3301
      %v3303 = vrot.slane %v3298, 4
      %v3305 = vshrl.u32 %v3257, 16
      %v3307 = vrot.slane %v3305, 7
      %v3308 = vshll.u32 %v3257, 16
      %v3310 = vor.u32 %v3307, %v3308
      %v3311 = vrot.slane %v3307, 4
      %v3313 = vshrl.u32 %v3258, 16
      %v3315 = vrot.slane %v3313, 7
      %v3316 = vshll.u32 %v3258, 16
      %v3318 = vor.u32 %v3315, %v3316
      %v3319 = vsel %vm412, %v3311, %v3318
      %v3320 = vrot.slane %v3315, 4
      %v3322 = vshrl.u32 %v3259, 16
      %v3324 = vrot.slane %v3322, 7
      %v3325 = vshll.u32 %v3259, 16
      %v3327 = vor.u32 %v3324, %v3325
      %v3328 = vrot.slane %v3324, 4
      %v3330 = vshrl.u32 %v3260, 16
      %v3332 = vrot.slane %v3330, 7
      %v3333 = vshll.u32 %v3260, 16
      %v3335 = vor.u32 %v3332, %v3333
      %v3336 = vsel %vm412, %v3328, %v3335
      %v3337 = vrot.slane %v3332, 4
      %v3339 = vshrl.u32 %v3261, 16
      %v3341 = vrot.slane %v3339, 7
      %v3342 = vshll.u32 %v3261, 16
      %v3344 = vor.u32 %v3341, %v3342
      %v3345 = vrot.slane %v3341, 4
      %v3347 = vshrl.u32 %v3262, 16
      %v3349 = vrot.slane %v3347, 7
      %v3350 = vshll.u32 %v3262, 16
      %v3352 = vor.u32 %v3349, %v3350
      %v3353 = vsel %vm412, %v3345, %v3352
      %v3354 = vrot.slane %v3349, 4
      %v3356 = vshrl.u32 %v3263, 16
      %v3358 = vrot.slane %v3356, 7
      %v3359 = vshll.u32 %v3263, 16
      %v3361 = vor.u32 %v3358, %v3359
      %v3362 = vrot.slane %v3358, 4
      %v3364 = vshrl.u32 %v3264, 16
      %v3366 = vrot.slane %v3364, 7
      %v3367 = vshll.u32 %v3264, 16
      %v3369 = vor.u32 %v3366, %v3367
      %v3370 = vsel %vm412, %v3362, %v3369
      %v3371 = vrot.slane %v3366, 4
      %v3373 = vshrl.u32 %v3265, 16
      %v3375 = vrot.slane %v3373, 7
      %v3376 = vshll.u32 %v3265, 16
      %v3378 = vor.u32 %v3375, %v3376
      %v3379 = vrot.slane %v3375, 4
      %v3381 = vshrl.u32 %v3266, 16
      %v3383 = vrot.slane %v3381, 7
      %v3384 = vshll.u32 %v3266, 16
      %v3386 = vor.u32 %v3383, %v3384
      %v3387 = vsel %vm412, %v3379, %v3386
      %v3388 = vrot.slane %v3383, 4
      %v3390 = vshrl.u32 %v3267, 16
      %v3392 = vrot.slane %v3390, 7
      %v3393 = vshll.u32 %v3267, 16
      %v3395 = vor.u32 %v3392, %v3393
      %v3396 = vrot.slane %v3392, 4
      %v3398 = vshrl.u32 %v3268, 16
      %v3400 = vrot.slane %v3398, 7
      %v3401 = vshll.u32 %v3268, 16
      %v3403 = vor.u32 %v3400, %v3401
      %v3404 = vsel %vm412, %v3396, %v3403
      %v3405 = vrot.slane %v3400, 4
      %v3407 = vshrl.u32 %v3269, 16
      %v3409 = vrot.slane %v3407, 7
      %v3410 = vshll.u32 %v3269, 16
      %v3412 = vor.u32 %v3409, %v3410
      %v3413 = vrot.slane %v3409, 4
      %v3415 = vshrl.u32 %v3270, 16
      %v3417 = vrot.slane %v3415, 7
      %v3418 = vshll.u32 %v3270, 16
      %v3420 = vor.u32 %v3417, %v3418
      %v3421 = vsel %vm412, %v3413, %v3420
      %v3422 = vrot.slane %v3417, 4
      %v3424 = vshrl.u32 %v3271, 16
      %v3426 = vrot.slane %v3424, 7
      %v3427 = vshll.u32 %v3271, 16
      %v3429 = vor.u32 %v3426, %v3427
      %v3430 = vrot.slane %v3426, 4
      %v3432 = vshrl.u32 %v3272, 16
      %v3434 = vrot.slane %v3432, 7
      %v3435 = vshll.u32 %v3272, 16
      %v3437 = vor.u32 %v3434, %v3435
      %v3438 = vsel %vm412, %v3430, %v3437
      %v3439 = vrot.slane %v3434, 4
      %v3441 = vshrl.u32 %v3273, 16
      %v3443 = vrot.slane %v3441, 7
      %v3444 = vshll.u32 %v3273, 16
      %v3446 = vor.u32 %v3443, %v3444
      %v3447 = vrot.slane %v3443, 4
      %v3449 = vshrl.u32 %v3274, 16
      %v3451 = vrot.slane %v3449, 7
      %v3452 = vshll.u32 %v3274, 16
      %v3454 = vor.u32 %v3451, %v3452
      %v3455 = vsel %vm412, %v3447, %v3454
      %v3456 = vrot.slane %v3451, 4
      %v3458 = vshrl.u32 %v3275, 16
      %v3460 = vrot.slane %v3458, 7
      %v3461 = vshll.u32 %v3275, 16
      %v3463 = vor.u32 %v3460, %v3461
      %v3464 = vrot.slane %v3460, 4
      %v3466 = vshrl.u32 %v3276, 16
      %v3468 = vrot.slane %v3466, 7
      %v3469 = vshll.u32 %v3276, 16
      %v3471 = vor.u32 %v3468, %v3469
      %v3472 = vsel %vm412, %v3464, %v3471
      %v3473 = vrot.slane %v3468, 4
      %v3475 = vshrl.u32 %v3277, 16
      %v3477 = vrot.slane %v3475, 7
      %v3478 = vshll.u32 %v3277, 16
      %v3480 = vor.u32 %v3477, %v3478
      %v3481 = vrot.slane %v3477, 4
      %v3483 = vshrl.u32 %v3278, 16
      %v3485 = vrot.slane %v3483, 7
      %v3486 = vshll.u32 %v3278, 16
      %v3488 = vor.u32 %v3485, %v3486
      %v3489 = vsel %vm412, %v3481, %v3488
      %v3490 = vrot.slane %v3485, 4
      %v3492 = vshrl.u32 %v3279, 16
      %v3494 = vrot.slane %v3492, 7
      %v3495 = vshll.u32 %v3279, 16
      %v3497 = vor.u32 %v3494, %v3495
      %v3498 = vrot.slane %v3494, 4
      %v3500 = vshrl.u32 %v3280, 16
      %v3502 = vrot.slane %v3500, 7
      %v3503 = vshll.u32 %v3280, 16
      %v3505 = vor.u32 %v3502, %v3503
      %v3506 = vsel %vm412, %v3498, %v3505
      %v3507 = vrot.slane %v3502, 4
      %v3509 = vshrl.u32 %v3281, 16
      %v3511 = vrot.slane %v3509, 7
      %v3512 = vshll.u32 %v3281, 16
      %v3514 = vor.u32 %v3511, %v3512
      %v3515 = vrot.slane %v3511, 4
      %v3517 = vshrl.u32 %v3282, 16
      %v3519 = vrot.slane %v3517, 7
      %v3520 = vshll.u32 %v3282, 16
      %v3522 = vor.u32 %v3519, %v3520
      %v3523 = vsel %vm412, %v3515, %v3522
      %v3524 = vrot.slane %v3519, 4
      %v3526 = vshrl.u32 %v3283, 16
      %v3528 = vrot.slane %v3526, 7
      %v3529 = vshll.u32 %v3283, 16
      %v3531 = vor.u32 %v3528, %v3529
      %v3532 = vrot.slane %v3528, 4
      %v3534 = vshrl.u32 %v3284, 16
      %v3536 = vrot.slane %v3534, 7
      %v3537 = vshll.u32 %v3284, 16
      %v3539 = vor.u32 %v3536, %v3537
      %v3540 = vsel %vm412, %v3532, %v3539
      %v3541 = vrot.slane %v3536, 4
      %v3543 = vshrl.u32 %v3285, 16
      %v3545 = vrot.slane %v3543, 7
      %v3546 = vshll.u32 %v3285, 16
      %v3548 = vor.u32 %v3545, %v3546
      %v3549 = vrot.slane %v3545, 4
      %v3551 = vshrl.u32 %v3286, 16
      %v3553 = vrot.slane %v3551, 7
      %v3554 = vshll.u32 %v3286, 16
      %v3556 = vor.u32 %v3553, %v3554
      %v3557 = vsel %vm412, %v3549, %v3556
      %v3558 = vrot.slane %v3553, 4
      %s3607 = scalar_lea.vmem [#allocation3], 12
      %vm3608 = vcmask 60416
      %vm3609 = vmand %vm3608, %vm735
      %v3610 = vld [vmem:[%s3607] sm:$0xf]
      %v3611 = vsel %vm3609, %v3293, %v3610
      %3612 = vst [vmem:[%s3607] sm:$0xf] %v3611
      %3613 = vst.msk [vmem:[%s3607 + $0x4] sm:$0xf] %vm3135, %v3302
      %vm3614 = vcmask 57344
      %vm3615 = vmand %vm3614, %vm410
      %v3616 = vld [vmem:[%s3607 + $0x8] sm:$0x1]
      %v3617 = vsel %vm3615, %v3303, %v3616
      %3618 = vst [vmem:[%s3607 + $0x8] sm:$0x1] %v3617
      %v3619 = vld [vmem:[%s3607 + $0xc] sm:$0xf]
      %v3620 = vsel %vm3609, %v3310, %v3619
      %3621 = vst [vmem:[%s3607 + $0xc] sm:$0xf] %v3620
      %3622 = vst.msk [vmem:[%s3607 + $0x10] sm:$0xf] %vm3135, %v3319
      %v3623 = vld [vmem:[%s3607 + $0x14] sm:$0x1]
      %v3624 = vsel %vm3615, %v3320, %v3623
      %3625 = vst [vmem:[%s3607 + $0x14] sm:$0x1] %v3624
      %v3626 = vld [vmem:[%s3607 + $0x18] sm:$0xf]
      %v3627 = vsel %vm3609, %v3327, %v3626
      %3628 = vst [vmem:[%s3607 + $0x18] sm:$0xf] %v3627
      %3629 = vst.msk [vmem:[%s3607 + $0x1c] sm:$0xf] %vm3135, %v3336
      %v3630 = vld [vmem:[%s3607 + $0x20] sm:$0x1]
      %v3631 = vsel %vm3615, %v3337, %v3630
      %3632 = vst [vmem:[%s3607 + $0x20] sm:$0x1] %v3631
      %v3633 = vld [vmem:[%s3607 + $0x24] sm:$0xf]
      %v3634 = vsel %vm3609, %v3344, %v3633
      %3635 = vst [vmem:[%s3607 + $0x24] sm:$0xf] %v3634
      %3636 = vst.msk [vmem:[%s3607 + $0x28] sm:$0xf] %vm3135, %v3353
      %v3637 = vld [vmem:[%s3607 + $0x2c] sm:$0x1]
      %v3638 = vsel %vm3615, %v3354, %v3637
      %3639 = vst [vmem:[%s3607 + $0x2c] sm:$0x1] %v3638
      %v3640 = vld [vmem:[%s3607 + $0x30] sm:$0xf]
      %v3641 = vsel %vm3609, %v3361, %v3640
      %3642 = vst [vmem:[%s3607 + $0x30] sm:$0xf] %v3641
      %3643 = vst.msk [vmem:[%s3607 + $0x34] sm:$0xf] %vm3135, %v3370
      %v3644 = vld [vmem:[%s3607 + $0x38] sm:$0x1]
      %v3645 = vsel %vm3615, %v3371, %v3644
      %3646 = vst [vmem:[%s3607 + $0x38] sm:$0x1] %v3645
      %v3647 = vld [vmem:[%s3607 + $0x3c] sm:$0xf]
      %v3648 = vsel %vm3609, %v3378, %v3647
      %3649 = vst [vmem:[%s3607 + $0x3c] sm:$0xf] %v3648
      %3650 = vst.msk [vmem:[%s3607 + $0x40] sm:$0xf] %vm3135, %v3387
      %v3651 = vld [vmem:[%s3607 + $0x44] sm:$0x1]
      %v3652 = vsel %vm3615, %v3388, %v3651
      %3653 = vst [vmem:[%s3607 + $0x44] sm:$0x1] %v3652
      %v3654 = vld [vmem:[%s3607 + $0x48] sm:$0xf]
      %v3655 = vsel %vm3609, %v3395, %v3654
      %3656 = vst [vmem:[%s3607 + $0x48] sm:$0xf] %v3655
      %3657 = vst.msk [vmem:[%s3607 + $0x4c] sm:$0xf] %vm3135, %v3404
      %v3658 = vld [vmem:[%s3607 + $0x50] sm:$0x1]
      %v3659 = vsel %vm3615, %v3405, %v3658
      %3660 = vst [vmem:[%s3607 + $0x50] sm:$0x1] %v3659
      %v3661 = vld [vmem:[%s3607 + $0x54] sm:$0xf]
      %v3662 = vsel %vm3609, %v3412, %v3661
      %3663 = vst [vmem:[%s3607 + $0x54] sm:$0xf] %v3662
      %3664 = vst.msk [vmem:[%s3607 + $0x58] sm:$0xf] %vm3135, %v3421
      %v3665 = vld [vmem:[%s3607 + $0x5c] sm:$0x1]
      %v3666 = vsel %vm3615, %v3422, %v3665
      %3667 = vst [vmem:[%s3607 + $0x5c] sm:$0x1] %v3666
      %v3668 = vld [vmem:[%s3607 + $0x60] sm:$0xf]
      %v3669 = vsel %vm3609, %v3429, %v3668
      %3670 = vst [vmem:[%s3607 + $0x60] sm:$0xf] %v3669
      %3671 = vst.msk [vmem:[%s3607 + $0x64] sm:$0xf] %vm3135, %v3438
      %v3672 = vld [vmem:[%s3607 + $0x68] sm:$0x1]
      %v3673 = vsel %vm3615, %v3439, %v3672
      %3674 = vst [vmem:[%s3607 + $0x68] sm:$0x1] %v3673
      %v3675 = vld [vmem:[%s3607 + $0x6c] sm:$0xf]
      %v3676 = vsel %vm3609, %v3446, %v3675
      %3677 = vst [vmem:[%s3607 + $0x6c] sm:$0xf] %v3676
      %3678 = vst.msk [vmem:[%s3607 + $0x70] sm:$0xf] %vm3135, %v3455
      %v3679 = vld [vmem:[%s3607 + $0x74] sm:$0x1]
      %v3680 = vsel %vm3615, %v3456, %v3679
      %3681 = vst [vmem:[%s3607 + $0x74] sm:$0x1] %v3680
      %v3682 = vld [vmem:[%s3607 + $0x78] sm:$0xf]
      %v3683 = vsel %vm3609, %v3463, %v3682
      %3684 = vst [vmem:[%s3607 + $0x78] sm:$0xf] %v3683
      %3685 = vst.msk [vmem:[%s3607 + $0x7c] sm:$0xf] %vm3135, %v3472
      %v3686 = vld [vmem:[%s3607 + $0x80] sm:$0x1]
      %v3687 = vsel %vm3615, %v3473, %v3686
      %3688 = vst [vmem:[%s3607 + $0x80] sm:$0x1] %v3687
      %v3689 = vld [vmem:[%s3607 + $0x84] sm:$0xf]
      %v3690 = vsel %vm3609, %v3480, %v3689
      %3691 = vst [vmem:[%s3607 + $0x84] sm:$0xf] %v3690
      %3692 = vst.msk [vmem:[%s3607 + $0x88] sm:$0xf] %vm3135, %v3489
      %v3693 = vld [vmem:[%s3607 + $0x8c] sm:$0x1]
      %v3694 = vsel %vm3615, %v3490, %v3693
      %3695 = vst [vmem:[%s3607 + $0x8c] sm:$0x1] %v3694
      %v3696 = vld [vmem:[%s3607 + $0x90] sm:$0xf]
      %v3697 = vsel %vm3609, %v3497, %v3696
      %3698 = vst [vmem:[%s3607 + $0x90] sm:$0xf] %v3697
      %3699 = vst.msk [vmem:[%s3607 + $0x94] sm:$0xf] %vm3135, %v3506
      %v3700 = vld [vmem:[%s3607 + $0x98] sm:$0x1]
      %v3701 = vsel %vm3615, %v3507, %v3700
      %3702 = vst [vmem:[%s3607 + $0x98] sm:$0x1] %v3701
      %v3703 = vld [vmem:[%s3607 + $0x9c] sm:$0xf]
      %v3704 = vsel %vm3609, %v3514, %v3703
      %3705 = vst [vmem:[%s3607 + $0x9c] sm:$0xf] %v3704
      %3706 = vst.msk [vmem:[%s3607 + $0xa0] sm:$0xf] %vm3135, %v3523
      %v3707 = vld [vmem:[%s3607 + $0xa4] sm:$0x1]
      %v3708 = vsel %vm3615, %v3524, %v3707
      %3709 = vst [vmem:[%s3607 + $0xa4] sm:$0x1] %v3708
      %v3710 = vld [vmem:[%s3607 + $0xa8] sm:$0xf]
      %v3711 = vsel %vm3609, %v3531, %v3710
      %3712 = vst [vmem:[%s3607 + $0xa8] sm:$0xf] %v3711
      %3713 = vst.msk [vmem:[%s3607 + $0xac] sm:$0xf] %vm3135, %v3540
      %v3714 = vld [vmem:[%s3607 + $0xb0] sm:$0x1]
      %v3715 = vsel %vm3615, %v3541, %v3714
      %3716 = vst [vmem:[%s3607 + $0xb0] sm:$0x1] %v3715
      %v3717 = vld [vmem:[%s3607 + $0xb4] sm:$0xf]
      %v3718 = vsel %vm3609, %v3548, %v3717
      %3719 = vst [vmem:[%s3607 + $0xb4] sm:$0xf] %v3718
      %3720 = vst.msk [vmem:[%s3607 + $0xb8] sm:$0xf] %vm3135, %v3557
      %v3721 = vld [vmem:[%s3607 + $0xbc] sm:$0x1]
      %v3722 = vsel %vm3615, %v3558, %v3721
      %3723 = vst [vmem:[%s3607 + $0xbc] sm:$0x1] %v3722
      %v3724 = vld [vmem:[#allocation3] sm:$0xf]
      %v3725 = vld [vmem:[#allocation3 + $0x4] sm:$0xf]
      %v3726 = vld [vmem:[#allocation3 + $0xc] sm:$0xf]
      %v3727 = vld [vmem:[#allocation3 + $0x10] sm:$0xf]
      %v3728 = vld [vmem:[#allocation3 + $0x18] sm:$0xf]
      %v3729 = vld [vmem:[#allocation3 + $0x1c] sm:$0xf]
      %v3730 = vld [vmem:[#allocation3 + $0x24] sm:$0xf]
      %v3731 = vld [vmem:[#allocation3 + $0x28] sm:$0xf]
      %v3732 = vld [vmem:[#allocation3 + $0x30] sm:$0xf]
      %v3733 = vld [vmem:[#allocation3 + $0x34] sm:$0xf]
      %v3734 = vld [vmem:[#allocation3 + $0x3c] sm:$0xf]
      %v3735 = vld [vmem:[#allocation3 + $0x40] sm:$0xf]
      %v3736 = vld [vmem:[#allocation3 + $0x48] sm:$0xf]
      %v3737 = vld [vmem:[#allocation3 + $0x4c] sm:$0xf]
      %v3738 = vld [vmem:[#allocation3 + $0x54] sm:$0xf]
      %v3739 = vld [vmem:[#allocation3 + $0x58] sm:$0xf]
      %v3740 = vld [vmem:[#allocation3 + $0x60] sm:$0xf]
      %v3741 = vld [vmem:[#allocation3 + $0x64] sm:$0xf]
      %v3742 = vld [vmem:[#allocation3 + $0x6c] sm:$0xf]
      %v3743 = vld [vmem:[#allocation3 + $0x70] sm:$0xf]
      %v3744 = vld [vmem:[#allocation3 + $0x78] sm:$0xf]
      %v3745 = vld [vmem:[#allocation3 + $0x7c] sm:$0xf]
      %v3746 = vld [vmem:[#allocation3 + $0x84] sm:$0xf]
      %v3747 = vld [vmem:[#allocation3 + $0x88] sm:$0xf]
      %v3748 = vld [vmem:[#allocation3 + $0x90] sm:$0xf]
      %v3749 = vld [vmem:[#allocation3 + $0x94] sm:$0xf]
      %v3750 = vld [vmem:[#allocation3 + $0x9c] sm:$0xf]
      %v3751 = vld [vmem:[#allocation3 + $0xa0] sm:$0xf]
      %v3752 = vld [vmem:[#allocation3 + $0xa8] sm:$0xf]
      %v3753 = vld [vmem:[#allocation3 + $0xac] sm:$0xf]
      %v3754 = vld [vmem:[#allocation3 + $0xb4] sm:$0xf]
      %v3755 = vld [vmem:[#allocation3 + $0xb8] sm:$0xf]
      %v3756 = vld [vmem:[#allocation3 + $0x8] sm:$0x1]
      %v3757 = vld [vmem:[#allocation3 + $0x14] sm:$0x1]
      %v3758 = vld [vmem:[#allocation3 + $0x20] sm:$0x1]
      %v3759 = vld [vmem:[#allocation3 + $0x2c] sm:$0x1]
      %v3760 = vld [vmem:[#allocation3 + $0x38] sm:$0x1]
      %v3761 = vld [vmem:[#allocation3 + $0x44] sm:$0x1]
      %v3762 = vld [vmem:[#allocation3 + $0x50] sm:$0x1]
      %v3763 = vld [vmem:[#allocation3 + $0x5c] sm:$0x1]
      %v3764 = vld [vmem:[#allocation3 + $0x68] sm:$0x1]
      %v3765 = vld [vmem:[#allocation3 + $0x74] sm:$0x1]
      %v3766 = vld [vmem:[#allocation3 + $0x80] sm:$0x1]
      %v3767 = vld [vmem:[#allocation3 + $0x8c] sm:$0x1]
      %v3768 = vld [vmem:[#allocation3 + $0x98] sm:$0x1]
      %v3769 = vld [vmem:[#allocation3 + $0xa4] sm:$0x1]
      %v3770 = vld [vmem:[#allocation3 + $0xb0] sm:$0x1]
      %v3771 = vld [vmem:[#allocation3 + $0xbc] sm:$0x1]
      %v3772 = vld [vmem:[#allocation3] sm:$0xe]
      %v3773 = vld [vmem:[#allocation3 + $0xc] sm:$0xe]
      %v3774 = vld [vmem:[#allocation3 + $0x18] sm:$0xe]
      %v3775 = vld [vmem:[#allocation3 + $0x24] sm:$0xe]
      %v3776 = vld [vmem:[#allocation3 + $0x30] sm:$0xe]
      %v3777 = vld [vmem:[#allocation3 + $0x3c] sm:$0xe]
      %v3778 = vld [vmem:[#allocation3 + $0x48] sm:$0xe]
      %v3779 = vld [vmem:[#allocation3 + $0x54] sm:$0xe]
      %v3780 = vld [vmem:[#allocation3 + $0x60] sm:$0xe]
      %v3781 = vld [vmem:[#allocation3 + $0x6c] sm:$0xe]
      %v3782 = vld [vmem:[#allocation3 + $0x78] sm:$0xe]
      %v3783 = vld [vmem:[#allocation3 + $0x84] sm:$0xe]
      %v3784 = vld [vmem:[#allocation3 + $0x90] sm:$0xe]
      %v3785 = vld [vmem:[#allocation3 + $0x9c] sm:$0xe]
      %v3786 = vld [vmem:[#allocation3 + $0xa8] sm:$0xe]
      %v3787 = vld [vmem:[#allocation3 + $0xb4] sm:$0xe]
      %v3788 = vld [vmem:[%s3607] sm:$0xf]
      %v3789 = vld [vmem:[%s3607 + $0x4] sm:$0xf]
      %v3790 = vld [vmem:[%s3607 + $0xc] sm:$0xf]
      %v3791 = vld [vmem:[%s3607 + $0x10] sm:$0xf]
      %v3792 = vld [vmem:[%s3607 + $0x18] sm:$0xf]
      %v3793 = vld [vmem:[%s3607 + $0x1c] sm:$0xf]
      %v3794 = vld [vmem:[%s3607 + $0x24] sm:$0xf]
      %v3795 = vld [vmem:[%s3607 + $0x28] sm:$0xf]
      %v3796 = vld [vmem:[%s3607 + $0x30] sm:$0xf]
      %v3797 = vld [vmem:[%s3607 + $0x34] sm:$0xf]
      %v3798 = vld [vmem:[%s3607 + $0x3c] sm:$0xf]
      %v3799 = vld [vmem:[%s3607 + $0x40] sm:$0xf]
      %v3800 = vld [vmem:[%s3607 + $0x48] sm:$0xf]
      %v3801 = vld [vmem:[%s3607 + $0x4c] sm:$0xf]
      %v3802 = vld [vmem:[%s3607 + $0x54] sm:$0xf]
      %v3803 = vld [vmem:[%s3607 + $0x58] sm:$0xf]
      %v3804 = vld [vmem:[%s3607 + $0x60] sm:$0xf]
      %v3805 = vld [vmem:[%s3607 + $0x64] sm:$0xf]
      %v3806 = vld [vmem:[%s3607 + $0x6c] sm:$0xf]
      %v3807 = vld [vmem:[%s3607 + $0x70] sm:$0xf]
      %v3808 = vld [vmem:[%s3607 + $0x78] sm:$0xf]
      %v3809 = vld [vmem:[%s3607 + $0x7c] sm:$0xf]
      %v3810 = vld [vmem:[%s3607 + $0x84] sm:$0xf]
      %v3811 = vld [vmem:[%s3607 + $0x88] sm:$0xf]
      %v3812 = vld [vmem:[%s3607 + $0x90] sm:$0xf]
      %v3813 = vld [vmem:[%s3607 + $0x94] sm:$0xf]
      %v3814 = vld [vmem:[%s3607 + $0x9c] sm:$0xf]
      %v3815 = vld [vmem:[%s3607 + $0xa0] sm:$0xf]
      %v3816 = vld [vmem:[%s3607 + $0xa8] sm:$0xf]
      %v3817 = vld [vmem:[%s3607 + $0xac] sm:$0xf]
      %v3818 = vld [vmem:[%s3607 + $0xb4] sm:$0xf]
      %v3819 = vld [vmem:[%s3607 + $0xb8] sm:$0xf]
      %v3820 = vld [vmem:[%s3607 + $0x8] sm:$0x1]
      %v3821 = vld [vmem:[%s3607 + $0x14] sm:$0x1]
      %v3822 = vld [vmem:[%s3607 + $0x20] sm:$0x1]
      %v3823 = vld [vmem:[%s3607 + $0x2c] sm:$0x1]
      %v3824 = vld [vmem:[%s3607 + $0x38] sm:$0x1]
      %v3825 = vld [vmem:[%s3607 + $0x44] sm:$0x1]
      %v3826 = vld [vmem:[%s3607 + $0x50] sm:$0x1]
      %v3827 = vld [vmem:[%s3607 + $0x5c] sm:$0x1]
      %v3828 = vld [vmem:[%s3607 + $0x68] sm:$0x1]
      %v3829 = vld [vmem:[%s3607 + $0x74] sm:$0x1]
      %v3830 = vld [vmem:[%s3607 + $0x80] sm:$0x1]
      %v3831 = vld [vmem:[%s3607 + $0x8c] sm:$0x1]
      %v3832 = vld [vmem:[%s3607 + $0x98] sm:$0x1]
      %v3833 = vld [vmem:[%s3607 + $0xa4] sm:$0x1]
      %v3834 = vld [vmem:[%s3607 + $0xb0] sm:$0x1]
      %v3835 = vld [vmem:[%s3607 + $0xbc] sm:$0x1]
      %v3836 = vld [vmem:[%s3607] sm:$0xe]
      %v3837 = vld [vmem:[%s3607 + $0xc] sm:$0xe]
      %v3838 = vld [vmem:[%s3607 + $0x18] sm:$0xe]
      %v3839 = vld [vmem:[%s3607 + $0x24] sm:$0xe]
      %v3840 = vld [vmem:[%s3607 + $0x30] sm:$0xe]
      %v3841 = vld [vmem:[%s3607 + $0x3c] sm:$0xe]
      %v3842 = vld [vmem:[%s3607 + $0x48] sm:$0xe]
      %v3843 = vld [vmem:[%s3607 + $0x54] sm:$0xe]
      %v3844 = vld [vmem:[%s3607 + $0x60] sm:$0xe]
      %v3845 = vld [vmem:[%s3607 + $0x6c] sm:$0xe]
      %v3846 = vld [vmem:[%s3607 + $0x78] sm:$0xe]
      %v3847 = vld [vmem:[%s3607 + $0x84] sm:$0xe]
      %v3848 = vld [vmem:[%s3607 + $0x90] sm:$0xe]
      %v3849 = vld [vmem:[%s3607 + $0x9c] sm:$0xe]
      %v3850 = vld [vmem:[%s3607 + $0xa8] sm:$0xe]
      %v3851 = vld [vmem:[%s3607 + $0xb4] sm:$0xe]
      %s3852 = scalar_lea.vmem [#allocation3], 24
      %v3853 = vld [vmem:[%s3852] sm:$0xf]
      %v3854 = vld [vmem:[%s3852 + $0x4] sm:$0xf]
      %v3855 = vld [vmem:[%s3852 + $0xc] sm:$0xf]
      %v3856 = vld [vmem:[%s3852 + $0x10] sm:$0xf]
      %v3857 = vld [vmem:[%s3852 + $0x18] sm:$0xf]
      %v3858 = vld [vmem:[%s3852 + $0x1c] sm:$0xf]
      %v3859 = vld [vmem:[%s3852 + $0x24] sm:$0xf]
      %v3860 = vld [vmem:[%s3852 + $0x28] sm:$0xf]
      %v3861 = vld [vmem:[%s3852 + $0x30] sm:$0xf]
      %v3862 = vld [vmem:[%s3852 + $0x34] sm:$0xf]
      %v3863 = vld [vmem:[%s3852 + $0x3c] sm:$0xf]
      %v3864 = vld [vmem:[%s3852 + $0x40] sm:$0xf]
      %v3865 = vld [vmem:[%s3852 + $0x48] sm:$0xf]
      %v3866 = vld [vmem:[%s3852 + $0x4c] sm:$0xf]
      %v3867 = vld [vmem:[%s3852 + $0x54] sm:$0xf]
      %v3868 = vld [vmem:[%s3852 + $0x58] sm:$0xf]
      %v3869 = vld [vmem:[%s3852 + $0x60] sm:$0xf]
      %v3870 = vld [vmem:[%s3852 + $0x64] sm:$0xf]
      %v3871 = vld [vmem:[%s3852 + $0x6c] sm:$0xf]
      %v3872 = vld [vmem:[%s3852 + $0x70] sm:$0xf]
      %v3873 = vld [vmem:[%s3852 + $0x78] sm:$0xf]
      %v3874 = vld [vmem:[%s3852 + $0x7c] sm:$0xf]
      %v3875 = vld [vmem:[%s3852 + $0x84] sm:$0xf]
      %v3876 = vld [vmem:[%s3852 + $0x88] sm:$0xf]
      %v3877 = vld [vmem:[%s3852 + $0x90] sm:$0xf]
      %v3878 = vld [vmem:[%s3852 + $0x94] sm:$0xf]
      %v3879 = vld [vmem:[%s3852 + $0x9c] sm:$0xf]
      %v3880 = vld [vmem:[%s3852 + $0xa0] sm:$0xf]
      %v3881 = vld [vmem:[%s3852 + $0xa8] sm:$0xf]
      %v3882 = vld [vmem:[%s3852 + $0xac] sm:$0xf]
      %v3883 = vld [vmem:[%s3852 + $0xb4] sm:$0xf]
      %v3884 = vld [vmem:[%s3852 + $0xb8] sm:$0xf]
      %v3885 = vld [vmem:[%s3852 + $0x8] sm:$0x1]
      %v3886 = vld [vmem:[%s3852 + $0x14] sm:$0x1]
      %v3887 = vld [vmem:[%s3852 + $0x20] sm:$0x1]
      %v3888 = vld [vmem:[%s3852 + $0x2c] sm:$0x1]
      %v3889 = vld [vmem:[%s3852 + $0x38] sm:$0x1]
      %v3890 = vld [vmem:[%s3852 + $0x44] sm:$0x1]
      %v3891 = vld [vmem:[%s3852 + $0x50] sm:$0x1]
      %v3892 = vld [vmem:[%s3852 + $0x5c] sm:$0x1]
      %v3893 = vld [vmem:[%s3852 + $0x68] sm:$0x1]
      %v3894 = vld [vmem:[%s3852 + $0x74] sm:$0x1]
      %v3895 = vld [vmem:[%s3852 + $0x80] sm:$0x1]
      %v3896 = vld [vmem:[%s3852 + $0x8c] sm:$0x1]
      %v3897 = vld [vmem:[%s3852 + $0x98] sm:$0x1]
      %v3898 = vld [vmem:[%s3852 + $0xa4] sm:$0x1]
      %v3899 = vld [vmem:[%s3852 + $0xb0] sm:$0x1]
      %v3900 = vld [vmem:[%s3852 + $0xbc] sm:$0x1]
      %v3901 = vld [vmem:[%s3852] sm:$0xe]
      %v3902 = vld [vmem:[%s3852 + $0xc] sm:$0xe]
      %v3903 = vld [vmem:[%s3852 + $0x18] sm:$0xe]
      %v3904 = vld [vmem:[%s3852 + $0x24] sm:$0xe]
      %v3905 = vld [vmem:[%s3852 + $0x30] sm:$0xe]
      %v3906 = vld [vmem:[%s3852 + $0x3c] sm:$0xe]
      %v3907 = vld [vmem:[%s3852 + $0x48] sm:$0xe]
      %v3908 = vld [vmem:[%s3852 + $0x54] sm:$0xe]
      %v3909 = vld [vmem:[%s3852 + $0x60] sm:$0xe]
      %v3910 = vld [vmem:[%s3852 + $0x6c] sm:$0xe]
      %v3911 = vld [vmem:[%s3852 + $0x78] sm:$0xe]
      %v3912 = vld [vmem:[%s3852 + $0x84] sm:$0xe]
      %v3913 = vld [vmem:[%s3852 + $0x90] sm:$0xe]
      %v3914 = vld [vmem:[%s3852 + $0x9c] sm:$0xe]
      %v3915 = vld [vmem:[%s3852 + $0xa8] sm:$0xe]
      %v3916 = vld [vmem:[%s3852 + $0xb4] sm:$0xe]
      %v3949 = vunpack.c.l.b16 %v3724
      %v3950 = vunpack.c.l.b16 %v3725
      %v3951 = vunpack.c.l.b16 %v3726
      %v3952 = vunpack.c.l.b16 %v3727
      %v3953 = vunpack.c.l.b16 %v3728
      %v3954 = vunpack.c.l.b16 %v3729
      %v3955 = vunpack.c.l.b16 %v3730
      %v3956 = vunpack.c.l.b16 %v3731
      %v3957 = vunpack.c.l.b16 %v3732
      %v3958 = vunpack.c.l.b16 %v3733
      %v3959 = vunpack.c.l.b16 %v3734
      %v3960 = vunpack.c.l.b16 %v3735
      %v3961 = vunpack.c.l.b16 %v3736
      %v3962 = vunpack.c.l.b16 %v3737
      %v3963 = vunpack.c.l.b16 %v3738
      %v3964 = vunpack.c.l.b16 %v3739
      %v3965 = vunpack.c.l.b16 %v3740
      %v3966 = vunpack.c.l.b16 %v3741
      %v3967 = vunpack.c.l.b16 %v3742
      %v3968 = vunpack.c.l.b16 %v3743
      %v3969 = vunpack.c.l.b16 %v3744
      %v3970 = vunpack.c.l.b16 %v3745
      %v3971 = vunpack.c.l.b16 %v3746
      %v3972 = vunpack.c.l.b16 %v3747
      %v3973 = vunpack.c.l.b16 %v3748
      %v3974 = vunpack.c.l.b16 %v3749
      %v3975 = vunpack.c.l.b16 %v3750
      %v3976 = vunpack.c.l.b16 %v3751
      %v3977 = vunpack.c.l.b16 %v3752
      %v3978 = vunpack.c.l.b16 %v3753
      %v3979 = vunpack.c.l.b16 %v3754
      %v3980 = vunpack.c.l.b16 %v3755
      %v3981 = vpack.c.b16 %v3950, %v3949
      %v3982 = vpack.c.b16 %v3952, %v3951
      %v3983 = vpack.c.b16 %v3954, %v3953
      %v3984 = vpack.c.b16 %v3956, %v3955
      %v3985 = vpack.c.b16 %v3958, %v3957
      %v3986 = vpack.c.b16 %v3960, %v3959
      %v3987 = vpack.c.b16 %v3962, %v3961
      %v3988 = vpack.c.b16 %v3964, %v3963
      %v3989 = vpack.c.b16 %v3966, %v3965
      %v3990 = vpack.c.b16 %v3968, %v3967
      %v3991 = vpack.c.b16 %v3970, %v3969
      %v3992 = vpack.c.b16 %v3972, %v3971
      %v3993 = vpack.c.b16 %v3974, %v3973
      %v3994 = vpack.c.b16 %v3976, %v3975
      %v3995 = vpack.c.b16 %v3978, %v3977
      %v3996 = vpack.c.b16 %v3980, %v3979
      %v4013 = vunpack.c.l.b16 %v3756
      %v4014 = vunpack.c.l.b16 %v3757
      %v4015 = vunpack.c.l.b16 %v3758
      %v4016 = vunpack.c.l.b16 %v3759
      %v4017 = vunpack.c.l.b16 %v3760
      %v4018 = vunpack.c.l.b16 %v3761
      %v4019 = vunpack.c.l.b16 %v3762
      %v4020 = vunpack.c.l.b16 %v3763
      %v4021 = vunpack.c.l.b16 %v3764
      %v4022 = vunpack.c.l.b16 %v3765
      %v4023 = vunpack.c.l.b16 %v3766
      %v4024 = vunpack.c.l.b16 %v3767
      %v4025 = vunpack.c.l.b16 %v3768
      %v4026 = vunpack.c.l.b16 %v3769
      %v4027 = vunpack.c.l.b16 %v3770
      %v4028 = vunpack.c.l.b16 %v3771
      %v4029 = vpack.c.b16 %v4013, %v4013
      %v4030 = vpack.c.b16 %v4014, %v4014
      %v4031 = vpack.c.b16 %v4015, %v4015
      %v4032 = vpack.c.b16 %v4016, %v4016
      %v4033 = vpack.c.b16 %v4017, %v4017
      %v4034 = vpack.c.b16 %v4018, %v4018
      %v4035 = vpack.c.b16 %v4019, %v4019
      %v4036 = vpack.c.b16 %v4020, %v4020
      %v4037 = vpack.c.b16 %v4021, %v4021
      %v4038 = vpack.c.b16 %v4022, %v4022
      %v4039 = vpack.c.b16 %v4023, %v4023
      %v4040 = vpack.c.b16 %v4024, %v4024
      %v4041 = vpack.c.b16 %v4025, %v4025
      %v4042 = vpack.c.b16 %v4026, %v4026
      %v4043 = vpack.c.b16 %v4027, %v4027
      %v4044 = vpack.c.b16 %v4028, %v4028
      %v4046 = vshrl.u32 %v3981, 16
      %v4048 = vshll.u32 %v3981, 16
      %v4050 = vrot.slane %v4048, 1
      %v4051 = vor.u32 %v4046, %v4050
      %v4053 = vshll.u32 %v4029, 16
      %v4055 = vrot.slane %v4053, 1
      %v4056 = vsel %vm1172, %v4051, %v4055
      %v4058 = vshrl.u32 %v3982, 16
      %v4060 = vshll.u32 %v3982, 16
      %v4062 = vrot.slane %v4060, 1
      %v4063 = vor.u32 %v4058, %v4062
      %v4065 = vshll.u32 %v4030, 16
      %v4067 = vrot.slane %v4065, 1
      %v4068 = vsel %vm1172, %v4063, %v4067
      %v4070 = vshrl.u32 %v3983, 16
      %v4072 = vshll.u32 %v3983, 16
      %v4074 = vrot.slane %v4072, 1
      %v4075 = vor.u32 %v4070, %v4074
      %v4077 = vshll.u32 %v4031, 16
      %v4079 = vrot.slane %v4077, 1
      %v4080 = vsel %vm1172, %v4075, %v4079
      %v4082 = vshrl.u32 %v3984, 16
      %v4084 = vshll.u32 %v3984, 16
      %v4086 = vrot.slane %v4084, 1
      %v4087 = vor.u32 %v4082, %v4086
      %v4089 = vshll.u32 %v4032, 16
      %v4091 = vrot.slane %v4089, 1
      %v4092 = vsel %vm1172, %v4087, %v4091
      %v4094 = vshrl.u32 %v3985, 16
      %v4096 = vshll.u32 %v3985, 16
      %v4098 = vrot.slane %v4096, 1
      %v4099 = vor.u32 %v4094, %v4098
      %v4101 = vshll.u32 %v4033, 16
      %v4103 = vrot.slane %v4101, 1
      %v4104 = vsel %vm1172, %v4099, %v4103
      %v4106 = vshrl.u32 %v3986, 16
      %v4108 = vshll.u32 %v3986, 16
      %v4110 = vrot.slane %v4108, 1
      %v4111 = vor.u32 %v4106, %v4110
      %v4113 = vshll.u32 %v4034, 16
      %v4115 = vrot.slane %v4113, 1
      %v4116 = vsel %vm1172, %v4111, %v4115
      %v4118 = vshrl.u32 %v3987, 16
      %v4120 = vshll.u32 %v3987, 16
      %v4122 = vrot.slane %v4120, 1
      %v4123 = vor.u32 %v4118, %v4122
      %v4125 = vshll.u32 %v4035, 16
      %v4127 = vrot.slane %v4125, 1
      %v4128 = vsel %vm1172, %v4123, %v4127
      %v4130 = vshrl.u32 %v3988, 16
      %v4132 = vshll.u32 %v3988, 16
      %v4134 = vrot.slane %v4132, 1
      %v4135 = vor.u32 %v4130, %v4134
      %v4137 = vshll.u32 %v4036, 16
      %v4139 = vrot.slane %v4137, 1
      %v4140 = vsel %vm1172, %v4135, %v4139
      %v4142 = vshrl.u32 %v3989, 16
      %v4144 = vshll.u32 %v3989, 16
      %v4146 = vrot.slane %v4144, 1
      %v4147 = vor.u32 %v4142, %v4146
      %v4149 = vshll.u32 %v4037, 16
      %v4151 = vrot.slane %v4149, 1
      %v4152 = vsel %vm1172, %v4147, %v4151
      %v4154 = vshrl.u32 %v3990, 16
      %v4156 = vshll.u32 %v3990, 16
      %v4158 = vrot.slane %v4156, 1
      %v4159 = vor.u32 %v4154, %v4158
      %v4161 = vshll.u32 %v4038, 16
      %v4163 = vrot.slane %v4161, 1
      %v4164 = vsel %vm1172, %v4159, %v4163
      %v4166 = vshrl.u32 %v3991, 16
      %v4168 = vshll.u32 %v3991, 16
      %v4170 = vrot.slane %v4168, 1
      %v4171 = vor.u32 %v4166, %v4170
      %v4173 = vshll.u32 %v4039, 16
      %v4175 = vrot.slane %v4173, 1
      %v4176 = vsel %vm1172, %v4171, %v4175
      %v4178 = vshrl.u32 %v3992, 16
      %v4180 = vshll.u32 %v3992, 16
      %v4182 = vrot.slane %v4180, 1
      %v4183 = vor.u32 %v4178, %v4182
      %v4185 = vshll.u32 %v4040, 16
      %v4187 = vrot.slane %v4185, 1
      %v4188 = vsel %vm1172, %v4183, %v4187
      %v4190 = vshrl.u32 %v3993, 16
      %v4192 = vshll.u32 %v3993, 16
      %v4194 = vrot.slane %v4192, 1
      %v4195 = vor.u32 %v4190, %v4194
      %v4197 = vshll.u32 %v4041, 16
      %v4199 = vrot.slane %v4197, 1
      %v4200 = vsel %vm1172, %v4195, %v4199
      %v4202 = vshrl.u32 %v3994, 16
      %v4204 = vshll.u32 %v3994, 16
      %v4206 = vrot.slane %v4204, 1
      %v4207 = vor.u32 %v4202, %v4206
      %v4209 = vshll.u32 %v4042, 16
      %v4211 = vrot.slane %v4209, 1
      %v4212 = vsel %vm1172, %v4207, %v4211
      %v4214 = vshrl.u32 %v3995, 16
      %v4216 = vshll.u32 %v3995, 16
      %v4218 = vrot.slane %v4216, 1
      %v4219 = vor.u32 %v4214, %v4218
      %v4221 = vshll.u32 %v4043, 16
      %v4223 = vrot.slane %v4221, 1
      %v4224 = vsel %vm1172, %v4219, %v4223
      %v4226 = vshrl.u32 %v3996, 16
      %v4228 = vshll.u32 %v3996, 16
      %v4230 = vrot.slane %v4228, 1
      %v4231 = vor.u32 %v4226, %v4230
      %v4233 = vshll.u32 %v4044, 16
      %v4235 = vrot.slane %v4233, 1
      %v4236 = vsel %vm1172, %v4231, %v4235
      %4237 = vrot.lane.b32.xlu0 %v4056, 8
      %v4238 = vpop.permute.xlu0 %4237
      %4239 = vrot.lane.b32.xlu0 %v4068, 8
      %v4240 = vpop.permute.xlu0 %4239
      %4241 = vrot.lane.b32.xlu0 %v4080, 8
      %v4242 = vpop.permute.xlu0 %4241
      %4243 = vrot.lane.b32.xlu0 %v4092, 8
      %v4244 = vpop.permute.xlu0 %4243
      %4245 = vrot.lane.b32.xlu0 %v4104, 8
      %v4246 = vpop.permute.xlu0 %4245
      %4247 = vrot.lane.b32.xlu0 %v4116, 8
      %v4248 = vpop.permute.xlu0 %4247
      %4249 = vrot.lane.b32.xlu0 %v4128, 8
      %v4250 = vpop.permute.xlu0 %4249
      %4251 = vrot.lane.b32.xlu0 %v4140, 8
      %v4252 = vpop.permute.xlu0 %4251
      %4253 = vrot.lane.b32.xlu0 %v4152, 8
      %v4254 = vpop.permute.xlu0 %4253
      %4255 = vrot.lane.b32.xlu0 %v4164, 8
      %v4256 = vpop.permute.xlu0 %4255
      %4257 = vrot.lane.b32.xlu0 %v4176, 8
      %v4258 = vpop.permute.xlu0 %4257
      %4259 = vrot.lane.b32.xlu0 %v4188, 8
      %v4260 = vpop.permute.xlu0 %4259
      %4261 = vrot.lane.b32.xlu0 %v4200, 8
      %v4262 = vpop.permute.xlu0 %4261
      %4263 = vrot.lane.b32.xlu0 %v4212, 8
      %v4264 = vpop.permute.xlu0 %4263
      %4265 = vrot.lane.b32.xlu0 %v4224, 8
      %v4266 = vpop.permute.xlu0 %4265
      %4267 = vrot.lane.b32.xlu0 %v4236, 8
      %v4268 = vpop.permute.xlu0 %4267
      %v4285 = vunpack.c.l.b16 %v3772
      %v4286 = vunpack.c.l.b16 %v3773
      %v4287 = vunpack.c.l.b16 %v3774
      %v4288 = vunpack.c.l.b16 %v3775
      %v4289 = vunpack.c.l.b16 %v3776
      %v4290 = vunpack.c.l.b16 %v3777
      %v4291 = vunpack.c.l.b16 %v3778
      %v4292 = vunpack.c.l.b16 %v3779
      %v4293 = vunpack.c.l.b16 %v3780
      %v4294 = vunpack.c.l.b16 %v3781
      %v4295 = vunpack.c.l.b16 %v3782
      %v4296 = vunpack.c.l.b16 %v3783
      %v4297 = vunpack.c.l.b16 %v3784
      %v4298 = vunpack.c.l.b16 %v3785
      %v4299 = vunpack.c.l.b16 %v3786
      %v4300 = vunpack.c.l.b16 %v3787
      %v4301 = vpack.c.b16 %v3950, %v4285
      %v4302 = vpack.c.b16 %v3952, %v4286
      %v4303 = vpack.c.b16 %v3954, %v4287
      %v4304 = vpack.c.b16 %v3956, %v4288
      %v4305 = vpack.c.b16 %v3958, %v4289
      %v4306 = vpack.c.b16 %v3960, %v4290
      %v4307 = vpack.c.b16 %v3962, %v4291
      %v4308 = vpack.c.b16 %v3964, %v4292
      %v4309 = vpack.c.b16 %v3966, %v4293
      %v4310 = vpack.c.b16 %v3968, %v4294
      %v4311 = vpack.c.b16 %v3970, %v4295
      %v4312 = vpack.c.b16 %v3972, %v4296
      %v4313 = vpack.c.b16 %v3974, %v4297
      %v4314 = vpack.c.b16 %v3976, %v4298
      %v4315 = vpack.c.b16 %v3978, %v4299
      %v4316 = vpack.c.b16 %v3980, %v4300
      %v4317 = vrot.slane %v4301, 1
      %v4318 = vrot.slane %v4029, 1
      %v4319 = vsel %vm1445, %v4317, %v4318
      %v4320 = vrot.slane %v4302, 1
      %v4321 = vrot.slane %v4030, 1
      %v4322 = vsel %vm1445, %v4320, %v4321
      %v4323 = vrot.slane %v4303, 1
      %v4324 = vrot.slane %v4031, 1
      %v4325 = vsel %vm1445, %v4323, %v4324
      %v4326 = vrot.slane %v4304, 1
      %v4327 = vrot.slane %v4032, 1
      %v4328 = vsel %vm1445, %v4326, %v4327
      %v4329 = vrot.slane %v4305, 1
      %v4330 = vrot.slane %v4033, 1
      %v4331 = vsel %vm1445, %v4329, %v4330
      %v4332 = vrot.slane %v4306, 1
      %v4333 = vrot.slane %v4034, 1
      %v4334 = vsel %vm1445, %v4332, %v4333
      %v4335 = vrot.slane %v4307, 1
      %v4336 = vrot.slane %v4035, 1
      %v4337 = vsel %vm1445, %v4335, %v4336
      %v4338 = vrot.slane %v4308, 1
      %v4339 = vrot.slane %v4036, 1
      %v4340 = vsel %vm1445, %v4338, %v4339
      %v4341 = vrot.slane %v4309, 1
      %v4342 = vrot.slane %v4037, 1
      %v4343 = vsel %vm1445, %v4341, %v4342
      %v4344 = vrot.slane %v4310, 1
      %v4345 = vrot.slane %v4038, 1
      %v4346 = vsel %vm1445, %v4344, %v4345
      %v4347 = vrot.slane %v4311, 1
      %v4348 = vrot.slane %v4039, 1
      %v4349 = vsel %vm1445, %v4347, %v4348
      %v4350 = vrot.slane %v4312, 1
      %v4351 = vrot.slane %v4040, 1
      %v4352 = vsel %vm1445, %v4350, %v4351
      %v4353 = vrot.slane %v4313, 1
      %v4354 = vrot.slane %v4041, 1
      %v4355 = vsel %vm1445, %v4353, %v4354
      %v4356 = vrot.slane %v4314, 1
      %v4357 = vrot.slane %v4042, 1
      %v4358 = vsel %vm1445, %v4356, %v4357
      %v4359 = vrot.slane %v4315, 1
      %v4360 = vrot.slane %v4043, 1
      %v4361 = vsel %vm1445, %v4359, %v4360
      %v4362 = vrot.slane %v4316, 1
      %v4363 = vrot.slane %v4044, 1
      %v4364 = vsel %vm1445, %v4362, %v4363
      %4365 = vrot.lane.b32.xlu0 %v4319, 16
      %v4366 = vpop.permute.xlu0 %4365
      %4367 = vrot.lane.b32.xlu0 %v4322, 16
      %v4368 = vpop.permute.xlu0 %4367
      %4369 = vrot.lane.b32.xlu0 %v4325, 16
      %v4370 = vpop.permute.xlu0 %4369
      %4371 = vrot.lane.b32.xlu0 %v4328, 16
      %v4372 = vpop.permute.xlu0 %4371
      %4373 = vrot.lane.b32.xlu0 %v4331, 16
      %v4374 = vpop.permute.xlu0 %4373
      %4375 = vrot.lane.b32.xlu0 %v4334, 16
      %v4376 = vpop.permute.xlu0 %4375
      %4377 = vrot.lane.b32.xlu0 %v4337, 16
      %v4378 = vpop.permute.xlu0 %4377
      %4379 = vrot.lane.b32.xlu0 %v4340, 16
      %v4380 = vpop.permute.xlu0 %4379
      %4381 = vrot.lane.b32.xlu0 %v4343, 16
      %v4382 = vpop.permute.xlu0 %4381
      %4383 = vrot.lane.b32.xlu0 %v4346, 16
      %v4384 = vpop.permute.xlu0 %4383
      %4385 = vrot.lane.b32.xlu0 %v4349, 16
      %v4386 = vpop.permute.xlu0 %4385
      %4387 = vrot.lane.b32.xlu0 %v4352, 16
      %v4388 = vpop.permute.xlu0 %4387
      %4389 = vrot.lane.b32.xlu0 %v4355, 16
      %v4390 = vpop.permute.xlu0 %4389
      %4391 = vrot.lane.b32.xlu0 %v4358, 16
      %v4392 = vpop.permute.xlu0 %4391
      %4393 = vrot.lane.b32.xlu0 %v4361, 16
      %v4394 = vpop.permute.xlu0 %4393
      %4395 = vrot.lane.b32.xlu0 %v4364, 16
      %v4396 = vpop.permute.xlu0 %4395
      %v4429 = vunpack.c.l.b16 %v3788
      %v4430 = vunpack.c.l.b16 %v3789
      %v4431 = vunpack.c.l.b16 %v3790
      %v4432 = vunpack.c.l.b16 %v3791
      %v4433 = vunpack.c.l.b16 %v3792
      %v4434 = vunpack.c.l.b16 %v3793
      %v4435 = vunpack.c.l.b16 %v3794
      %v4436 = vunpack.c.l.b16 %v3795
      %v4437 = vunpack.c.l.b16 %v3796
      %v4438 = vunpack.c.l.b16 %v3797
      %v4439 = vunpack.c.l.b16 %v3798
      %v4440 = vunpack.c.l.b16 %v3799
      %v4441 = vunpack.c.l.b16 %v3800
      %v4442 = vunpack.c.l.b16 %v3801
      %v4443 = vunpack.c.l.b16 %v3802
      %v4444 = vunpack.c.l.b16 %v3803
      %v4445 = vunpack.c.l.b16 %v3804
      %v4446 = vunpack.c.l.b16 %v3805
      %v4447 = vunpack.c.l.b16 %v3806
      %v4448 = vunpack.c.l.b16 %v3807
      %v4449 = vunpack.c.l.b16 %v3808
      %v4450 = vunpack.c.l.b16 %v3809
      %v4451 = vunpack.c.l.b16 %v3810
      %v4452 = vunpack.c.l.b16 %v3811
      %v4453 = vunpack.c.l.b16 %v3812
      %v4454 = vunpack.c.l.b16 %v3813
      %v4455 = vunpack.c.l.b16 %v3814
      %v4456 = vunpack.c.l.b16 %v3815
      %v4457 = vunpack.c.l.b16 %v3816
      %v4458 = vunpack.c.l.b16 %v3817
      %v4459 = vunpack.c.l.b16 %v3818
      %v4460 = vunpack.c.l.b16 %v3819
      %v4461 = vpack.c.b16 %v4430, %v4429
      %v4462 = vpack.c.b16 %v4432, %v4431
      %v4463 = vpack.c.b16 %v4434, %v4433
      %v4464 = vpack.c.b16 %v4436, %v4435
      %v4465 = vpack.c.b16 %v4438, %v4437
      %v4466 = vpack.c.b16 %v4440, %v4439
      %v4467 = vpack.c.b16 %v4442, %v4441
      %v4468 = vpack.c.b16 %v4444, %v4443
      %v4469 = vpack.c.b16 %v4446, %v4445
      %v4470 = vpack.c.b16 %v4448, %v4447
      %v4471 = vpack.c.b16 %v4450, %v4449
      %v4472 = vpack.c.b16 %v4452, %v4451
      %v4473 = vpack.c.b16 %v4454, %v4453
      %v4474 = vpack.c.b16 %v4456, %v4455
      %v4475 = vpack.c.b16 %v4458, %v4457
      %v4476 = vpack.c.b16 %v4460, %v4459
      %4477 = vrot.lane.b32.xlu0 %v4461, 24
      %v4478 = vpop.permute.xlu0 %4477
      %4479 = vrot.lane.b32.xlu0 %v4462, 24
      %v4480 = vpop.permute.xlu0 %4479
      %4481 = vrot.lane.b32.xlu0 %v4463, 24
      %v4482 = vpop.permute.xlu0 %4481
      %4483 = vrot.lane.b32.xlu0 %v4464, 24
      %v4484 = vpop.permute.xlu0 %4483
      %4485 = vrot.lane.b32.xlu0 %v4465, 24
      %v4486 = vpop.permute.xlu0 %4485
      %4487 = vrot.lane.b32.xlu0 %v4466, 24
      %v4488 = vpop.permute.xlu0 %4487
      %4489 = vrot.lane.b32.xlu0 %v4467, 24
      %v4490 = vpop.permute.xlu0 %4489
      %4491 = vrot.lane.b32.xlu0 %v4468, 24
      %v4492 = vpop.permute.xlu0 %4491
      %4493 = vrot.lane.b32.xlu0 %v4469, 24
      %v4494 = vpop.permute.xlu0 %4493
      %4495 = vrot.lane.b32.xlu0 %v4470, 24
      %v4496 = vpop.permute.xlu0 %4495
      %4497 = vrot.lane.b32.xlu0 %v4471, 24
      %v4498 = vpop.permute.xlu0 %4497
      %4499 = vrot.lane.b32.xlu0 %v4472, 24
      %v4500 = vpop.permute.xlu0 %4499
      %4501 = vrot.lane.b32.xlu0 %v4473, 24
      %v4502 = vpop.permute.xlu0 %4501
      %4503 = vrot.lane.b32.xlu0 %v4474, 24
      %v4504 = vpop.permute.xlu0 %4503
      %4505 = vrot.lane.b32.xlu0 %v4475, 24
      %v4506 = vpop.permute.xlu0 %4505
      %4507 = vrot.lane.b32.xlu0 %v4476, 24
      %v4508 = vpop.permute.xlu0 %4507
      %v4525 = vunpack.c.l.b16 %v3820
      %v4526 = vunpack.c.l.b16 %v3821
      %v4527 = vunpack.c.l.b16 %v3822
      %v4528 = vunpack.c.l.b16 %v3823
      %v4529 = vunpack.c.l.b16 %v3824
      %v4530 = vunpack.c.l.b16 %v3825
      %v4531 = vunpack.c.l.b16 %v3826
      %v4532 = vunpack.c.l.b16 %v3827
      %v4533 = vunpack.c.l.b16 %v3828
      %v4534 = vunpack.c.l.b16 %v3829
      %v4535 = vunpack.c.l.b16 %v3830
      %v4536 = vunpack.c.l.b16 %v3831
      %v4537 = vunpack.c.l.b16 %v3832
      %v4538 = vunpack.c.l.b16 %v3833
      %v4539 = vunpack.c.l.b16 %v3834
      %v4540 = vunpack.c.l.b16 %v3835
      %v4541 = vpack.c.b16 %v4525, %v4525
      %v4542 = vpack.c.b16 %v4526, %v4526
      %v4543 = vpack.c.b16 %v4527, %v4527
      %v4544 = vpack.c.b16 %v4528, %v4528
      %v4545 = vpack.c.b16 %v4529, %v4529
      %v4546 = vpack.c.b16 %v4530, %v4530
      %v4547 = vpack.c.b16 %v4531, %v4531
      %v4548 = vpack.c.b16 %v4532, %v4532
      %v4549 = vpack.c.b16 %v4533, %v4533
      %v4550 = vpack.c.b16 %v4534, %v4534
      %v4551 = vpack.c.b16 %v4535, %v4535
      %v4552 = vpack.c.b16 %v4536, %v4536
      %v4553 = vpack.c.b16 %v4537, %v4537
      %v4554 = vpack.c.b16 %v4538, %v4538
      %v4555 = vpack.c.b16 %v4539, %v4539
      %v4556 = vpack.c.b16 %v4540, %v4540
      %v4558 = vshrl.u32 %v4461, 16
      %v4560 = vshll.u32 %v4461, 16
      %v4562 = vrot.slane %v4560, 1
      %v4563 = vor.u32 %v4558, %v4562
      %v4565 = vshll.u32 %v4541, 16
      %v4567 = vrot.slane %v4565, 1
      %v4568 = vsel %vm1172, %v4563, %v4567
      %v4570 = vshrl.u32 %v4462, 16
      %v4572 = vshll.u32 %v4462, 16
      %v4574 = vrot.slane %v4572, 1
      %v4575 = vor.u32 %v4570, %v4574
      %v4577 = vshll.u32 %v4542, 16
      %v4579 = vrot.slane %v4577, 1
      %v4580 = vsel %vm1172, %v4575, %v4579
      %v4582 = vshrl.u32 %v4463, 16
      %v4584 = vshll.u32 %v4463, 16
      %v4586 = vrot.slane %v4584, 1
      %v4587 = vor.u32 %v4582, %v4586
      %v4589 = vshll.u32 %v4543, 16
      %v4591 = vrot.slane %v4589, 1
      %v4592 = vsel %vm1172, %v4587, %v4591
      %v4594 = vshrl.u32 %v4464, 16
      %v4596 = vshll.u32 %v4464, 16
      %v4598 = vrot.slane %v4596, 1
      %v4599 = vor.u32 %v4594, %v4598
      %v4601 = vshll.u32 %v4544, 16
      %v4603 = vrot.slane %v4601, 1
      %v4604 = vsel %vm1172, %v4599, %v4603
      %v4606 = vshrl.u32 %v4465, 16
      %v4608 = vshll.u32 %v4465, 16
      %v4610 = vrot.slane %v4608, 1
      %v4611 = vor.u32 %v4606, %v4610
      %v4613 = vshll.u32 %v4545, 16
      %v4615 = vrot.slane %v4613, 1
      %v4616 = vsel %vm1172, %v4611, %v4615
      %v4618 = vshrl.u32 %v4466, 16
      %v4620 = vshll.u32 %v4466, 16
      %v4622 = vrot.slane %v4620, 1
      %v4623 = vor.u32 %v4618, %v4622
      %v4625 = vshll.u32 %v4546, 16
      %v4627 = vrot.slane %v4625, 1
      %v4628 = vsel %vm1172, %v4623, %v4627
      %v4630 = vshrl.u32 %v4467, 16
      %v4632 = vshll.u32 %v4467, 16
      %v4634 = vrot.slane %v4632, 1
      %v4635 = vor.u32 %v4630, %v4634
      %v4637 = vshll.u32 %v4547, 16
      %v4639 = vrot.slane %v4637, 1
      %v4640 = vsel %vm1172, %v4635, %v4639
      %v4642 = vshrl.u32 %v4468, 16
      %v4644 = vshll.u32 %v4468, 16
      %v4646 = vrot.slane %v4644, 1
      %v4647 = vor.u32 %v4642, %v4646
      %v4649 = vshll.u32 %v4548, 16
      %v4651 = vrot.slane %v4649, 1
      %v4652 = vsel %vm1172, %v4647, %v4651
      %v4654 = vshrl.u32 %v4469, 16
      %v4656 = vshll.u32 %v4469, 16
      %v4658 = vrot.slane %v4656, 1
      %v4659 = vor.u32 %v4654, %v4658
      %v4661 = vshll.u32 %v4549, 16
      %v4663 = vrot.slane %v4661, 1
      %v4664 = vsel %vm1172, %v4659, %v4663
      %v4666 = vshrl.u32 %v4470, 16
      %v4668 = vshll.u32 %v4470, 16
      %v4670 = vrot.slane %v4668, 1
      %v4671 = vor.u32 %v4666, %v4670
      %v4673 = vshll.u32 %v4550, 16
      %v4675 = vrot.slane %v4673, 1
      %v4676 = vsel %vm1172, %v4671, %v4675
      %v4678 = vshrl.u32 %v4471, 16
      %v4680 = vshll.u32 %v4471, 16
      %v4682 = vrot.slane %v4680, 1
      %v4683 = vor.u32 %v4678, %v4682
      %v4685 = vshll.u32 %v4551, 16
      %v4687 = vrot.slane %v4685, 1
      %v4688 = vsel %vm1172, %v4683, %v4687
      %v4690 = vshrl.u32 %v4472, 16
      %v4692 = vshll.u32 %v4472, 16
      %v4694 = vrot.slane %v4692, 1
      %v4695 = vor.u32 %v4690, %v4694
      %v4697 = vshll.u32 %v4552, 16
      %v4699 = vrot.slane %v4697, 1
      %v4700 = vsel %vm1172, %v4695, %v4699
      %v4702 = vshrl.u32 %v4473, 16
      %v4704 = vshll.u32 %v4473, 16
      %v4706 = vrot.slane %v4704, 1
      %v4707 = vor.u32 %v4702, %v4706
      %v4709 = vshll.u32 %v4553, 16
      %v4711 = vrot.slane %v4709, 1
      %v4712 = vsel %vm1172, %v4707, %v4711
      %v4714 = vshrl.u32 %v4474, 16
      %v4716 = vshll.u32 %v4474, 16
      %v4718 = vrot.slane %v4716, 1
      %v4719 = vor.u32 %v4714, %v4718
      %v4721 = vshll.u32 %v4554, 16
      %v4723 = vrot.slane %v4721, 1
      %v4724 = vsel %vm1172, %v4719, %v4723
      %v4726 = vshrl.u32 %v4475, 16
      %v4728 = vshll.u32 %v4475, 16
      %v4730 = vrot.slane %v4728, 1
      %v4731 = vor.u32 %v4726, %v4730
      %v4733 = vshll.u32 %v4555, 16
      %v4735 = vrot.slane %v4733, 1
      %v4736 = vsel %vm1172, %v4731, %v4735
      %v4738 = vshrl.u32 %v4476, 16
      %v4740 = vshll.u32 %v4476, 16
      %v4742 = vrot.slane %v4740, 1
      %v4743 = vor.u32 %v4738, %v4742
      %v4745 = vshll.u32 %v4556, 16
      %v4747 = vrot.slane %v4745, 1
      %v4748 = vsel %vm1172, %v4743, %v4747
      %4749 = vrot.lane.b32.xlu0 %v4568, 32
      %v4750 = vpop.permute.xlu0 %4749
      %4751 = vrot.lane.b32.xlu0 %v4580, 32
      %v4752 = vpop.permute.xlu0 %4751
      %4753 = vrot.lane.b32.xlu0 %v4592, 32
      %v4754 = vpop.permute.xlu0 %4753
      %4755 = vrot.lane.b32.xlu0 %v4604, 32
      %v4756 = vpop.permute.xlu0 %4755
      %4757 = vrot.lane.b32.xlu0 %v4616, 32
      %v4758 = vpop.permute.xlu0 %4757
      %4759 = vrot.lane.b32.xlu0 %v4628, 32
      %v4760 = vpop.permute.xlu0 %4759
      %4761 = vrot.lane.b32.xlu0 %v4640, 32
      %v4762 = vpop.permute.xlu0 %4761
      %4763 = vrot.lane.b32.xlu0 %v4652, 32
      %v4764 = vpop.permute.xlu0 %4763
      %4765 = vrot.lane.b32.xlu0 %v4664, 32
      %v4766 = vpop.permute.xlu0 %4765
      %4767 = vrot.lane.b32.xlu0 %v4676, 32
      %v4768 = vpop.permute.xlu0 %4767
      %4769 = vrot.lane.b32.xlu0 %v4688, 32
      %v4770 = vpop.permute.xlu0 %4769
      %4771 = vrot.lane.b32.xlu0 %v4700, 32
      %v4772 = vpop.permute.xlu0 %4771
      %4773 = vrot.lane.b32.xlu0 %v4712, 32
      %v4774 = vpop.permute.xlu0 %4773
      %4775 = vrot.lane.b32.xlu0 %v4724, 32
      %v4776 = vpop.permute.xlu0 %4775
      %4777 = vrot.lane.b32.xlu0 %v4736, 32
      %v4778 = vpop.permute.xlu0 %4777
      %4779 = vrot.lane.b32.xlu0 %v4748, 32
      %v4780 = vpop.permute.xlu0 %4779
      %v4797 = vunpack.c.l.b16 %v3836
      %v4798 = vunpack.c.l.b16 %v3837
      %v4799 = vunpack.c.l.b16 %v3838
      %v4800 = vunpack.c.l.b16 %v3839
      %v4801 = vunpack.c.l.b16 %v3840
      %v4802 = vunpack.c.l.b16 %v3841
      %v4803 = vunpack.c.l.b16 %v3842
      %v4804 = vunpack.c.l.b16 %v3843
      %v4805 = vunpack.c.l.b16 %v3844
      %v4806 = vunpack.c.l.b16 %v3845
      %v4807 = vunpack.c.l.b16 %v3846
      %v4808 = vunpack.c.l.b16 %v3847
      %v4809 = vunpack.c.l.b16 %v3848
      %v4810 = vunpack.c.l.b16 %v3849
      %v4811 = vunpack.c.l.b16 %v3850
      %v4812 = vunpack.c.l.b16 %v3851
      %v4813 = vpack.c.b16 %v4430, %v4797
      %v4814 = vpack.c.b16 %v4432, %v4798
      %v4815 = vpack.c.b16 %v4434, %v4799
      %v4816 = vpack.c.b16 %v4436, %v4800
      %v4817 = vpack.c.b16 %v4438, %v4801
      %v4818 = vpack.c.b16 %v4440, %v4802
      %v4819 = vpack.c.b16 %v4442, %v4803
      %v4820 = vpack.c.b16 %v4444, %v4804
      %v4821 = vpack.c.b16 %v4446, %v4805
      %v4822 = vpack.c.b16 %v4448, %v4806
      %v4823 = vpack.c.b16 %v4450, %v4807
      %v4824 = vpack.c.b16 %v4452, %v4808
      %v4825 = vpack.c.b16 %v4454, %v4809
      %v4826 = vpack.c.b16 %v4456, %v4810
      %v4827 = vpack.c.b16 %v4458, %v4811
      %v4828 = vpack.c.b16 %v4460, %v4812
      %v4829 = vrot.slane %v4813, 1
      %v4830 = vrot.slane %v4541, 1
      %v4831 = vsel %vm1445, %v4829, %v4830
      %v4832 = vrot.slane %v4814, 1
      %v4833 = vrot.slane %v4542, 1
      %v4834 = vsel %vm1445, %v4832, %v4833
      %v4835 = vrot.slane %v4815, 1
      %v4836 = vrot.slane %v4543, 1
      %v4837 = vsel %vm1445, %v4835, %v4836
      %v4838 = vrot.slane %v4816, 1
      %v4839 = vrot.slane %v4544, 1
      %v4840 = vsel %vm1445, %v4838, %v4839
      %v4841 = vrot.slane %v4817, 1
      %v4842 = vrot.slane %v4545, 1
      %v4843 = vsel %vm1445, %v4841, %v4842
      %v4844 = vrot.slane %v4818, 1
      %v4845 = vrot.slane %v4546, 1
      %v4846 = vsel %vm1445, %v4844, %v4845
      %v4847 = vrot.slane %v4819, 1
      %v4848 = vrot.slane %v4547, 1
      %v4849 = vsel %vm1445, %v4847, %v4848
      %v4850 = vrot.slane %v4820, 1
      %v4851 = vrot.slane %v4548, 1
      %v4852 = vsel %vm1445, %v4850, %v4851
      %v4853 = vrot.slane %v4821, 1
      %v4854 = vrot.slane %v4549, 1
      %v4855 = vsel %vm1445, %v4853, %v4854
      %v4856 = vrot.slane %v4822, 1
      %v4857 = vrot.slane %v4550, 1
      %v4858 = vsel %vm1445, %v4856, %v4857
      %v4859 = vrot.slane %v4823, 1
      %v4860 = vrot.slane %v4551, 1
      %v4861 = vsel %vm1445, %v4859, %v4860
      %v4862 = vrot.slane %v4824, 1
      %v4863 = vrot.slane %v4552, 1
      %v4864 = vsel %vm1445, %v4862, %v4863
      %v4865 = vrot.slane %v4825, 1
      %v4866 = vrot.slane %v4553, 1
      %v4867 = vsel %vm1445, %v4865, %v4866
      %v4868 = vrot.slane %v4826, 1
      %v4869 = vrot.slane %v4554, 1
      %v4870 = vsel %vm1445, %v4868, %v4869
      %v4871 = vrot.slane %v4827, 1
      %v4872 = vrot.slane %v4555, 1
      %v4873 = vsel %vm1445, %v4871, %v4872
      %v4874 = vrot.slane %v4828, 1
      %v4875 = vrot.slane %v4556, 1
      %v4876 = vsel %vm1445, %v4874, %v4875
      %4877 = vrot.lane.b32.xlu0 %v4831, 40
      %v4878 = vpop.permute.xlu0 %4877
      %4879 = vrot.lane.b32.xlu0 %v4834, 40
      %v4880 = vpop.permute.xlu0 %4879
      %4881 = vrot.lane.b32.xlu0 %v4837, 40
      %v4882 = vpop.permute.xlu0 %4881
      %4883 = vrot.lane.b32.xlu0 %v4840, 40
      %v4884 = vpop.permute.xlu0 %4883
      %4885 = vrot.lane.b32.xlu0 %v4843, 40
      %v4886 = vpop.permute.xlu0 %4885
      %4887 = vrot.lane.b32.xlu0 %v4846, 40
      %v4888 = vpop.permute.xlu0 %4887
      %4889 = vrot.lane.b32.xlu0 %v4849, 40
      %v4890 = vpop.permute.xlu0 %4889
      %4891 = vrot.lane.b32.xlu0 %v4852, 40
      %v4892 = vpop.permute.xlu0 %4891
      %4893 = vrot.lane.b32.xlu0 %v4855, 40
      %v4894 = vpop.permute.xlu0 %4893
      %4895 = vrot.lane.b32.xlu0 %v4858, 40
      %v4896 = vpop.permute.xlu0 %4895
      %4897 = vrot.lane.b32.xlu0 %v4861, 40
      %v4898 = vpop.permute.xlu0 %4897
      %4899 = vrot.lane.b32.xlu0 %v4864, 40
      %v4900 = vpop.permute.xlu0 %4899
      %4901 = vrot.lane.b32.xlu0 %v4867, 40
      %v4902 = vpop.permute.xlu0 %4901
      %4903 = vrot.lane.b32.xlu0 %v4870, 40
      %v4904 = vpop.permute.xlu0 %4903
      %4905 = vrot.lane.b32.xlu0 %v4873, 40
      %v4906 = vpop.permute.xlu0 %4905
      %4907 = vrot.lane.b32.xlu0 %v4876, 40
      %v4908 = vpop.permute.xlu0 %4907
      %v4941 = vunpack.c.l.b16 %v3853
      %v4942 = vunpack.c.l.b16 %v3854
      %v4943 = vunpack.c.l.b16 %v3855
      %v4944 = vunpack.c.l.b16 %v3856
      %v4945 = vunpack.c.l.b16 %v3857
      %v4946 = vunpack.c.l.b16 %v3858
      %v4947 = vunpack.c.l.b16 %v3859
      %v4948 = vunpack.c.l.b16 %v3860
      %v4949 = vunpack.c.l.b16 %v3861
      %v4950 = vunpack.c.l.b16 %v3862
      %v4951 = vunpack.c.l.b16 %v3863
      %v4952 = vunpack.c.l.b16 %v3864
      %v4953 = vunpack.c.l.b16 %v3865
      %v4954 = vunpack.c.l.b16 %v3866
      %v4955 = vunpack.c.l.b16 %v3867
      %v4956 = vunpack.c.l.b16 %v3868
      %v4957 = vunpack.c.l.b16 %v3869
      %v4958 = vunpack.c.l.b16 %v3870
      %v4959 = vunpack.c.l.b16 %v3871
      %v4960 = vunpack.c.l.b16 %v3872
      %v4961 = vunpack.c.l.b16 %v3873
      %v4962 = vunpack.c.l.b16 %v3874
      %v4963 = vunpack.c.l.b16 %v3875
      %v4964 = vunpack.c.l.b16 %v3876
      %v4965 = vunpack.c.l.b16 %v3877
      %v4966 = vunpack.c.l.b16 %v3878
      %v4967 = vunpack.c.l.b16 %v3879
      %v4968 = vunpack.c.l.b16 %v3880
      %v4969 = vunpack.c.l.b16 %v3881
      %v4970 = vunpack.c.l.b16 %v3882
      %v4971 = vunpack.c.l.b16 %v3883
      %v4972 = vunpack.c.l.b16 %v3884
      %v4973 = vpack.c.b16 %v4942, %v4941
      %v4974 = vpack.c.b16 %v4944, %v4943
      %v4975 = vpack.c.b16 %v4946, %v4945
      %v4976 = vpack.c.b16 %v4948, %v4947
      %v4977 = vpack.c.b16 %v4950, %v4949
      %v4978 = vpack.c.b16 %v4952, %v4951
      %v4979 = vpack.c.b16 %v4954, %v4953
      %v4980 = vpack.c.b16 %v4956, %v4955
      %v4981 = vpack.c.b16 %v4958, %v4957
      %v4982 = vpack.c.b16 %v4960, %v4959
      %v4983 = vpack.c.b16 %v4962, %v4961
      %v4984 = vpack.c.b16 %v4964, %v4963
      %v4985 = vpack.c.b16 %v4966, %v4965
      %v4986 = vpack.c.b16 %v4968, %v4967
      %v4987 = vpack.c.b16 %v4970, %v4969
      %v4988 = vpack.c.b16 %v4972, %v4971
      %4989 = vrot.lane.b32.xlu0 %v4973, 48
      %v4990 = vpop.permute.xlu0 %4989
      %4991 = vrot.lane.b32.xlu0 %v4974, 48
      %v4992 = vpop.permute.xlu0 %4991
      %4993 = vrot.lane.b32.xlu0 %v4975, 48
      %v4994 = vpop.permute.xlu0 %4993
      %4995 = vrot.lane.b32.xlu0 %v4976, 48
      %v4996 = vpop.permute.xlu0 %4995
      %4997 = vrot.lane.b32.xlu0 %v4977, 48
      %v4998 = vpop.permute.xlu0 %4997
      %4999 = vrot.lane.b32.xlu0 %v4978, 48
      %v5000 = vpop.permute.xlu0 %4999
      %5001 = vrot.lane.b32.xlu0 %v4979, 48
      %v5002 = vpop.permute.xlu0 %5001
      %5003 = vrot.lane.b32.xlu0 %v4980, 48
      %v5004 = vpop.permute.xlu0 %5003
      %5005 = vrot.lane.b32.xlu0 %v4981, 48
      %v5006 = vpop.permute.xlu0 %5005
      %5007 = vrot.lane.b32.xlu0 %v4982, 48
      %v5008 = vpop.permute.xlu0 %5007
      %5009 = vrot.lane.b32.xlu0 %v4983, 48
      %v5010 = vpop.permute.xlu0 %5009
      %5011 = vrot.lane.b32.xlu0 %v4984, 48
      %v5012 = vpop.permute.xlu0 %5011
      %5013 = vrot.lane.b32.xlu0 %v4985, 48
      %v5014 = vpop.permute.xlu0 %5013
      %5015 = vrot.lane.b32.xlu0 %v4986, 48
      %v5016 = vpop.permute.xlu0 %5015
      %5017 = vrot.lane.b32.xlu0 %v4987, 48
      %v5018 = vpop.permute.xlu0 %5017
      %5019 = vrot.lane.b32.xlu0 %v4988, 48
      %v5020 = vpop.permute.xlu0 %5019
      %v5037 = vunpack.c.l.b16 %v3885
      %v5038 = vunpack.c.l.b16 %v3886
      %v5039 = vunpack.c.l.b16 %v3887
      %v5040 = vunpack.c.l.b16 %v3888
      %v5041 = vunpack.c.l.b16 %v3889
      %v5042 = vunpack.c.l.b16 %v3890
      %v5043 = vunpack.c.l.b16 %v3891
      %v5044 = vunpack.c.l.b16 %v3892
      %v5045 = vunpack.c.l.b16 %v3893
      %v5046 = vunpack.c.l.b16 %v3894
      %v5047 = vunpack.c.l.b16 %v3895
      %v5048 = vunpack.c.l.b16 %v3896
      %v5049 = vunpack.c.l.b16 %v3897
      %v5050 = vunpack.c.l.b16 %v3898
      %v5051 = vunpack.c.l.b16 %v3899
      %v5052 = vunpack.c.l.b16 %v3900
      %v5053 = vpack.c.b16 %v5037, %v5037
      %v5054 = vpack.c.b16 %v5038, %v5038
      %v5055 = vpack.c.b16 %v5039, %v5039
      %v5056 = vpack.c.b16 %v5040, %v5040
      %v5057 = vpack.c.b16 %v5041, %v5041
      %v5058 = vpack.c.b16 %v5042, %v5042
      %v5059 = vpack.c.b16 %v5043, %v5043
      %v5060 = vpack.c.b16 %v5044, %v5044
      %v5061 = vpack.c.b16 %v5045, %v5045
      %v5062 = vpack.c.b16 %v5046, %v5046
      %v5063 = vpack.c.b16 %v5047, %v5047
      %v5064 = vpack.c.b16 %v5048, %v5048
      %v5065 = vpack.c.b16 %v5049, %v5049
      %v5066 = vpack.c.b16 %v5050, %v5050
      %v5067 = vpack.c.b16 %v5051, %v5051
      %v5068 = vpack.c.b16 %v5052, %v5052
      %v5070 = vshrl.u32 %v4973, 16
      %v5072 = vshll.u32 %v4973, 16
      %v5074 = vrot.slane %v5072, 1
      %v5075 = vor.u32 %v5070, %v5074
      %v5077 = vshll.u32 %v5053, 16
      %v5079 = vrot.slane %v5077, 1
      %v5080 = vsel %vm1172, %v5075, %v5079
      %v5082 = vshrl.u32 %v4974, 16
      %v5084 = vshll.u32 %v4974, 16
      %v5086 = vrot.slane %v5084, 1
      %v5087 = vor.u32 %v5082, %v5086
      %v5089 = vshll.u32 %v5054, 16
      %v5091 = vrot.slane %v5089, 1
      %v5092 = vsel %vm1172, %v5087, %v5091
      %v5094 = vshrl.u32 %v4975, 16
      %v5096 = vshll.u32 %v4975, 16
      %v5098 = vrot.slane %v5096, 1
      %v5099 = vor.u32 %v5094, %v5098
      %v5101 = vshll.u32 %v5055, 16
      %v5103 = vrot.slane %v5101, 1
      %v5104 = vsel %vm1172, %v5099, %v5103
      %v5106 = vshrl.u32 %v4976, 16
      %v5108 = vshll.u32 %v4976, 16
      %v5110 = vrot.slane %v5108, 1
      %v5111 = vor.u32 %v5106, %v5110
      %v5113 = vshll.u32 %v5056, 16
      %v5115 = vrot.slane %v5113, 1
      %v5116 = vsel %vm1172, %v5111, %v5115
      %v5118 = vshrl.u32 %v4977, 16
      %v5120 = vshll.u32 %v4977, 16
      %v5122 = vrot.slane %v5120, 1
      %v5123 = vor.u32 %v5118, %v5122
      %v5125 = vshll.u32 %v5057, 16
      %v5127 = vrot.slane %v5125, 1
      %v5128 = vsel %vm1172, %v5123, %v5127
      %v5130 = vshrl.u32 %v4978, 16
      %v5132 = vshll.u32 %v4978, 16
      %v5134 = vrot.slane %v5132, 1
      %v5135 = vor.u32 %v5130, %v5134
      %v5137 = vshll.u32 %v5058, 16
      %v5139 = vrot.slane %v5137, 1
      %v5140 = vsel %vm1172, %v5135, %v5139
      %v5142 = vshrl.u32 %v4979, 16
      %v5144 = vshll.u32 %v4979, 16
      %v5146 = vrot.slane %v5144, 1
      %v5147 = vor.u32 %v5142, %v5146
      %v5149 = vshll.u32 %v5059, 16
      %v5151 = vrot.slane %v5149, 1
      %v5152 = vsel %vm1172, %v5147, %v5151
      %v5154 = vshrl.u32 %v4980, 16
      %v5156 = vshll.u32 %v4980, 16
      %v5158 = vrot.slane %v5156, 1
      %v5159 = vor.u32 %v5154, %v5158
      %v5161 = vshll.u32 %v5060, 16
      %v5163 = vrot.slane %v5161, 1
      %v5164 = vsel %vm1172, %v5159, %v5163
      %v5166 = vshrl.u32 %v4981, 16
      %v5168 = vshll.u32 %v4981, 16
      %v5170 = vrot.slane %v5168, 1
      %v5171 = vor.u32 %v5166, %v5170
      %v5173 = vshll.u32 %v5061, 16
      %v5175 = vrot.slane %v5173, 1
      %v5176 = vsel %vm1172, %v5171, %v5175
      %v5178 = vshrl.u32 %v4982, 16
      %v5180 = vshll.u32 %v4982, 16
      %v5182 = vrot.slane %v5180, 1
      %v5183 = vor.u32 %v5178, %v5182
      %v5185 = vshll.u32 %v5062, 16
      %v5187 = vrot.slane %v5185, 1
      %v5188 = vsel %vm1172, %v5183, %v5187
      %v5190 = vshrl.u32 %v4983, 16
      %v5192 = vshll.u32 %v4983, 16
      %v5194 = vrot.slane %v5192, 1
      %v5195 = vor.u32 %v5190, %v5194
      %v5197 = vshll.u32 %v5063, 16
      %v5199 = vrot.slane %v5197, 1
      %v5200 = vsel %vm1172, %v5195, %v5199
      %v5202 = vshrl.u32 %v4984, 16
      %v5204 = vshll.u32 %v4984, 16
      %v5206 = vrot.slane %v5204, 1
      %v5207 = vor.u32 %v5202, %v5206
      %v5209 = vshll.u32 %v5064, 16
      %v5211 = vrot.slane %v5209, 1
      %v5212 = vsel %vm1172, %v5207, %v5211
      %v5214 = vshrl.u32 %v4985, 16
      %v5216 = vshll.u32 %v4985, 16
      %v5218 = vrot.slane %v5216, 1
      %v5219 = vor.u32 %v5214, %v5218
      %v5221 = vshll.u32 %v5065, 16
      %v5223 = vrot.slane %v5221, 1
      %v5224 = vsel %vm1172, %v5219, %v5223
      %v5226 = vshrl.u32 %v4986, 16
      %v5228 = vshll.u32 %v4986, 16
      %v5230 = vrot.slane %v5228, 1
      %v5231 = vor.u32 %v5226, %v5230
      %v5233 = vshll.u32 %v5066, 16
      %v5235 = vrot.slane %v5233, 1
      %v5236 = vsel %vm1172, %v5231, %v5235
      %v5238 = vshrl.u32 %v4987, 16
      %v5240 = vshll.u32 %v4987, 16
      %v5242 = vrot.slane %v5240, 1
      %v5243 = vor.u32 %v5238, %v5242
      %v5245 = vshll.u32 %v5067, 16
      %v5247 = vrot.slane %v5245, 1
      %v5248 = vsel %vm1172, %v5243, %v5247
      %v5250 = vshrl.u32 %v4988, 16
      %v5252 = vshll.u32 %v4988, 16
      %v5254 = vrot.slane %v5252, 1
      %v5255 = vor.u32 %v5250, %v5254
      %v5257 = vshll.u32 %v5068, 16
      %v5259 = vrot.slane %v5257, 1
      %v5260 = vsel %vm1172, %v5255, %v5259
      %5261 = vrot.lane.b32.xlu0 %v5080, 56
      %v5262 = vpop.permute.xlu0 %5261
      %5263 = vrot.lane.b32.xlu0 %v5092, 56
      %v5264 = vpop.permute.xlu0 %5263
      %5265 = vrot.lane.b32.xlu0 %v5104, 56
      %v5266 = vpop.permute.xlu0 %5265
      %5267 = vrot.lane.b32.xlu0 %v5116, 56
      %v5268 = vpop.permute.xlu0 %5267
      %5269 = vrot.lane.b32.xlu0 %v5128, 56
      %v5270 = vpop.permute.xlu0 %5269
      %5271 = vrot.lane.b32.xlu0 %v5140, 56
      %v5272 = vpop.permute.xlu0 %5271
      %5273 = vrot.lane.b32.xlu0 %v5152, 56
      %v5274 = vpop.permute.xlu0 %5273
      %5275 = vrot.lane.b32.xlu0 %v5164, 56
      %v5276 = vpop.permute.xlu0 %5275
      %5277 = vrot.lane.b32.xlu0 %v5176, 56
      %v5278 = vpop.permute.xlu0 %5277
      %5279 = vrot.lane.b32.xlu0 %v5188, 56
      %v5280 = vpop.permute.xlu0 %5279
      %5281 = vrot.lane.b32.xlu0 %v5200, 56
      %v5282 = vpop.permute.xlu0 %5281
      %5283 = vrot.lane.b32.xlu0 %v5212, 56
      %v5284 = vpop.permute.xlu0 %5283
      %5285 = vrot.lane.b32.xlu0 %v5224, 56
      %v5286 = vpop.permute.xlu0 %5285
      %5287 = vrot.lane.b32.xlu0 %v5236, 56
      %v5288 = vpop.permute.xlu0 %5287
      %5289 = vrot.lane.b32.xlu0 %v5248, 56
      %v5290 = vpop.permute.xlu0 %5289
      %5291 = vrot.lane.b32.xlu0 %v5260, 56
      %v5292 = vpop.permute.xlu0 %5291
      %v5309 = vunpack.c.l.b16 %v3901
      %v5310 = vunpack.c.l.b16 %v3902
      %v5311 = vunpack.c.l.b16 %v3903
      %v5312 = vunpack.c.l.b16 %v3904
      %v5313 = vunpack.c.l.b16 %v3905
      %v5314 = vunpack.c.l.b16 %v3906
      %v5315 = vunpack.c.l.b16 %v3907
      %v5316 = vunpack.c.l.b16 %v3908
      %v5317 = vunpack.c.l.b16 %v3909
      %v5318 = vunpack.c.l.b16 %v3910
      %v5319 = vunpack.c.l.b16 %v3911
      %v5320 = vunpack.c.l.b16 %v3912
      %v5321 = vunpack.c.l.b16 %v3913
      %v5322 = vunpack.c.l.b16 %v3914
      %v5323 = vunpack.c.l.b16 %v3915
      %v5324 = vunpack.c.l.b16 %v3916
      %v5325 = vpack.c.b16 %v4942, %v5309
      %v5326 = vpack.c.b16 %v4944, %v5310
      %v5327 = vpack.c.b16 %v4946, %v5311
      %v5328 = vpack.c.b16 %v4948, %v5312
      %v5329 = vpack.c.b16 %v4950, %v5313
      %v5330 = vpack.c.b16 %v4952, %v5314
      %v5331 = vpack.c.b16 %v4954, %v5315
      %v5332 = vpack.c.b16 %v4956, %v5316
      %v5333 = vpack.c.b16 %v4958, %v5317
      %v5334 = vpack.c.b16 %v4960, %v5318
      %v5335 = vpack.c.b16 %v4962, %v5319
      %v5336 = vpack.c.b16 %v4964, %v5320
      %v5337 = vpack.c.b16 %v4966, %v5321
      %v5338 = vpack.c.b16 %v4968, %v5322
      %v5339 = vpack.c.b16 %v4970, %v5323
      %v5340 = vpack.c.b16 %v4972, %v5324
      %v5341 = vrot.slane %v5325, 1
      %v5342 = vrot.slane %v5053, 1
      %v5343 = vsel %vm1445, %v5341, %v5342
      %v5344 = vrot.slane %v5326, 1
      %v5345 = vrot.slane %v5054, 1
      %v5346 = vsel %vm1445, %v5344, %v5345
      %v5347 = vrot.slane %v5327, 1
      %v5348 = vrot.slane %v5055, 1
      %v5349 = vsel %vm1445, %v5347, %v5348
      %v5350 = vrot.slane %v5328, 1
      %v5351 = vrot.slane %v5056, 1
      %v5352 = vsel %vm1445, %v5350, %v5351
      %v5353 = vrot.slane %v5329, 1
      %v5354 = vrot.slane %v5057, 1
      %v5355 = vsel %vm1445, %v5353, %v5354
      %v5356 = vrot.slane %v5330, 1
      %v5357 = vrot.slane %v5058, 1
      %v5358 = vsel %vm1445, %v5356, %v5357
      %v5359 = vrot.slane %v5331, 1
      %v5360 = vrot.slane %v5059, 1
      %v5361 = vsel %vm1445, %v5359, %v5360
      %v5362 = vrot.slane %v5332, 1
      %v5363 = vrot.slane %v5060, 1
      %v5364 = vsel %vm1445, %v5362, %v5363
      %v5365 = vrot.slane %v5333, 1
      %v5366 = vrot.slane %v5061, 1
      %v5367 = vsel %vm1445, %v5365, %v5366
      %v5368 = vrot.slane %v5334, 1
      %v5369 = vrot.slane %v5062, 1
      %v5370 = vsel %vm1445, %v5368, %v5369
      %v5371 = vrot.slane %v5335, 1
      %v5372 = vrot.slane %v5063, 1
      %v5373 = vsel %vm1445, %v5371, %v5372
      %v5374 = vrot.slane %v5336, 1
      %v5375 = vrot.slane %v5064, 1
      %v5376 = vsel %vm1445, %v5374, %v5375
      %v5377 = vrot.slane %v5337, 1
      %v5378 = vrot.slane %v5065, 1
      %v5379 = vsel %vm1445, %v5377, %v5378
      %v5380 = vrot.slane %v5338, 1
      %v5381 = vrot.slane %v5066, 1
      %v5382 = vsel %vm1445, %v5380, %v5381
      %v5383 = vrot.slane %v5339, 1
      %v5384 = vrot.slane %v5067, 1
      %v5385 = vsel %vm1445, %v5383, %v5384
      %v5386 = vrot.slane %v5340, 1
      %v5387 = vrot.slane %v5068, 1
      %v5388 = vsel %vm1445, %v5386, %v5387
      %5389 = vrot.lane.b32.xlu0 %v5343, 64
      %v5390 = vpop.permute.xlu0 %5389
      %5391 = vrot.lane.b32.xlu0 %v5346, 64
      %v5392 = vpop.permute.xlu0 %5391
      %5393 = vrot.lane.b32.xlu0 %v5349, 64
      %v5394 = vpop.permute.xlu0 %5393
      %5395 = vrot.lane.b32.xlu0 %v5352, 64
      %v5396 = vpop.permute.xlu0 %5395
      %5397 = vrot.lane.b32.xlu0 %v5355, 64
      %v5398 = vpop.permute.xlu0 %5397
      %5399 = vrot.lane.b32.xlu0 %v5358, 64
      %v5400 = vpop.permute.xlu0 %5399
      %5401 = vrot.lane.b32.xlu0 %v5361, 64
      %v5402 = vpop.permute.xlu0 %5401
      %5403 = vrot.lane.b32.xlu0 %v5364, 64
      %v5404 = vpop.permute.xlu0 %5403
      %5405 = vrot.lane.b32.xlu0 %v5367, 64
      %v5406 = vpop.permute.xlu0 %5405
      %5407 = vrot.lane.b32.xlu0 %v5370, 64
      %v5408 = vpop.permute.xlu0 %5407
      %5409 = vrot.lane.b32.xlu0 %v5373, 64
      %v5410 = vpop.permute.xlu0 %5409
      %5411 = vrot.lane.b32.xlu0 %v5376, 64
      %v5412 = vpop.permute.xlu0 %5411
      %5413 = vrot.lane.b32.xlu0 %v5379, 64
      %v5414 = vpop.permute.xlu0 %5413
      %5415 = vrot.lane.b32.xlu0 %v5382, 64
      %v5416 = vpop.permute.xlu0 %5415
      %5417 = vrot.lane.b32.xlu0 %v5385, 64
      %v5418 = vpop.permute.xlu0 %5417
      %5419 = vrot.lane.b32.xlu0 %v5388, 64
      %v5420 = vpop.permute.xlu0 %5419
      %v5422 = vsel %vm2583, %v3981, %v4238
      %v5424 = vsel %vm2583, %v3982, %v4240
      %v5426 = vsel %vm2583, %v3983, %v4242
      %v5428 = vsel %vm2583, %v3984, %v4244
      %v5430 = vsel %vm2583, %v3985, %v4246
      %v5432 = vsel %vm2583, %v3986, %v4248
      %v5434 = vsel %vm2583, %v3987, %v4250
      %v5436 = vsel %vm2583, %v3988, %v4252
      %v5438 = vsel %vm2583, %v3989, %v4254
      %v5440 = vsel %vm2583, %v3990, %v4256
      %v5442 = vsel %vm2583, %v3991, %v4258
      %v5444 = vsel %vm2583, %v3992, %v4260
      %v5446 = vsel %vm2583, %v3993, %v4262
      %v5448 = vsel %vm2583, %v3994, %v4264
      %v5450 = vsel %vm2583, %v3995, %v4266
      %v5452 = vsel %vm2583, %v3996, %v4268
      %v5454 = vsel %vm2649, %v5422, %v4366
      %v5456 = vsel %vm2649, %v5424, %v4368
      %v5458 = vsel %vm2649, %v5426, %v4370
      %v5460 = vsel %vm2649, %v5428, %v4372
      %v5462 = vsel %vm2649, %v5430, %v4374
      %v5464 = vsel %vm2649, %v5432, %v4376
      %v5466 = vsel %vm2649, %v5434, %v4378
      %v5468 = vsel %vm2649, %v5436, %v4380
      %v5470 = vsel %vm2649, %v5438, %v4382
      %v5472 = vsel %vm2649, %v5440, %v4384
      %v5474 = vsel %vm2649, %v5442, %v4386
      %v5476 = vsel %vm2649, %v5444, %v4388
      %v5478 = vsel %vm2649, %v5446, %v4390
      %v5480 = vsel %vm2649, %v5448, %v4392
      %v5482 = vsel %vm2649, %v5450, %v4394
      %v5484 = vsel %vm2649, %v5452, %v4396
      %v5486 = vsel %vm2715, %v5454, %v4478
      %v5488 = vsel %vm2715, %v5456, %v4480
      %v5490 = vsel %vm2715, %v5458, %v4482
      %v5492 = vsel %vm2715, %v5460, %v4484
      %v5494 = vsel %vm2715, %v5462, %v4486
      %v5496 = vsel %vm2715, %v5464, %v4488
      %v5498 = vsel %vm2715, %v5466, %v4490
      %v5500 = vsel %vm2715, %v5468, %v4492
      %v5502 = vsel %vm2715, %v5470, %v4494
      %v5504 = vsel %vm2715, %v5472, %v4496
      %v5506 = vsel %vm2715, %v5474, %v4498
      %v5508 = vsel %vm2715, %v5476, %v4500
      %v5510 = vsel %vm2715, %v5478, %v4502
      %v5512 = vsel %vm2715, %v5480, %v4504
      %v5514 = vsel %vm2715, %v5482, %v4506
      %v5516 = vsel %vm2715, %v5484, %v4508
      %v5518 = vsel %vm2781, %v5486, %v4750
      %v5520 = vsel %vm2781, %v5488, %v4752
      %v5522 = vsel %vm2781, %v5490, %v4754
      %v5524 = vsel %vm2781, %v5492, %v4756
      %v5526 = vsel %vm2781, %v5494, %v4758
      %v5528 = vsel %vm2781, %v5496, %v4760
      %v5530 = vsel %vm2781, %v5498, %v4762
      %v5532 = vsel %vm2781, %v5500, %v4764
      %v5534 = vsel %vm2781, %v5502, %v4766
      %v5536 = vsel %vm2781, %v5504, %v4768
      %v5538 = vsel %vm2781, %v5506, %v4770
      %v5540 = vsel %vm2781, %v5508, %v4772
      %v5542 = vsel %vm2781, %v5510, %v4774
      %v5544 = vsel %vm2781, %v5512, %v4776
      %v5546 = vsel %vm2781, %v5514, %v4778
      %v5548 = vsel %vm2781, %v5516, %v4780
      %vm5549 = vcmask 326656
      %v5551 = vsel %vm5549, %v5518, %v4878
      %v5553 = vsel %vm5549, %v5520, %v4880
      %v5555 = vsel %vm5549, %v5522, %v4882
      %v5557 = vsel %vm5549, %v5524, %v4884
      %v5559 = vsel %vm5549, %v5526, %v4886
      %v5561 = vsel %vm5549, %v5528, %v4888
      %v5563 = vsel %vm5549, %v5530, %v4890
      %v5565 = vsel %vm5549, %v5532, %v4892
      %v5567 = vsel %vm5549, %v5534, %v4894
      %v5569 = vsel %vm5549, %v5536, %v4896
      %v5571 = vsel %vm5549, %v5538, %v4898
      %v5573 = vsel %vm5549, %v5540, %v4900
      %v5575 = vsel %vm5549, %v5542, %v4902
      %v5577 = vsel %vm5549, %v5544, %v4904
      %v5579 = vsel %vm5549, %v5546, %v4906
      %v5581 = vsel %vm5549, %v5548, %v4908
      %vm5582 = vcmask 392192
      %v5584 = vsel %vm5582, %v5551, %v4990
      %v5586 = vsel %vm5582, %v5553, %v4992
      %v5588 = vsel %vm5582, %v5555, %v4994
      %v5590 = vsel %vm5582, %v5557, %v4996
      %v5592 = vsel %vm5582, %v5559, %v4998
      %v5594 = vsel %vm5582, %v5561, %v5000
      %v5596 = vsel %vm5582, %v5563, %v5002
      %v5598 = vsel %vm5582, %v5565, %v5004
      %v5600 = vsel %vm5582, %v5567, %v5006
      %v5602 = vsel %vm5582, %v5569, %v5008
      %v5604 = vsel %vm5582, %v5571, %v5010
      %v5606 = vsel %vm5582, %v5573, %v5012
      %v5608 = vsel %vm5582, %v5575, %v5014
      %v5610 = vsel %vm5582, %v5577, %v5016
      %v5612 = vsel %vm5582, %v5579, %v5018
      %v5614 = vsel %vm5582, %v5581, %v5020
      %vm5615 = vcmask 457728
      %v5617 = vsel %vm5615, %v5584, %v5262
      %v5619 = vsel %vm5615, %v5586, %v5264
      %v5621 = vsel %vm5615, %v5588, %v5266
      %v5623 = vsel %vm5615, %v5590, %v5268
      %v5625 = vsel %vm5615, %v5592, %v5270
      %v5627 = vsel %vm5615, %v5594, %v5272
      %v5629 = vsel %vm5615, %v5596, %v5274
      %v5631 = vsel %vm5615, %v5598, %v5276
      %v5633 = vsel %vm5615, %v5600, %v5278
      %v5635 = vsel %vm5615, %v5602, %v5280
      %v5637 = vsel %vm5615, %v5604, %v5282
      %v5639 = vsel %vm5615, %v5606, %v5284
      %v5641 = vsel %vm5615, %v5608, %v5286
      %v5643 = vsel %vm5615, %v5610, %v5288
      %v5645 = vsel %vm5615, %v5612, %v5290
      %v5647 = vsel %vm5615, %v5614, %v5292
      %vm5648 = vcmask 523264
      %v5650 = vsel %vm5648, %v5617, %v5390
      %v5652 = vsel %vm5648, %v5619, %v5392
      %v5654 = vsel %vm5648, %v5621, %v5394
      %v5656 = vsel %vm5648, %v5623, %v5396
      %v5658 = vsel %vm5648, %v5625, %v5398
      %v5660 = vsel %vm5648, %v5627, %v5400
      %v5662 = vsel %vm5648, %v5629, %v5402
      %v5664 = vsel %vm5648, %v5631, %v5404
      %v5666 = vsel %vm5648, %v5633, %v5406
      %v5668 = vsel %vm5648, %v5635, %v5408
      %v5670 = vsel %vm5648, %v5637, %v5410
      %v5672 = vsel %vm5648, %v5639, %v5412
      %v5674 = vsel %vm5648, %v5641, %v5414
      %v5676 = vsel %vm5648, %v5643, %v5416
      %v5678 = vsel %vm5648, %v5645, %v5418
      %v5680 = vsel %vm5648, %v5647, %v5420
      %v5681 = vld [vmem:[%s3] sm:$0xf]
      %v5682 = vld [vmem:[%s4] sm:$0xff]
      %5684 = vset.pattern.permute.xlu0 0
      %5685 = vperm.xlu0 %5684, %v5682
      %v5686 = vpop.permute.xlu0 %5685
      %vm5688 = vcmask 588800
      %v5690 = vsel %vm5688, %v5681, 0
      %v5692 = vsel %vm5688, %v5650, 0
      %v5694 = vsel %vm5688, %v5652, 0
      %v5696 = vsel %vm5688, %v5654, 0
      %v5698 = vsel %vm5688, %v5656, 0
      %v5700 = vsel %vm5688, %v5658, 0
      %v5702 = vsel %vm5688, %v5660, 0
      %v5704 = vsel %vm5688, %v5662, 0
      %v5706 = vsel %vm5688, %v5664, 0
      %v5708 = vsel %vm5688, %v5666, 0
      %v5710 = vsel %vm5688, %v5668, 0
      %v5712 = vsel %vm5688, %v5670, 0
      %v5714 = vsel %vm5688, %v5672, 0
      %v5716 = vsel %vm5688, %v5674, 0
      %v5718 = vsel %vm5688, %v5676, 0
      %v5720 = vsel %vm5688, %v5678, 0
      %v5722 = vsel %vm5688, %v5680, 0
      %5724 = vmatprep.subr.bf16.mxu0 0
      %5725 = vmatpush1.bf16.xpose.msra.mxu0 %v5692
      %5726 = vmatprep.subr.bf16.mxu0 0
      %5727 = vmatpush1.bf16.xpose.msra.mxu0 %v5694
      %5728 = vmatprep.subr.bf16.mxu0 0
      %5729 = vmatpush1.bf16.xpose.msra.mxu0 %v5696
      %5730 = vmatprep.subr.bf16.mxu0 0
      %5731 = vmatpush1.bf16.xpose.msra.mxu0 %v5698
      %5732 = vmatprep.subr.bf16.mxu0 0
      %5733 = vmatpush1.bf16.xpose.msra.mxu0 %v5700
      %5734 = vmatprep.subr.bf16.mxu0 0
      %5735 = vmatpush1.bf16.xpose.msra.mxu0 %v5702
      %5736 = vmatprep.subr.bf16.mxu0 0
      %5737 = vmatpush1.bf16.xpose.msra.mxu0 %v5704
      %5738 = vmatprep.subr.bf16.mxu0 0
      %5739 = vmatpush1.bf16.xpose.msra.mxu0 %v5706
      %5740 = vmatprep.subr.bf16.mxu0 0
      %5741 = vmatpush1.bf16.xpose.msra.mxu0 %v5708
      %5742 = vmatprep.subr.bf16.mxu0 0
      %5743 = vmatpush1.bf16.xpose.msra.mxu0 %v5710
      %5744 = vmatprep.subr.bf16.mxu0 0
      %5745 = vmatpush1.bf16.xpose.msra.mxu0 %v5712
      %5746 = vmatprep.subr.bf16.mxu0 0
      %5747 = vmatpush1.bf16.xpose.msra.mxu0 %v5714
      %5748 = vmatprep.subr.bf16.mxu0 0
      %5749 = vmatpush1.bf16.xpose.msra.mxu0 %v5716
      %5750 = vmatprep.subr.bf16.mxu0 0
      %5751 = vmatpush1.bf16.xpose.msra.mxu0 %v5718
      %5752 = vmatprep.subr.bf16.mxu0 0
      %5753 = vmatpush1.bf16.xpose.msra.mxu0 %v5720
      %5754 = vmatprep.subr.bf16.mxu0 0
      %5755 = vmatpush1.bf16.xpose.msra.mxu0 %v5722
      %5756 = vmatprep.mubr.bf16.mxu0 0
      %5757 = vmatmul.mubr.bf16.gmra.mrb[0].mxu0 %v5690
      %v5758 = vpop.f32.mrb[0].mxu0
      %v5759 = vadd.f32 %v5686, %v5758
      %v5760 = vpop.f32.mrb[0].mxu0
      %v5761 = vadd.f32 %v5686, %v5760
      %v5762 = vpop.f32.mrb[0].mxu0
      %v5763 = vpop.f32.mrb[0].mxu0
      %5764 = vdwg.mxu0
      %vm5765 = vcmp.ge.f32.partialorder %v5759, 0.0
      %vm5766 = vcmp.ge.f32.partialorder %v5761, 0.0
      %v5767 = vmul.f32 %v5759, 0.01
      %v5768 = vmul.f32 %v5761, 0.01
      %v5769 = vsel %vm5765, %v5759, %v5767
      %v5770 = vsel %vm5766, %v5761, %v5768
      %5771 = vst [vmem:[%s224] sm:$0xff] %v5769
      %5772 = vst [vmem:[%s224 + $0x8] sm:$0xff] %v5770
      %p5773 = scmp.lt.s32.totalorder %s16, 1
      %s5774 = scalar_select %p5773, %s16, 1
      %s5775 = smul.addr %s5774, 2
      %s5776 = smul.addr %s5775, 8
      %s5777 = scalar_lea.vmem %s5, %s5776
      // Predicated region
      $region41: #{conv_block_forward.1} parent=39 // pred_check
        %p5778 = pneg %p144
      $region42: #{conv_block_forward.1} parent=39 // pred_check_branch
        %5780 = sbr.rel (%p5778) target = $region44
      $region43: #{conv_block_forward.1} parent=39 // pred_region
        _
      $region44: #{conv_block_forward.1} parent=39 // pred_fallthru
        _
    $region40: #{conv_block_forward.1} parent=5 // pred_fallthru
      _
    %p5781 = scmp.le.s32.totalorder 2, %s11
    // Predicated region
    $region45: #{conv_block_forward.1} parent=5 // pred_check
      %p5782 = pneg %p5781
    $region46: #{conv_block_forward.1} parent=5 // pred_check_branch
      %5784 = sbr.rel (%p5782) target = $region48
    $region47: #{conv_block_forward.1} parent=5 // pred_region
      %s5785 = ssub.s32 %s11, 2
      // Predicated region
      $region49: #{conv_block_forward.1} parent=47 // pred_check
        %p5786 = pneg %p150
      $region50: #{conv_block_forward.1} parent=47 // pred_check_branch
        %5788 = sbr.rel (%p5786) target = $region52
      $region51: #{conv_block_forward.1} parent=47 // pred_region
        %p5789 = scmp.lt.s32.totalorder %s17, 1
        %s5790 = scalar_select %p5789, %s17, 1
        %s5791 = smul.addr %s5790, 2
        %s5792 = smul.addr %s5791, 8
        %s5793 = scalar_lea.vmem %s5, %s5792
      $region52: #{conv_block_forward.1} parent=47 // pred_fallthru
        _
    $region48: #{conv_block_forward.1} parent=5 // pred_fallthru
      _
  $region6: #{conv_block_forward.1} parent=0 // loop_footer
    %s15 = sadd.s32 1, %s11
  $region7: #{conv_block_forward.1} parent=0 // loop_footer_branch
    %10 = sbr.rel target = $region3
  $region8: #{conv_block_forward.1} parent=0 // loop_exit
    _

</llo_original>
